<compile_context>
chip_gen: v5e
topology: v5e:2x2
jax: 0.10.0
libtpu: 0.0.40
codegen_flags: <defaults>
</compile_context>

<pallas_src>
import math
import functools

import jax
import jax.numpy as jnp
from jax.experimental import pallas as pl
from jax.experimental.pallas import tpu as pltpu


_EPS = 1e-5
_LANE_PAD = 128   # decoder output padded to full lane width (lane-dense store)

_LAYER_KEYS = ("ln1_g", "ln1_b", "wq", "bq", "wk", "bk", "wv", "bv",
               "wo", "bo", "ln2_g", "ln2_b", "lin1_w", "lin1_b",
               "lin2_w", "lin2_b")
_HEAD_KEYS = ("norm_g", "norm_b", "dec1_w", "dec1_b", "dec2_w", "dec2_b")


# ----------------------------------------------------------------------------
# In-kernel helpers
# ----------------------------------------------------------------------------

def _ln(x, g, b, eps=_EPS):
    mean = jnp.mean(x, axis=-1, keepdims=True)
    var = jnp.mean(jnp.square(x - mean), axis=-1, keepdims=True)
    return (x - mean) * jax.lax.rsqrt(var + eps) * g + b


def _resident_spec(a):
    """Full-array BlockSpec with a constant index_map (stays VMEM-resident)."""
    return pl.BlockSpec(a.shape, lambda i, _n=a.ndim: (0,) * _n)


def _layer_compute(x_ref, mask_ref, p_refs, *, nhead, seq_len):
    """One pre-norm encoder layer on the current row tile. Returns f32 (tm, E)."""
    (ln1_g, ln1_b, wq, bq, wk, bk, wv, bv, wo, bo,
     ln2_g, ln2_b, w1, b1, w2, b2) = p_refs
    f32, bf16 = jnp.float32, jnp.bfloat16

    x = x_ref[...].astype(f32)                       # (tm, E) residual stream
    tm, E = x.shape
    dh = E // nhead
    scale = 1.0 / math.sqrt(dh)

    # Additive mask for this tile, built in-kernel (never materialized in HBM).
    # The tile covers k whole batches; attention is block-diagonal over them.
    k_batches = tm // seq_len
    smask = mask_ref[...].astype(f32)                # (S, S) user src_mask
    if k_batches == 1:
        mask = smask                                 # tile == one batch
    else:
        rows = jnp.concatenate([smask] * k_batches, axis=0)
        tiled = jnp.concatenate([rows] * k_batches, axis=1)
        rb = jax.lax.broadcasted_iota(jnp.int32, (tm, tm), 0) // seq_len
        cb = jax.lax.broadcasted_iota(jnp.int32, (tm, tm), 1) // seq_len
        mask = jnp.where(rb == cb, tiled, jnp.float32(-1e9))

    # --- pre-norm self-attention block:  x = x + OutProj(MHA(LN1(x))) ---
    h = _ln(x, ln1_g[...], ln1_b[...])               # f32
    hb = h.astype(bf16)                              # bf16 MXU operands
    q = jnp.dot(hb, wq[...], preferred_element_type=f32) + bq[...]
    k = jnp.dot(hb, wk[...], preferred_element_type=f32) + bk[...]
    v = jnp.dot(hb, wv[...], preferred_element_type=f32) + bv[...]
    q = q * scale                                    # fold 1/sqrt(dh) into q

    # Head-major (H, tm, dh) stacking via static lane slices (no minor reshape).
    def split_heads(t):
        return jnp.stack(
            [t[:, hd * dh:(hd + 1) * dh] for hd in range(nhead)], axis=0
        ).astype(bf16)

    qh, kh, vh = split_heads(q), split_heads(k), split_heads(v)

    # Batched per-head attention: contraction over dh only (no redundant flops).
    s = jnp.einsum("hqd,hkd->hqk", qh, kh, preferred_element_type=f32)
    s = s + mask[None, :, :]                         # f32 mask add
    s = s - jnp.max(s, axis=-1, keepdims=True)       # f32 softmax
    p = jnp.exp(s)
    p = p * pl.reciprocal(jnp.sum(p, axis=-1, keepdims=True), approx=True)
    ah = jnp.einsum("hqk,hkd->hqd", p.astype(bf16), vh,
                    preferred_element_type=f32)      # (H, tm, dh) f32

    attn = jnp.concatenate([ah[hd] for hd in range(nhead)], axis=-1)  # (tm, E)
    x = x + jnp.dot(attn.astype(bf16), wo[...],
                    preferred_element_type=f32) + bo[...]

    # --- pre-norm feed-forward block:  x = x + Lin2(ReLU(Lin1(LN2(x)))) ---
    h2 = _ln(x, ln2_g[...], ln2_b[...]).astype(bf16)
    f = jnp.maximum(jnp.dot(h2, w1[...], preferred_element_type=f32) + b1[...],
                    0.0)
    f = jnp.dot(f.astype(bf16), w2[...], preferred_element_type=f32) + b2[...]
    return x + f


# ----------------------------------------------------------------------------
# Kernels
# ----------------------------------------------------------------------------

def _encoder_layer_kernel(x_ref, mask_ref,
                          ln1_g, ln1_b, wq, bq, wk, bk, wv, bv, wo, bo,
                          ln2_g, ln2_b, w1, b1, w2, b2,
                          o_ref, *, nhead, seq_len):
    p = (ln1_g, ln1_b, wq, bq, wk, bk, wv, bv, wo, bo,
         ln2_g, ln2_b, w1, b1, w2, b2)
    y = _layer_compute(x_ref, mask_ref, p, nhead=nhead, seq_len=seq_len)
    o_ref[...] = y.astype(o_ref.dtype)


def _encoder_layer_head_kernel(x_ref, mask_ref,
                               ln1_g, ln1_b, wq, bq, wk, bk, wv, bv, wo, bo,
                               ln2_g, ln2_b, w1, b1, w2, b2,
                               norm_g, norm_b, d1w, d1b, d2w, d2b,
                               o_ref, *, nhead, seq_len):
    """Last encoder layer fused with final LayerNorm + decoder head."""
    f32, bf16 = jnp.float32, jnp.bfloat16
    p = (ln1_g, ln1_b, wq, bq, wk, bk, wv, bv, wo, bo,
         ln2_g, ln2_b, w1, b1, w2, b2)
    y = _layer_compute(x_ref, mask_ref, p, nhead=nhead, seq_len=seq_len)

    h = _ln(y, norm_g[...], norm_b[...])                                  # f32
    z = jnp.maximum(jnp.dot(h.astype(bf16), d1w[...],
                            preferred_element_type=f32) + d1b[...], 0.0)
    # dec2 weights are zero-padded to _LANE_PAD output columns -> lane-dense
    # unmasked store; real prediction lives in column 0.
    z = jnp.maximum(jnp.dot(z.astype(bf16), d2w[...],
                            preferred_element_type=f32) + d2b[...], 0.0)
    o_ref[...] = z.astype(o_ref.dtype)


# ----------------------------------------------------------------------------
# pallas_call wrappers
# ----------------------------------------------------------------------------

def _layer_cost(M, E, F, tile_rows, nhead, head_dims=None):
    flops = 8 * M * E * E + 4 * M * tile_rows * E + 4 * M * E * F
    bytes_acc = 4 * 2 * M * E + 2 * (4 * E * E + 2 * E * F)
    if head_dims is not None:
        de, dp = head_dims
        flops += 2 * M * E * de + 2 * M * de * dp
        bytes_acc += 2 * (E * de + de * dp) + 4 * M * dp
    transcend = nhead * M * tile_rows + 8 * M
    return pl.CostEstimate(flops=int(flops), transcendentals=int(transcend),
                           bytes_accessed=int(bytes_acc))


def encoder_layer(x, src_mask, layer, *, nhead, seq_len, tile_rows, head=None):
    M, E = x.shape
    F = layer["lin1_w"].shape[1]
    args = [x, src_mask] + [layer[k] for k in _LAYER_KEYS]

    in_specs = [pl.BlockSpec((tile_rows, E), lambda i: (i, 0)),
                _resident_spec(src_mask)]
    in_specs += [_resident_spec(a) for a in args[2:]]

    cparams = pltpu.CompilerParams(
        dimension_semantics=("parallel",),
        vmem_limit_bytes=48 * 1024 * 1024,   # headroom vs v7x's 64 MiB VMEM
    )
    grid = (M // tile_rows,)

    if head is None:
        return pl.pallas_call(
            functools.partial(_encoder_layer_kernel, nhead=nhead,
                              seq_len=seq_len),
            out_shape=jax.ShapeDtypeStruct((M, E), x.dtype),
            grid=grid,
            in_specs=in_specs,
            out_specs=pl.BlockSpec((tile_rows, E), lambda i: (i, 0)),
            input_output_aliases={0: 0},      # residual stream in place
            compiler_params=cparams,
            cost_estimate=_layer_cost(M, E, F, tile_rows, nhead),
        )(*args)

    head_args = [head[k] for k in _HEAD_KEYS]
    args += head_args
    in_specs += [_resident_spec(a) for a in head_args]
    de, dp = head["dec2_w"].shape
    return pl.pallas_call(
        functools.partial(_encoder_layer_head_kernel, nhead=nhead,
                          seq_len=seq_len),
        out_shape=jax.ShapeDtypeStruct((M, dp), x.dtype),
        grid=grid,
        in_specs=in_specs,
        out_specs=pl.BlockSpec((tile_rows, dp), lambda i: (i, 0)),
        compiler_params=cparams,
        cost_estimate=_layer_cost(M, E, F, tile_rows, nhead,
                                  head_dims=(de, dp)),
    )(*args)


# ----------------------------------------------------------------------------
# Parameter construction (deterministic, synthetic)
# ----------------------------------------------------------------------------

def make_positional_encoding(d_model, max_len=512):
    position = jnp.arange(max_len, dtype=jnp.float32)[:, None]
    div_term = jnp.exp(
        jnp.arange(0, d_model, 2, dtype=jnp.float32)
        * (-math.log(10000.0) / d_model))
    pe = jnp.zeros((max_len, d_model), dtype=jnp.float32)
    pe = pe.at[:, 0::2].set(jnp.sin(position * div_term))
    pe = pe.at[:, 1::2].set(jnp.cos(position * div_term))
    return pe[:, None, :]                                  # (max_len, 1, E)


def init_params(key, d_model, nhead, dim_feedforward, en_nlayers,
                de_layer_size):
    E, F = d_model, dim_feedforward
    bf16 = jnp.bfloat16

    def dense(k, shape, scale=0.02):
        # Matmul weights stored in bf16 (MXU-native); accumulation stays f32.
        return (scale * jax.random.normal(k, shape, dtype=jnp.float32)
                ).astype(bf16)

    params = {"pe": make_positional_encoding(E), "layers": []}
    keys = jax.random.split(key, en_nlayers + 1)
    for li in range(en_nlayers):
        lk = jax.random.split(keys[li], 6)
        params["layers"].append({
            "ln1_g": jnp.ones((1, E), jnp.float32),
            "ln1_b": jnp.zeros((1, E), jnp.float32),
            "wq": dense(lk[0], (E, E)), "bq": jnp.zeros((1, E), jnp.float32),
            "wk": dense(lk[1], (E, E)), "bk": jnp.zeros((1, E), jnp.float32),
            "wv": dense(lk[2], (E, E)), "bv": jnp.zeros((1, E), jnp.float32),
            "wo": dense(lk[3], (E, E)), "bo": jnp.zeros((1, E), jnp.float32),
            "ln2_g": jnp.ones((1, E), jnp.float32),
            "ln2_b": jnp.zeros((1, E), jnp.float32),
            "lin1_w": dense(lk[4], (E, F)),
            "lin1_b": jnp.zeros((1, F), jnp.float32),
            "lin2_w": dense(lk[5], (F, E)),
            "lin2_b": jnp.zeros((1, E), jnp.float32),
        })

    hk = jax.random.split(keys[-1], 2)
    # dec2 (de_layer_size -> 1) zero-padded to _LANE_PAD output columns so the
    # fused head kernel's HBM store is lane-dense; column 0 holds the result.
    d2_real = 0.02 * jax.random.normal(hk[1], (de_layer_size, 1), jnp.float32)
    d2_pad = jnp.zeros((de_layer_size, _LANE_PAD), jnp.float32)
    d2_pad = d2_pad.at[:, :1].set(d2_real).astype(bf16)
    params["head"] = {
        "norm_g": jnp.ones((1, E), jnp.float32),
        "norm_b": jnp.zeros((1, E), jnp.float32),
        "dec1_w": dense(hk[0], (E, de_layer_size)),
        "dec1_b": jnp.zeros((1, de_layer_size), jnp.float32),
        "dec2_w": d2_pad,
        "dec2_b": jnp.zeros((1, _LANE_PAD), jnp.float32),
    }
    return params


# ----------------------------------------------------------------------------
# Forward pass (matches PyTorch Transformer.forward, eval mode)
# ----------------------------------------------------------------------------

def _pick_tile_rows(S, N, max_rows=256):
    """Row tile = k whole batches, so per-tile attention needs no cross-tile K/V."""
    if S % 8 != 0:                    # sublane constraint -> one full tile
        return N * S
    k = 1
    for cand in range(1, N + 1):
        if N % cand == 0 and cand * S <= max_rows and (N // cand) >= min(2, N):
            k = cand
    return k * S


def transformer_forward(params, src, src_mask, *, nhead):
    S, N, E = src.shape
    M = N * S

    # Positional encoding (dropout = identity in eval mode).
    x = src + params["pe"][:S]                               # (S, N, E)
    # Batch-major flatten: each batch occupies contiguous, sublane-aligned rows.
    x = jnp.transpose(x, (1, 0, 2)).reshape(M, E)            # (N*S, E)
    src_mask = src_mask.astype(jnp.float32)                  # (S, S) additive

    tile_rows = _pick_tile_rows(S, N)
    layers = params["layers"]
    assert len(layers) >= 1

    for layer in layers[:-1]:
        x = encoder_layer(x, src_mask, layer, nhead=nhead, seq_len=S,
                          tile_rows=tile_rows)
    # Last layer fused with final LayerNorm + decoder head (lane-padded out).
    out = encoder_layer(x, src_mask, layers[-1], nhead=nhead, seq_len=S,
                        tile_rows=tile_rows, head=params["head"])
    out = out[:, :1]                                         # drop lane padding
    return jnp.transpose(out.reshape(N, S, 1), (1, 0, 2))    # (S, N, 1)


# ----------------------------------------------------------------------------
# Main
# ----------------------------------------------------------------------------

if __name__ == "__main__":
    # Small config consistent with the module's constructor.
    d_model = 32
    nhead = 4
    dim_feedforward = 64
    en_nlayers = 2
    de_layer_size = 16
    S, N = 8, 2  # sequence length, batch size

    key = jax.random.PRNGKey(0)
    pkey, xkey = jax.random.split(key)

    params = init_params(pkey, d_model, nhead, dim_feedforward, en_nlayers,
                         de_layer_size)

    src = jax.random.normal(xkey, (S, N, d_model), dtype=jnp.float32)
    # Causal additive mask (0 on/below diagonal, large negative above).
    src_mask = jnp.where(
        jnp.tril(jnp.ones((S, S), dtype=bool)), 0.0, -1e9
    ).astype(jnp.float32)

    fwd = jax.jit(functools.partial(transformer_forward, nhead=nhead))
    out = fwd(params, src, src_mask)
    out = jax.block_until_ready(out)

    assert out.shape == (S, N, 1), out.shape
    assert jnp.all(jnp.isfinite(out))
    print("KERNEL_OK")
</pallas_src>

<mosaic_0001>
module attributes {stable_mosaic.version = 11 : i64} {
  func.func @_encoder_layer_kernel(%arg0: i32, %arg1: memref<8x32xf32, #tpu.memory_space<vmem>>, %arg2: memref<8x8xf32, #tpu.memory_space<vmem>>, %arg3: memref<1x32xf32, #tpu.memory_space<vmem>>, %arg4: memref<1x32xf32, #tpu.memory_space<vmem>>, %arg5: memref<32x32xbf16, #tpu.memory_space<vmem>>, %arg6: memref<1x32xf32, #tpu.memory_space<vmem>>, %arg7: memref<32x32xbf16, #tpu.memory_space<vmem>>, %arg8: memref<1x32xf32, #tpu.memory_space<vmem>>, %arg9: memref<32x32xbf16, #tpu.memory_space<vmem>>, %arg10: memref<1x32xf32, #tpu.memory_space<vmem>>, %arg11: memref<32x32xbf16, #tpu.memory_space<vmem>>, %arg12: memref<1x32xf32, #tpu.memory_space<vmem>>, %arg13: memref<1x32xf32, #tpu.memory_space<vmem>>, %arg14: memref<1x32xf32, #tpu.memory_space<vmem>>, %arg15: memref<32x64xbf16, #tpu.memory_space<vmem>>, %arg16: memref<1x64xf32, #tpu.memory_space<vmem>>, %arg17: memref<64x32xbf16, #tpu.memory_space<vmem>>, %arg18: memref<1x32xf32, #tpu.memory_space<vmem>>, %arg19: memref<8x32xf32, #tpu.memory_space<vmem>>) attributes {dimension_semantics = [#tpu.dimension_semantics<parallel>], iteration_bounds = array<i64: 2>, scalar_prefetch = 0 : i64, scratch_operands = 0 : i64, tpu.core_type = #tpu.core_type<tc>, window_params = [{transform_indices = @transform_0, window_bounds = array<i64: 8, 32>}, {pipeline_mode = #tpu.pipeline_mode<synchronous>, transform_indices = @transform_1, window_bounds = array<i64: 8, 8>}, {pipeline_mode = #tpu.pipeline_mode<synchronous>, transform_indices = @transform_2, window_bounds = array<i64: 1, 32>}, {pipeline_mode = #tpu.pipeline_mode<synchronous>, transform_indices = @transform_3, window_bounds = array<i64: 1, 32>}, {pipeline_mode = #tpu.pipeline_mode<synchronous>, transform_indices = @transform_4, window_bounds = array<i64: 32, 32>}, {pipeline_mode = #tpu.pipeline_mode<synchronous>, transform_indices = @transform_5, window_bounds = array<i64: 1, 32>}, {pipeline_mode = #tpu.pipeline_mode<synchronous>, transform_indices = @transform_6, window_bounds = array<i64: 32, 32>}, {pipeline_mode = #tpu.pipeline_mode<synchronous>, transform_indices = @transform_7, window_bounds = array<i64: 1, 32>}, {pipeline_mode = #tpu.pipeline_mode<synchronous>, transform_indices = @transform_8, window_bounds = array<i64: 32, 32>}, {pipeline_mode = #tpu.pipeline_mode<synchronous>, transform_indices = @transform_9, window_bounds = array<i64: 1, 32>}, {pipeline_mode = #tpu.pipeline_mode<synchronous>, transform_indices = @transform_10, window_bounds = array<i64: 32, 32>}, {pipeline_mode = #tpu.pipeline_mode<synchronous>, transform_indices = @transform_11, window_bounds = array<i64: 1, 32>}, {pipeline_mode = #tpu.pipeline_mode<synchronous>, transform_indices = @transform_12, window_bounds = array<i64: 1, 32>}, {pipeline_mode = #tpu.pipeline_mode<synchronous>, transform_indices = @transform_13, window_bounds = array<i64: 1, 32>}, {pipeline_mode = #tpu.pipeline_mode<synchronous>, transform_indices = @transform_14, window_bounds = array<i64: 32, 64>}, {pipeline_mode = #tpu.pipeline_mode<synchronous>, transform_indices = @transform_15, window_bounds = array<i64: 1, 64>}, {pipeline_mode = #tpu.pipeline_mode<synchronous>, transform_indices = @transform_16, window_bounds = array<i64: 64, 32>}, {pipeline_mode = #tpu.pipeline_mode<synchronous>, transform_indices = @transform_17, window_bounds = array<i64: 1, 32>}, {transform_indices = @transform_18, window_bounds = array<i64: 8, 32>}]} {
    %c0 = arith.constant 0 : index
    %c0_0 = arith.constant 0 : index
    %0 = vector.load %arg1[%c0, %c0_0] : memref<8x32xf32, #tpu.memory_space<vmem>>, vector<8x32xf32>
    %c0_1 = arith.constant 0 : index
    %c0_2 = arith.constant 0 : index
    %1 = vector.load %arg2[%c0_1, %c0_2] : memref<8x8xf32, #tpu.memory_space<vmem>>, vector<8x8xf32>
    %c0_3 = arith.constant 0 : index
    %c0_4 = arith.constant 0 : index
    %2 = vector.load %arg3[%c0_3, %c0_4] : memref<1x32xf32, #tpu.memory_space<vmem>>, vector<1x32xf32>
    %c0_5 = arith.constant 0 : index
    %c0_6 = arith.constant 0 : index
    %3 = vector.load %arg4[%c0_5, %c0_6] : memref<1x32xf32, #tpu.memory_space<vmem>>, vector<1x32xf32>
    %cst = arith.constant dense<0.000000e+00> : vector<8xf32>
    %4 = vector.multi_reduction <add>, %0, %cst [1] : vector<8x32xf32> to vector<8xf32>
    %5 = vector.shape_cast %4 : vector<8xf32> to vector<8x1xf32>
    %cst_7 = arith.constant 3.200000e+01 : f32
    %6 = vector.broadcast %cst_7 : f32 to vector<8x1xf32>
    %7 = arith.divf %5, %6 : vector<8x1xf32>
    %8 = vector.broadcast %7 : vector<8x1xf32> to vector<8x32xf32>
    %9 = arith.subf %0, %8 : vector<8x32xf32>
    %10 = arith.mulf %9, %9 : vector<8x32xf32>
    %cst_8 = arith.constant dense<0.000000e+00> : vector<8xf32>
    %11 = vector.multi_reduction <add>, %10, %cst_8 [1] : vector<8x32xf32> to vector<8xf32>
    %12 = vector.shape_cast %11 : vector<8xf32> to vector<8x1xf32>
    %cst_9 = arith.constant 3.200000e+01 : f32
    %13 = vector.broadcast %cst_9 : f32 to vector<8x1xf32>
    %14 = arith.divf %12, %13 : vector<8x1xf32>
    %15 = vector.broadcast %7 : vector<8x1xf32> to vector<8x32xf32>
    %16 = arith.subf %0, %15 : vector<8x32xf32>
    %cst_10 = arith.constant 9.99999974E-6 : f32
    %17 = vector.broadcast %cst_10 : f32 to vector<8x1xf32>
    %18 = arith.addf %14, %17 : vector<8x1xf32>
    %19 = math.rsqrt %18 : vector<8x1xf32>
    %20 = vector.broadcast %19 : vector<8x1xf32> to vector<8x32xf32>
    %21 = arith.mulf %16, %20 : vector<8x32xf32>
    %22 = vector.broadcast %2 : vector<1x32xf32> to vector<8x32xf32>
    %23 = arith.mulf %21, %22 : vector<8x32xf32>
    %24 = vector.broadcast %3 : vector<1x32xf32> to vector<8x32xf32>
    %25 = arith.addf %23, %24 : vector<8x32xf32>
    %26 = arith.truncf %25 : vector<8x32xf32> to vector<8x32xbf16>
    %c0_11 = arith.constant 0 : index
    %c0_12 = arith.constant 0 : index
    %27 = vector.load %arg5[%c0_11, %c0_12] : memref<32x32xbf16, #tpu.memory_space<vmem>>, vector<32x32xbf16>
    %cst_13 = arith.constant dense<0.000000e+00> : vector<8x32xf32>
    %28 = tpu.matmul %26, %27, %cst_13 {dimension_numbers = #tpu.dot_dimension_numbers<[1], [0], [0], [1], [0, 0, 1, 1], [], []>} : vector<8x32xbf16>, vector<32x32xbf16>, vector<8x32xf32> -> vector<8x32xf32>
    %c0_14 = arith.constant 0 : index
    %c0_15 = arith.constant 0 : index
    %29 = vector.load %arg6[%c0_14, %c0_15] : memref<1x32xf32, #tpu.memory_space<vmem>>, vector<1x32xf32>
    %30 = vector.broadcast %29 : vector<1x32xf32> to vector<8x32xf32>
    %31 = arith.addf %28, %30 : vector<8x32xf32>
    %c0_16 = arith.constant 0 : index
    %c0_17 = arith.constant 0 : index
    %32 = vector.load %arg7[%c0_16, %c0_17] : memref<32x32xbf16, #tpu.memory_space<vmem>>, vector<32x32xbf16>
    %cst_18 = arith.constant dense<0.000000e+00> : vector<8x32xf32>
    %33 = tpu.matmul %26, %32, %cst_18 {dimension_numbers = #tpu.dot_dimension_numbers<[1], [0], [0], [1], [0, 0, 1, 1], [], []>} : vector<8x32xbf16>, vector<32x32xbf16>, vector<8x32xf32> -> vector<8x32xf32>
    %c0_19 = arith.constant 0 : index
    %c0_20 = arith.constant 0 : index
    %34 = vector.load %arg8[%c0_19, %c0_20] : memref<1x32xf32, #tpu.memory_space<vmem>>, vector<1x32xf32>
    %35 = vector.broadcast %34 : vector<1x32xf32> to vector<8x32xf32>
    %36 = arith.addf %33, %35 : vector<8x32xf32>
    %c0_21 = arith.constant 0 : index
    %c0_22 = arith.constant 0 : index
    %37 = vector.load %arg9[%c0_21, %c0_22] : memref<32x32xbf16, #tpu.memory_space<vmem>>, vector<32x32xbf16>
    %cst_23 = arith.constant dense<0.000000e+00> : vector<8x32xf32>
    %38 = tpu.matmul %26, %37, %cst_23 {dimension_numbers = #tpu.dot_dimension_numbers<[1], [0], [0], [1], [0, 0, 1, 1], [], []>} : vector<8x32xbf16>, vector<32x32xbf16>, vector<8x32xf32> -> vector<8x32xf32>
    %c0_24 = arith.constant 0 : index
    %c0_25 = arith.constant 0 : index
    %39 = vector.load %arg10[%c0_24, %c0_25] : memref<1x32xf32, #tpu.memory_space<vmem>>, vector<1x32xf32>
    %40 = vector.broadcast %39 : vector<1x32xf32> to vector<8x32xf32>
    %41 = arith.addf %38, %40 : vector<8x32xf32>
    %cst_26 = arith.constant 0.353553385 : f32
    %42 = vector.broadcast %cst_26 : f32 to vector<8x32xf32>
    %43 = arith.mulf %31, %42 : vector<8x32xf32>
    %44 = vector.extract_strided_slice %43 {offsets = [0, 0], sizes = [8, 8], strides = [1, 1]} : vector<8x32xf32> to vector<8x8xf32>
    %45 = vector.extract_strided_slice %43 {offsets = [0, 8], sizes = [8, 8], strides = [1, 1]} : vector<8x32xf32> to vector<8x8xf32>
    %46 = vector.extract_strided_slice %43 {offsets = [0, 16], sizes = [8, 8], strides = [1, 1]} : vector<8x32xf32> to vector<8x8xf32>
    %47 = vector.extract_strided_slice %43 {offsets = [0, 24], sizes = [8, 8], strides = [1, 1]} : vector<8x32xf32> to vector<8x8xf32>
    %48 = vector.shape_cast %44 : vector<8x8xf32> to vector<1x8x8xf32>
    %49 = vector.shape_cast %45 : vector<8x8xf32> to vector<1x8x8xf32>
    %50 = vector.shape_cast %46 : vector<8x8xf32> to vector<1x8x8xf32>
    %51 = vector.shape_cast %47 : vector<8x8xf32> to vector<1x8x8xf32>
    %52 = tpu.concatenate %48, %49, %50, %51 in 0 : vector<1x8x8xf32>, vector<1x8x8xf32>, vector<1x8x8xf32>, vector<1x8x8xf32> -> vector<4x8x8xf32>
    %53 = arith.truncf %52 : vector<4x8x8xf32> to vector<4x8x8xbf16>
    %54 = vector.extract_strided_slice %36 {offsets = [0, 0], sizes = [8, 8], strides = [1, 1]} : vector<8x32xf32> to vector<8x8xf32>
    %55 = vector.extract_strided_slice %36 {offsets = [0, 8], sizes = [8, 8], strides = [1, 1]} : vector<8x32xf32> to vector<8x8xf32>
    %56 = vector.extract_strided_slice %36 {offsets = [0, 16], sizes = [8, 8], strides = [1, 1]} : vector<8x32xf32> to vector<8x8xf32>
    %57 = vector.extract_strided_slice %36 {offsets = [0, 24], sizes = [8, 8], strides = [1, 1]} : vector<8x32xf32> to vector<8x8xf32>
    %58 = vector.shape_cast %54 : vector<8x8xf32> to vector<1x8x8xf32>
    %59 = vector.shape_cast %55 : vector<8x8xf32> to vector<1x8x8xf32>
    %60 = vector.shape_cast %56 : vector<8x8xf32> to vector<1x8x8xf32>
    %61 = vector.shape_cast %57 : vector<8x8xf32> to vector<1x8x8xf32>
    %62 = tpu.concatenate %58, %59, %60, %61 in 0 : vector<1x8x8xf32>, vector<1x8x8xf32>, vector<1x8x8xf32>, vector<1x8x8xf32> -> vector<4x8x8xf32>
    %63 = arith.truncf %62 : vector<4x8x8xf32> to vector<4x8x8xbf16>
    %64 = vector.extract_strided_slice %41 {offsets = [0, 0], sizes = [8, 8], strides = [1, 1]} : vector<8x32xf32> to vector<8x8xf32>
    %65 = vector.extract_strided_slice %41 {offsets = [0, 8], sizes = [8, 8], strides = [1, 1]} : vector<8x32xf32> to vector<8x8xf32>
    %66 = vector.extract_strided_slice %41 {offsets = [0, 16], sizes = [8, 8], strides = [1, 1]} : vector<8x32xf32> to vector<8x8xf32>
    %67 = vector.extract_strided_slice %41 {offsets = [0, 24], sizes = [8, 8], strides = [1, 1]} : vector<8x32xf32> to vector<8x8xf32>
    %68 = vector.shape_cast %64 : vector<8x8xf32> to vector<1x8x8xf32>
    %69 = vector.shape_cast %65 : vector<8x8xf32> to vector<1x8x8xf32>
    %70 = vector.shape_cast %66 : vector<8x8xf32> to vector<1x8x8xf32>
    %71 = vector.shape_cast %67 : vector<8x8xf32> to vector<1x8x8xf32>
    %72 = tpu.concatenate %68, %69, %70, %71 in 0 : vector<1x8x8xf32>, vector<1x8x8xf32>, vector<1x8x8xf32>, vector<1x8x8xf32> -> vector<4x8x8xf32>
    %73 = arith.truncf %72 : vector<4x8x8xf32> to vector<4x8x8xbf16>
    "tpu.trace_start"() <{level = 10 : i32, message = "hqd,hkd->hqk"}> : () -> ()
    %cst_27 = arith.constant dense<0.000000e+00> : vector<4x8x8xf32>
    %74 = tpu.matmul %53, %63, %cst_27 {dimension_numbers = #tpu.dot_dimension_numbers<[2], [2], [1], [1], [0, 0, 0, 1, 1, 1], [0], [0]>} : vector<4x8x8xbf16>, vector<4x8x8xbf16>, vector<4x8x8xf32> -> vector<4x8x8xf32>
    "tpu.trace_stop"() : () -> ()
    %75 = vector.shape_cast %1 : vector<8x8xf32> to vector<1x8x8xf32>
    %76 = vector.broadcast %75 : vector<1x8x8xf32> to vector<4x8x8xf32>
    %77 = arith.addf %74, %76 : vector<4x8x8xf32>
    %cst_28 = arith.constant dense<0xFF800000> : vector<4x8xf32>
    %78 = vector.multi_reduction <maximumf>, %77, %cst_28 [2] : vector<4x8x8xf32> to vector<4x8xf32>
    %79 = vector.shape_cast %78 : vector<4x8xf32> to vector<4x8x1xf32>
    %80 = vector.broadcast %79 : vector<4x8x1xf32> to vector<4x8x8xf32>
    %81 = arith.subf %77, %80 : vector<4x8x8xf32>
    %82 = math.exp %81 : vector<4x8x8xf32>
    %cst_29 = arith.constant dense<0.000000e+00> : vector<4x8xf32>
    %83 = vector.multi_reduction <add>, %82, %cst_29 [2] : vector<4x8x8xf32> to vector<4x8xf32>
    %84 = vector.shape_cast %83 : vector<4x8xf32> to vector<4x8x1xf32>
    %85 = tpu.reciprocal %84 {approx = true} : vector<4x8x1xf32> -> vector<4x8x1xf32>
    %86 = vector.broadcast %85 : vector<4x8x1xf32> to vector<4x8x8xf32>
    %87 = arith.mulf %82, %86 : vector<4x8x8xf32>
    %88 = arith.truncf %87 : vector<4x8x8xf32> to vector<4x8x8xbf16>
    "tpu.trace_start"() <{level = 10 : i32, message = "hqk,hkd->hqd"}> : () -> ()
    %cst_30 = arith.constant dense<0.000000e+00> : vector<4x8x8xf32>
    %89 = tpu.matmul %88, %73, %cst_30 {dimension_numbers = #tpu.dot_dimension_numbers<[2], [1], [1], [2], [0, 0, 0, 1, 1, 2], [0], [0]>} : vector<4x8x8xbf16>, vector<4x8x8xbf16>, vector<4x8x8xf32> -> vector<4x8x8xf32>
    "tpu.trace_stop"() : () -> ()
    %90 = vector.extract_strided_slice %89 {offsets = [0, 0, 0], sizes = [1, 8, 8], strides = [1, 1, 1]} : vector<4x8x8xf32> to vector<1x8x8xf32>
    %91 = vector.shape_cast %90 : vector<1x8x8xf32> to vector<8x8xf32>
    %92 = vector.extract_strided_slice %89 {offsets = [1, 0, 0], sizes = [1, 8, 8], strides = [1, 1, 1]} : vector<4x8x8xf32> to vector<1x8x8xf32>
    %93 = vector.shape_cast %92 : vector<1x8x8xf32> to vector<8x8xf32>
    %94 = vector.extract_strided_slice %89 {offsets = [2, 0, 0], sizes = [1, 8, 8], strides = [1, 1, 1]} : vector<4x8x8xf32> to vector<1x8x8xf32>
    %95 = vector.shape_cast %94 : vector<1x8x8xf32> to vector<8x8xf32>
    %96 = vector.extract_strided_slice %89 {offsets = [3, 0, 0], sizes = [1, 8, 8], strides = [1, 1, 1]} : vector<4x8x8xf32> to vector<1x8x8xf32>
    %97 = vector.shape_cast %96 : vector<1x8x8xf32> to vector<8x8xf32>
    %98 = tpu.concatenate %91, %93, %95, %97 in 1 : vector<8x8xf32>, vector<8x8xf32>, vector<8x8xf32>, vector<8x8xf32> -> vector<8x32xf32>
    %99 = arith.truncf %98 : vector<8x32xf32> to vector<8x32xbf16>
    %c0_31 = arith.constant 0 : index
    %c0_32 = arith.constant 0 : index
    %100 = vector.load %arg11[%c0_31, %c0_32] : memref<32x32xbf16, #tpu.memory_space<vmem>>, vector<32x32xbf16>
    %cst_33 = arith.constant dense<0.000000e+00> : vector<8x32xf32>
    %101 = tpu.matmul %99, %100, %cst_33 {dimension_numbers = #tpu.dot_dimension_numbers<[1], [0], [0], [1], [0, 0, 1, 1], [], []>} : vector<8x32xbf16>, vector<32x32xbf16>, vector<8x32xf32> -> vector<8x32xf32>
    %102 = arith.addf %0, %101 : vector<8x32xf32>
    %c0_34 = arith.constant 0 : index
    %c0_35 = arith.constant 0 : index
    %103 = vector.load %arg12[%c0_34, %c0_35] : memref<1x32xf32, #tpu.memory_space<vmem>>, vector<1x32xf32>
    %104 = vector.broadcast %103 : vector<1x32xf32> to vector<8x32xf32>
    %105 = arith.addf %102, %104 : vector<8x32xf32>
    %c0_36 = arith.constant 0 : index
    %c0_37 = arith.constant 0 : index
    %106 = vector.load %arg13[%c0_36, %c0_37] : memref<1x32xf32, #tpu.memory_space<vmem>>, vector<1x32xf32>
    %c0_38 = arith.constant 0 : index
    %c0_39 = arith.constant 0 : index
    %107 = vector.load %arg14[%c0_38, %c0_39] : memref<1x32xf32, #tpu.memory_space<vmem>>, vector<1x32xf32>
    %cst_40 = arith.constant dense<0.000000e+00> : vector<8xf32>
    %108 = vector.multi_reduction <add>, %105, %cst_40 [1] : vector<8x32xf32> to vector<8xf32>
    %109 = vector.shape_cast %108 : vector<8xf32> to vector<8x1xf32>
    %cst_41 = arith.constant 3.200000e+01 : f32
    %110 = vector.broadcast %cst_41 : f32 to vector<8x1xf32>
    %111 = arith.divf %109, %110 : vector<8x1xf32>
    %112 = vector.broadcast %111 : vector<8x1xf32> to vector<8x32xf32>
    %113 = arith.subf %105, %112 : vector<8x32xf32>
    %114 = arith.mulf %113, %113 : vector<8x32xf32>
    %cst_42 = arith.constant dense<0.000000e+00> : vector<8xf32>
    %115 = vector.multi_reduction <add>, %114, %cst_42 [1] : vector<8x32xf32> to vector<8xf32>
    %116 = vector.shape_cast %115 : vector<8xf32> to vector<8x1xf32>
    %cst_43 = arith.constant 3.200000e+01 : f32
    %117 = vector.broadcast %cst_43 : f32 to vector<8x1xf32>
    %118 = arith.divf %116, %117 : vector<8x1xf32>
    %119 = vector.broadcast %111 : vector<8x1xf32> to vector<8x32xf32>
    %120 = arith.subf %105, %119 : vector<8x32xf32>
    %cst_44 = arith.constant 9.99999974E-6 : f32
    %121 = vector.broadcast %cst_44 : f32 to vector<8x1xf32>
    %122 = arith.addf %118, %121 : vector<8x1xf32>
    %123 = math.rsqrt %122 : vector<8x1xf32>
    %124 = vector.broadcast %123 : vector<8x1xf32> to vector<8x32xf32>
    %125 = arith.mulf %120, %124 : vector<8x32xf32>
    %126 = vector.broadcast %106 : vector<1x32xf32> to vector<8x32xf32>
    %127 = arith.mulf %125, %126 : vector<8x32xf32>
    %128 = vector.broadcast %107 : vector<1x32xf32> to vector<8x32xf32>
    %129 = arith.addf %127, %128 : vector<8x32xf32>
    %130 = arith.truncf %129 : vector<8x32xf32> to vector<8x32xbf16>
    %c0_45 = arith.constant 0 : index
    %c0_46 = arith.constant 0 : index
    %131 = vector.load %arg15[%c0_45, %c0_46] : memref<32x64xbf16, #tpu.memory_space<vmem>>, vector<32x64xbf16>
    %cst_47 = arith.constant dense<0.000000e+00> : vector<8x64xf32>
    %132 = tpu.matmul %130, %131, %cst_47 {dimension_numbers = #tpu.dot_dimension_numbers<[1], [0], [0], [1], [0, 0, 1, 1], [], []>} : vector<8x32xbf16>, vector<32x64xbf16>, vector<8x64xf32> -> vector<8x64xf32>
    %c0_48 = arith.constant 0 : index
    %c0_49 = arith.constant 0 : index
    %133 = vector.load %arg16[%c0_48, %c0_49] : memref<1x64xf32, #tpu.memory_space<vmem>>, vector<1x64xf32>
    %134 = vector.broadcast %133 : vector<1x64xf32> to vector<8x64xf32>
    %135 = arith.addf %132, %134 : vector<8x64xf32>
    %cst_50 = arith.constant 0.000000e+00 : f32
    %136 = vector.broadcast %cst_50 : f32 to vector<8x64xf32>
    %137 = arith.maximumf %135, %136 : vector<8x64xf32>
    %138 = arith.truncf %137 : vector<8x64xf32> to vector<8x64xbf16>
    %c0_51 = arith.constant 0 : index
    %c0_52 = arith.constant 0 : index
    %139 = vector.load %arg17[%c0_51, %c0_52] : memref<64x32xbf16, #tpu.memory_space<vmem>>, vector<64x32xbf16>
    %cst_53 = arith.constant dense<0.000000e+00> : vector<8x32xf32>
    %140 = tpu.matmul %138, %139, %cst_53 {dimension_numbers = #tpu.dot_dimension_numbers<[1], [0], [0], [1], [0, 0, 1, 1], [], []>} : vector<8x64xbf16>, vector<64x32xbf16>, vector<8x32xf32> -> vector<8x32xf32>
    %c0_54 = arith.constant 0 : index
    %c0_55 = arith.constant 0 : index
    %141 = vector.load %arg18[%c0_54, %c0_55] : memref<1x32xf32, #tpu.memory_space<vmem>>, vector<1x32xf32>
    %142 = vector.broadcast %141 : vector<1x32xf32> to vector<8x32xf32>
    %143 = arith.addf %140, %142 : vector<8x32xf32>
    %144 = arith.addf %105, %143 : vector<8x32xf32>
    %c0_56 = arith.constant 0 : index
    %c0_57 = arith.constant 0 : index
    %145 = vector.load %arg19[%c0_56, %c0_57] : memref<8x32xf32, #tpu.memory_space<vmem>>, vector<8x32xf32>
    tpu.vector_store %arg19[%c0_56, %c0_57], %144 {strides = array<i32>} : memref<8x32xf32, #tpu.memory_space<vmem>>, vector<8x32xf32>,
    return
  }
  func.func @transform_0(%arg0: i32) -> (i32, i32) {
    %c0_i32 = arith.constant 0 : i32
    %c0_i32_0 = arith.constant 0 : i32
    return %arg0, %c0_i32 : i32, i32
  }
  func.func @transform_1(%arg0: i32) -> (i32, i32) {
    %c0_i32 = arith.constant 0 : i32
    %c0_i32_0 = arith.constant 0 : i32
    %c0_i32_1 = arith.constant 0 : i32
    return %c0_i32, %c0_i32_0 : i32, i32
  }
  func.func @transform_2(%arg0: i32) -> (i32, i32) {
    %c0_i32 = arith.constant 0 : i32
    %c0_i32_0 = arith.constant 0 : i32
    %c0_i32_1 = arith.constant 0 : i32
    return %c0_i32, %c0_i32_0 : i32, i32
  }
  func.func @transform_3(%arg0: i32) -> (i32, i32) {
    %c0_i32 = arith.constant 0 : i32
    %c0_i32_0 = arith.constant 0 : i32
    %c0_i32_1 = arith.constant 0 : i32
    return %c0_i32, %c0_i32_0 : i32, i32
  }
  func.func @transform_4(%arg0: i32) -> (i32, i32) {
    %c0_i32 = arith.constant 0 : i32
    %c0_i32_0 = arith.constant 0 : i32
    %c0_i32_1 = arith.constant 0 : i32
    return %c0_i32, %c0_i32_0 : i32, i32
  }
  func.func @transform_5(%arg0: i32) -> (i32, i32) {
    %c0_i32 = arith.constant 0 : i32
    %c0_i32_0 = arith.constant 0 : i32
    %c0_i32_1 = arith.constant 0 : i32
    return %c0_i32, %c0_i32_0 : i32, i32
  }
  func.func @transform_6(%arg0: i32) -> (i32, i32) {
    %c0_i32 = arith.constant 0 : i32
    %c0_i32_0 = arith.constant 0 : i32
    %c0_i32_1 = arith.constant 0 : i32
    return %c0_i32, %c0_i32_0 : i32, i32
  }
  func.func @transform_7(%arg0: i32) -> (i32, i32) {
    %c0_i32 = arith.constant 0 : i32
    %c0_i32_0 = arith.constant 0 : i32
    %c0_i32_1 = arith.constant 0 : i32
    return %c0_i32, %c0_i32_0 : i32, i32
  }
  func.func @transform_8(%arg0: i32) -> (i32, i32) {
    %c0_i32 = arith.constant 0 : i32
    %c0_i32_0 = arith.constant 0 : i32
    %c0_i32_1 = arith.constant 0 : i32
    return %c0_i32, %c0_i32_0 : i32, i32
  }
  func.func @transform_9(%arg0: i32) -> (i32, i32) {
    %c0_i32 = arith.constant 0 : i32
    %c0_i32_0 = arith.constant 0 : i32
    %c0_i32_1 = arith.constant 0 : i32
    return %c0_i32, %c0_i32_0 : i32, i32
  }
  func.func @transform_10(%arg0: i32) -> (i32, i32) {
    %c0_i32 = arith.constant 0 : i32
    %c0_i32_0 = arith.constant 0 : i32
    %c0_i32_1 = arith.constant 0 : i32
    return %c0_i32, %c0_i32_0 : i32, i32
  }
  func.func @transform_11(%arg0: i32) -> (i32, i32) {
    %c0_i32 = arith.constant 0 : i32
    %c0_i32_0 = arith.constant 0 : i32
    %c0_i32_1 = arith.constant 0 : i32
    return %c0_i32, %c0_i32_0 : i32, i32
  }
  func.func @transform_12(%arg0: i32) -> (i32, i32) {
    %c0_i32 = arith.constant 0 : i32
    %c0_i32_0 = arith.constant 0 : i32
    %c0_i32_1 = arith.constant 0 : i32
    return %c0_i32, %c0_i32_0 : i32, i32
  }
  func.func @transform_13(%arg0: i32) -> (i32, i32) {
    %c0_i32 = arith.constant 0 : i32
    %c0_i32_0 = arith.constant 0 : i32
    %c0_i32_1 = arith.constant 0 : i32
    return %c0_i32, %c0_i32_0 : i32, i32
  }
  func.func @transform_14(%arg0: i32) -> (i32, i32) {
    %c0_i32 = arith.constant 0 : i32
    %c0_i32_0 = arith.constant 0 : i32
    %c0_i32_1 = arith.constant 0 : i32
    return %c0_i32, %c0_i32_0 : i32, i32
  }
  func.func @transform_15(%arg0: i32) -> (i32, i32) {
    %c0_i32 = arith.constant 0 : i32
    %c0_i32_0 = arith.constant 0 : i32
    %c0_i32_1 = arith.constant 0 : i32
    return %c0_i32, %c0_i32_0 : i32, i32
  }
  func.func @transform_16(%arg0: i32) -> (i32, i32) {
    %c0_i32 = arith.constant 0 : i32
    %c0_i32_0 = arith.constant 0 : i32
    %c0_i32_1 = arith.constant 0 : i32
    return %c0_i32, %c0_i32_0 : i32, i32
  }
  func.func @transform_17(%arg0: i32) -> (i32, i32) {
    %c0_i32 = arith.constant 0 : i32
    %c0_i32_0 = arith.constant 0 : i32
    %c0_i32_1 = arith.constant 0 : i32
    return %c0_i32, %c0_i32_0 : i32, i32
  }
  func.func @transform_18(%arg0: i32) -> (i32, i32) {
    %c0_i32 = arith.constant 0 : i32
    %c0_i32_0 = arith.constant 0 : i32
    return %arg0, %c0_i32 : i32, i32
  }
}

module attributes {stable_mosaic.version = 11 : i64} {
  func.func @_encoder_layer_head_kernel(%arg0: i32, %arg1: memref<8x32xf32, #tpu.memory_space<vmem>>, %arg2: memref<8x8xf32, #tpu.memory_space<vmem>>, %arg3: memref<1x32xf32, #tpu.memory_space<vmem>>, %arg4: memref<1x32xf32, #tpu.memory_space<vmem>>, %arg5: memref<32x32xbf16, #tpu.memory_space<vmem>>, %arg6: memref<1x32xf32, #tpu.memory_space<vmem>>, %arg7: memref<32x32xbf16, #tpu.memory_space<vmem>>, %arg8: memref<1x32xf32, #tpu.memory_space<vmem>>, %arg9: memref<32x32xbf16, #tpu.memory_space<vmem>>, %arg10: memref<1x32xf32, #tpu.memory_space<vmem>>, %arg11: memref<32x32xbf16, #tpu.memory_space<vmem>>, %arg12: memref<1x32xf32, #tpu.memory_space<vmem>>, %arg13: memref<1x32xf32, #tpu.memory_space<vmem>>, %arg14: memref<1x32xf32, #tpu.memory_space<vmem>>, %arg15: memref<32x64xbf16, #tpu.memory_space<vmem>>, %arg16: memref<1x64xf32, #tpu.memory_space<vmem>>, %arg17: memref<64x32xbf16, #tpu.memory_space<vmem>>, %arg18: memref<1x32xf32, #tpu.memory_space<vmem>>, %arg19: memref<1x32xf32, #tpu.memory_space<vmem>>, %arg20: memref<1x32xf32, #tpu.memory_space<vmem>>, %arg21: memref<32x16xbf16, #tpu.memory_space<vmem>>, %arg22: memref<1x16xf32, #tpu.memory_space<vmem>>, %arg23: memref<16x128xbf16, #tpu.memory_space<vmem>>, %arg24: memref<1x128xf32, #tpu.memory_space<vmem>>, %arg25: memref<8x128xf32, #tpu.memory_space<vmem>>) attributes {dimension_semantics = [#tpu.dimension_semantics<parallel>], iteration_bounds = array<i64: 2>, scalar_prefetch = 0 : i64, scratch_operands = 0 : i64, tpu.core_type = #tpu.core_type<tc>, window_params = [{transform_indices = @transform_0, window_bounds = array<i64: 8, 32>}, {pipeline_mode = #tpu.pipeline_mode<synchronous>, transform_indices = @transform_1, window_bounds = array<i64: 8, 8>}, {pipeline_mode = #tpu.pipeline_mode<synchronous>, transform_indices = @transform_2, window_bounds = array<i64: 1, 32>}, {pipeline_mode = #tpu.pipeline_mode<synchronous>, transform_indices = @transform_3, window_bounds = array<i64: 1, 32>}, {pipeline_mode = #tpu.pipeline_mode<synchronous>, transform_indices = @transform_4, window_bounds = array<i64: 32, 32>}, {pipeline_mode = #tpu.pipeline_mode<synchronous>, transform_indices = @transform_5, window_bounds = array<i64: 1, 32>}, {pipeline_mode = #tpu.pipeline_mode<synchronous>, transform_indices = @transform_6, window_bounds = array<i64: 32, 32>}, {pipeline_mode = #tpu.pipeline_mode<synchronous>, transform_indices = @transform_7, window_bounds = array<i64: 1, 32>}, {pipeline_mode = #tpu.pipeline_mode<synchronous>, transform_indices = @transform_8, window_bounds = array<i64: 32, 32>}, {pipeline_mode = #tpu.pipeline_mode<synchronous>, transform_indices = @transform_9, window_bounds = array<i64: 1, 32>}, {pipeline_mode = #tpu.pipeline_mode<synchronous>, transform_indices = @transform_10, window_bounds = array<i64: 32, 32>}, {pipeline_mode = #tpu.pipeline_mode<synchronous>, transform_indices = @transform_11, window_bounds = array<i64: 1, 32>}, {pipeline_mode = #tpu.pipeline_mode<synchronous>, transform_indices = @transform_12, window_bounds = array<i64: 1, 32>}, {pipeline_mode = #tpu.pipeline_mode<synchronous>, transform_indices = @transform_13, window_bounds = array<i64: 1, 32>}, {pipeline_mode = #tpu.pipeline_mode<synchronous>, transform_indices = @transform_14, window_bounds = array<i64: 32, 64>}, {pipeline_mode = #tpu.pipeline_mode<synchronous>, transform_indices = @transform_15, window_bounds = array<i64: 1, 64>}, {pipeline_mode = #tpu.pipeline_mode<synchronous>, transform_indices = @transform_16, window_bounds = array<i64: 64, 32>}, {pipeline_mode = #tpu.pipeline_mode<synchronous>, transform_indices = @transform_17, window_bounds = array<i64: 1, 32>}, {pipeline_mode = #tpu.pipeline_mode<synchronous>, transform_indices = @transform_18, window_bounds = array<i64: 1, 32>}, {pipeline_mode = #tpu.pipeline_mode<synchronous>, transform_indices = @transform_19, window_bounds = array<i64: 1, 32>}, {pipeline_mode = #tpu.pipeline_mode<synchronous>, transform_indices = @transform_20, window_bounds = array<i64: 32, 16>}, {pipeline_mode = #tpu.pipeline_mode<synchronous>, transform_indices = @transform_21, window_bounds = array<i64: 1, 16>}, {pipeline_mode = #tpu.pipeline_mode<synchronous>, transform_indices = @transform_22, window_bounds = array<i64: 16, 128>}, {pipeline_mode = #tpu.pipeline_mode<synchronous>, transform_indices = @transform_23, window_bounds = array<i64: 1, 128>}, {transform_indices = @transform_24, window_bounds = array<i64: 8, 128>}]} {
    %c0 = arith.constant 0 : index
    %c0_0 = arith.constant 0 : index
    %0 = vector.load %arg1[%c0, %c0_0] : memref<8x32xf32, #tpu.memory_space<vmem>>, vector<8x32xf32>
    %c0_1 = arith.constant 0 : index
    %c0_2 = arith.constant 0 : index
    %1 = vector.load %arg2[%c0_1, %c0_2] : memref<8x8xf32, #tpu.memory_space<vmem>>, vector<8x8xf32>
    %c0_3 = arith.constant 0 : index
    %c0_4 = arith.constant 0 : index
    %2 = vector.load %arg3[%c0_3, %c0_4] : memref<1x32xf32, #tpu.memory_space<vmem>>, vector<1x32xf32>
    %c0_5 = arith.constant 0 : index
    %c0_6 = arith.constant 0 : index
    %3 = vector.load %arg4[%c0_5, %c0_6] : memref<1x32xf32, #tpu.memory_space<vmem>>, vector<1x32xf32>
    %cst = arith.constant dense<0.000000e+00> : vector<8xf32>
    %4 = vector.multi_reduction <add>, %0, %cst [1] : vector<8x32xf32> to vector<8xf32>
    %5 = vector.shape_cast %4 : vector<8xf32> to vector<8x1xf32>
    %cst_7 = arith.constant 3.200000e+01 : f32
    %6 = vector.broadcast %cst_7 : f32 to vector<8x1xf32>
    %7 = arith.divf %5, %6 : vector<8x1xf32>
    %8 = vector.broadcast %7 : vector<8x1xf32> to vector<8x32xf32>
    %9 = arith.subf %0, %8 : vector<8x32xf32>
    %10 = arith.mulf %9, %9 : vector<8x32xf32>
    %cst_8 = arith.constant dense<0.000000e+00> : vector<8xf32>
    %11 = vector.multi_reduction <add>, %10, %cst_8 [1] : vector<8x32xf32> to vector<8xf32>
    %12 = vector.shape_cast %11 : vector<8xf32> to vector<8x1xf32>
    %cst_9 = arith.constant 3.200000e+01 : f32
    %13 = vector.broadcast %cst_9 : f32 to vector<8x1xf32>
    %14 = arith.divf %12, %13 : vector<8x1xf32>
    %15 = vector.broadcast %7 : vector<8x1xf32> to vector<8x32xf32>
    %16 = arith.subf %0, %15 : vector<8x32xf32>
    %cst_10 = arith.constant 9.99999974E-6 : f32
    %17 = vector.broadcast %cst_10 : f32 to vector<8x1xf32>
    %18 = arith.addf %14, %17 : vector<8x1xf32>
    %19 = math.rsqrt %18 : vector<8x1xf32>
    %20 = vector.broadcast %19 : vector<8x1xf32> to vector<8x32xf32>
    %21 = arith.mulf %16, %20 : vector<8x32xf32>
    %22 = vector.broadcast %2 : vector<1x32xf32> to vector<8x32xf32>
    %23 = arith.mulf %21, %22 : vector<8x32xf32>
    %24 = vector.broadcast %3 : vector<1x32xf32> to vector<8x32xf32>
    %25 = arith.addf %23, %24 : vector<8x32xf32>
    %26 = arith.truncf %25 : vector<8x32xf32> to vector<8x32xbf16>
    %c0_11 = arith.constant 0 : index
    %c0_12 = arith.constant 0 : index
    %27 = vector.load %arg5[%c0_11, %c0_12] : memref<32x32xbf16, #tpu.memory_space<vmem>>, vector<32x32xbf16>
    %cst_13 = arith.constant dense<0.000000e+00> : vector<8x32xf32>
    %28 = tpu.matmul %26, %27, %cst_13 {dimension_numbers = #tpu.dot_dimension_numbers<[1], [0], [0], [1], [0, 0, 1, 1], [], []>} : vector<8x32xbf16>, vector<32x32xbf16>, vector<8x32xf32> -> vector<8x32xf32>
    %c0_14 = arith.constant 0 : index
    %c0_15 = arith.constant 0 : index
    %29 = vector.load %arg6[%c0_14, %c0_15] : memref<1x32xf32, #tpu.memory_space<vmem>>, vector<1x32xf32>
    %30 = vector.broadcast %29 : vector<1x32xf32> to vector<8x32xf32>
    %31 = arith.addf %28, %30 : vector<8x32xf32>
    %c0_16 = arith.constant 0 : index
    %c0_17 = arith.constant 0 : index
    %32 = vector.load %arg7[%c0_16, %c0_17] : memref<32x32xbf16, #tpu.memory_space<vmem>>, vector<32x32xbf16>
    %cst_18 = arith.constant dense<0.000000e+00> : vector<8x32xf32>
    %33 = tpu.matmul %26, %32, %cst_18 {dimension_numbers = #tpu.dot_dimension_numbers<[1], [0], [0], [1], [0, 0, 1, 1], [], []>} : vector<8x32xbf16>, vector<32x32xbf16>, vector<8x32xf32> -> vector<8x32xf32>
    %c0_19 = arith.constant 0 : index
    %c0_20 = arith.constant 0 : index
    %34 = vector.load %arg8[%c0_19, %c0_20] : memref<1x32xf32, #tpu.memory_space<vmem>>, vector<1x32xf32>
    %35 = vector.broadcast %34 : vector<1x32xf32> to vector<8x32xf32>
    %36 = arith.addf %33, %35 : vector<8x32xf32>
    %c0_21 = arith.constant 0 : index
    %c0_22 = arith.constant 0 : index
    %37 = vector.load %arg9[%c0_21, %c0_22] : memref<32x32xbf16, #tpu.memory_space<vmem>>, vector<32x32xbf16>
    %cst_23 = arith.constant dense<0.000000e+00> : vector<8x32xf32>
    %38 = tpu.matmul %26, %37, %cst_23 {dimension_numbers = #tpu.dot_dimension_numbers<[1], [0], [0], [1], [0, 0, 1, 1], [], []>} : vector<8x32xbf16>, vector<32x32xbf16>, vector<8x32xf32> -> vector<8x32xf32>
    %c0_24 = arith.constant 0 : index
    %c0_25 = arith.constant 0 : index
    %39 = vector.load %arg10[%c0_24, %c0_25] : memref<1x32xf32, #tpu.memory_space<vmem>>, vector<1x32xf32>
    %40 = vector.broadcast %39 : vector<1x32xf32> to vector<8x32xf32>
    %41 = arith.addf %38, %40 : vector<8x32xf32>
    %cst_26 = arith.constant 0.353553385 : f32
    %42 = vector.broadcast %cst_26 : f32 to vector<8x32xf32>
    %43 = arith.mulf %31, %42 : vector<8x32xf32>
    %44 = vector.extract_strided_slice %43 {offsets = [0, 0], sizes = [8, 8], strides = [1, 1]} : vector<8x32xf32> to vector<8x8xf32>
    %45 = vector.extract_strided_slice %43 {offsets = [0, 8], sizes = [8, 8], strides = [1, 1]} : vector<8x32xf32> to vector<8x8xf32>
    %46 = vector.extract_strided_slice %43 {offsets = [0, 16], sizes = [8, 8], strides = [1, 1]} : vector<8x32xf32> to vector<8x8xf32>
    %47 = vector.extract_strided_slice %43 {offsets = [0, 24], sizes = [8, 8], strides = [1, 1]} : vector<8x32xf32> to vector<8x8xf32>
    %48 = vector.shape_cast %44 : vector<8x8xf32> to vector<1x8x8xf32>
    %49 = vector.shape_cast %45 : vector<8x8xf32> to vector<1x8x8xf32>
    %50 = vector.shape_cast %46 : vector<8x8xf32> to vector<1x8x8xf32>
    %51 = vector.shape_cast %47 : vector<8x8xf32> to vector<1x8x8xf32>
    %52 = tpu.concatenate %48, %49, %50, %51 in 0 : vector<1x8x8xf32>, vector<1x8x8xf32>, vector<1x8x8xf32>, vector<1x8x8xf32> -> vector<4x8x8xf32>
    %53 = arith.truncf %52 : vector<4x8x8xf32> to vector<4x8x8xbf16>
    %54 = vector.extract_strided_slice %36 {offsets = [0, 0], sizes = [8, 8], strides = [1, 1]} : vector<8x32xf32> to vector<8x8xf32>
    %55 = vector.extract_strided_slice %36 {offsets = [0, 8], sizes = [8, 8], strides = [1, 1]} : vector<8x32xf32> to vector<8x8xf32>
    %56 = vector.extract_strided_slice %36 {offsets = [0, 16], sizes = [8, 8], strides = [1, 1]} : vector<8x32xf32> to vector<8x8xf32>
    %57 = vector.extract_strided_slice %36 {offsets = [0, 24], sizes = [8, 8], strides = [1, 1]} : vector<8x32xf32> to vector<8x8xf32>
    %58 = vector.shape_cast %54 : vector<8x8xf32> to vector<1x8x8xf32>
    %59 = vector.shape_cast %55 : vector<8x8xf32> to vector<1x8x8xf32>
    %60 = vector.shape_cast %56 : vector<8x8xf32> to vector<1x8x8xf32>
    %61 = vector.shape_cast %57 : vector<8x8xf32> to vector<1x8x8xf32>
    %62 = tpu.concatenate %58, %59, %60, %61 in 0 : vector<1x8x8xf32>, vector<1x8x8xf32>, vector<1x8x8xf32>, vector<1x8x8xf32> -> vector<4x8x8xf32>
    %63 = arith.truncf %62 : vector<4x8x8xf32> to vector<4x8x8xbf16>
    %64 = vector.extract_strided_slice %41 {offsets = [0, 0], sizes = [8, 8], strides = [1, 1]} : vector<8x32xf32> to vector<8x8xf32>
    %65 = vector.extract_strided_slice %41 {offsets = [0, 8], sizes = [8, 8], strides = [1, 1]} : vector<8x32xf32> to vector<8x8xf32>
    %66 = vector.extract_strided_slice %41 {offsets = [0, 16], sizes = [8, 8], strides = [1, 1]} : vector<8x32xf32> to vector<8x8xf32>
    %67 = vector.extract_strided_slice %41 {offsets = [0, 24], sizes = [8, 8], strides = [1, 1]} : vector<8x32xf32> to vector<8x8xf32>
    %68 = vector.shape_cast %64 : vector<8x8xf32> to vector<1x8x8xf32>
    %69 = vector.shape_cast %65 : vector<8x8xf32> to vector<1x8x8xf32>
    %70 = vector.shape_cast %66 : vector<8x8xf32> to vector<1x8x8xf32>
    %71 = vector.shape_cast %67 : vector<8x8xf32> to vector<1x8x8xf32>
    %72 = tpu.concatenate %68, %69, %70, %71 in 0 : vector<1x8x8xf32>, vector<1x8x8xf32>, vector<1x8x8xf32>, vector<1x8x8xf32> -> vector<4x8x8xf32>
    %73 = arith.truncf %72 : vector<4x8x8xf32> to vector<4x8x8xbf16>
    "tpu.trace_start"() <{level = 10 : i32, message = "hqd,hkd->hqk"}> : () -> ()
    %cst_27 = arith.constant dense<0.000000e+00> : vector<4x8x8xf32>
    %74 = tpu.matmul %53, %63, %cst_27 {dimension_numbers = #tpu.dot_dimension_numbers<[2], [2], [1], [1], [0, 0, 0, 1, 1, 1], [0], [0]>} : vector<4x8x8xbf16>, vector<4x8x8xbf16>, vector<4x8x8xf32> -> vector<4x8x8xf32>
    "tpu.trace_stop"() : () -> ()
    %75 = vector.shape_cast %1 : vector<8x8xf32> to vector<1x8x8xf32>
    %76 = vector.broadcast %75 : vector<1x8x8xf32> to vector<4x8x8xf32>
    %77 = arith.addf %74, %76 : vector<4x8x8xf32>
    %cst_28 = arith.constant dense<0xFF800000> : vector<4x8xf32>
    %78 = vector.multi_reduction <maximumf>, %77, %cst_28 [2] : vector<4x8x8xf32> to vector<4x8xf32>
    %79 = vector.shape_cast %78 : vector<4x8xf32> to vector<4x8x1xf32>
    %80 = vector.broadcast %79 : vector<4x8x1xf32> to vector<4x8x8xf32>
    %81 = arith.subf %77, %80 : vector<4x8x8xf32>
    %82 = math.exp %81 : vector<4x8x8xf32>
    %cst_29 = arith.constant dense<0.000000e+00> : vector<4x8xf32>
    %83 = vector.multi_reduction <add>, %82, %cst_29 [2] : vector<4x8x8xf32> to vector<4x8xf32>
    %84 = vector.shape_cast %83 : vector<4x8xf32> to vector<4x8x1xf32>
    %85 = tpu.reciprocal %84 {approx = true} : vector<4x8x1xf32> -> vector<4x8x1xf32>
    %86 = vector.broadcast %85 : vector<4x8x1xf32> to vector<4x8x8xf32>
    %87 = arith.mulf %82, %86 : vector<4x8x8xf32>
    %88 = arith.truncf %87 : vector<4x8x8xf32> to vector<4x8x8xbf16>
    "tpu.trace_start"() <{level = 10 : i32, message = "hqk,hkd->hqd"}> : () -> ()
    %cst_30 = arith.constant dense<0.000000e+00> : vector<4x8x8xf32>
    %89 = tpu.matmul %88, %73, %cst_30 {dimension_numbers = #tpu.dot_dimension_numbers<[2], [1], [1], [2], [0, 0, 0, 1, 1, 2], [0], [0]>} : vector<4x8x8xbf16>, vector<4x8x8xbf16>, vector<4x8x8xf32> -> vector<4x8x8xf32>
    "tpu.trace_stop"() : () -> ()
    %90 = vector.extract_strided_slice %89 {offsets = [0, 0, 0], sizes = [1, 8, 8], strides = [1, 1, 1]} : vector<4x8x8xf32> to vector<1x8x8xf32>
    %91 = vector.shape_cast %90 : vector<1x8x8xf32> to vector<8x8xf32>
    %92 = vector.extract_strided_slice %89 {offsets = [1, 0, 0], sizes = [1, 8, 8], strides = [1, 1, 1]} : vector<4x8x8xf32> to vector<1x8x8xf32>
    %93 = vector.shape_cast %92 : vector<1x8x8xf32> to vector<8x8xf32>
    %94 = vector.extract_strided_slice %89 {offsets = [2, 0, 0], sizes = [1, 8, 8], strides = [1, 1, 1]} : vector<4x8x8xf32> to vector<1x8x8xf32>
    %95 = vector.shape_cast %94 : vector<1x8x8xf32> to vector<8x8xf32>
    %96 = vector.extract_strided_slice %89 {offsets = [3, 0, 0], sizes = [1, 8, 8], strides = [1, 1, 1]} : vector<4x8x8xf32> to vector<1x8x8xf32>
    %97 = vector.shape_cast %96 : vector<1x8x8xf32> to vector<8x8xf32>
    %98 = tpu.concatenate %91, %93, %95, %97 in 1 : vector<8x8xf32>, vector<8x8xf32>, vector<8x8xf32>, vector<8x8xf32> -> vector<8x32xf32>
    %99 = arith.truncf %98 : vector<8x32xf32> to vector<8x32xbf16>
    %c0_31 = arith.constant 0 : index
    %c0_32 = arith.constant 0 : index
    %100 = vector.load %arg11[%c0_31, %c0_32] : memref<32x32xbf16, #tpu.memory_space<vmem>>, vector<32x32xbf16>
    %cst_33 = arith.constant dense<0.000000e+00> : vector<8x32xf32>
    %101 = tpu.matmul %99, %100, %cst_33 {dimension_numbers = #tpu.dot_dimension_numbers<[1], [0], [0], [1], [0, 0, 1, 1], [], []>} : vector<8x32xbf16>, vector<32x32xbf16>, vector<8x32xf32> -> vector<8x32xf32>
    %102 = arith.addf %0, %101 : vector<8x32xf32>
    %c0_34 = arith.constant 0 : index
    %c0_35 = arith.constant 0 : index
    %103 = vector.load %arg12[%c0_34, %c0_35] : memref<1x32xf32, #tpu.memory_space<vmem>>, vector<1x32xf32>
    %104 = vector.broadcast %103 : vector<1x32xf32> to vector<8x32xf32>
    %105 = arith.addf %102, %104 : vector<8x32xf32>
    %c0_36 = arith.constant 0 : index
    %c0_37 = arith.constant 0 : index
    %106 = vector.load %arg13[%c0_36, %c0_37] : memref<1x32xf32, #tpu.memory_space<vmem>>, vector<1x32xf32>
    %c0_38 = arith.constant 0 : index
    %c0_39 = arith.constant 0 : index
    %107 = vector.load %arg14[%c0_38, %c0_39] : memref<1x32xf32, #tpu.memory_space<vmem>>, vector<1x32xf32>
    %cst_40 = arith.constant dense<0.000000e+00> : vector<8xf32>
    %108 = vector.multi_reduction <add>, %105, %cst_40 [1] : vector<8x32xf32> to vector<8xf32>
    %109 = vector.shape_cast %108 : vector<8xf32> to vector<8x1xf32>
    %cst_41 = arith.constant 3.200000e+01 : f32
    %110 = vector.broadcast %cst_41 : f32 to vector<8x1xf32>
    %111 = arith.divf %109, %110 : vector<8x1xf32>
    %112 = vector.broadcast %111 : vector<8x1xf32> to vector<8x32xf32>
    %113 = arith.subf %105, %112 : vector<8x32xf32>
    %114 = arith.mulf %113, %113 : vector<8x32xf32>
    %cst_42 = arith.constant dense<0.000000e+00> : vector<8xf32>
    %115 = vector.multi_reduction <add>, %114, %cst_42 [1] : vector<8x32xf32> to vector<8xf32>
    %116 = vector.shape_cast %115 : vector<8xf32> to vector<8x1xf32>
    %cst_43 = arith.constant 3.200000e+01 : f32
    %117 = vector.broadcast %cst_43 : f32 to vector<8x1xf32>
    %118 = arith.divf %116, %117 : vector<8x1xf32>
    %119 = vector.broadcast %111 : vector<8x1xf32> to vector<8x32xf32>
    %120 = arith.subf %105, %119 : vector<8x32xf32>
    %cst_44 = arith.constant 9.99999974E-6 : f32
    %121 = vector.broadcast %cst_44 : f32 to vector<8x1xf32>
    %122 = arith.addf %118, %121 : vector<8x1xf32>
    %123 = math.rsqrt %122 : vector<8x1xf32>
    %124 = vector.broadcast %123 : vector<8x1xf32> to vector<8x32xf32>
    %125 = arith.mulf %120, %124 : vector<8x32xf32>
    %126 = vector.broadcast %106 : vector<1x32xf32> to vector<8x32xf32>
    %127 = arith.mulf %125, %126 : vector<8x32xf32>
    %128 = vector.broadcast %107 : vector<1x32xf32> to vector<8x32xf32>
    %129 = arith.addf %127, %128 : vector<8x32xf32>
    %130 = arith.truncf %129 : vector<8x32xf32> to vector<8x32xbf16>
    %c0_45 = arith.constant 0 : index
    %c0_46 = arith.constant 0 : index
    %131 = vector.load %arg15[%c0_45, %c0_46] : memref<32x64xbf16, #tpu.memory_space<vmem>>, vector<32x64xbf16>
    %cst_47 = arith.constant dense<0.000000e+00> : vector<8x64xf32>
    %132 = tpu.matmul %130, %131, %cst_47 {dimension_numbers = #tpu.dot_dimension_numbers<[1], [0], [0], [1], [0, 0, 1, 1], [], []>} : vector<8x32xbf16>, vector<32x64xbf16>, vector<8x64xf32> -> vector<8x64xf32>
    %c0_48 = arith.constant 0 : index
    %c0_49 = arith.constant 0 : index
    %133 = vector.load %arg16[%c0_48, %c0_49] : memref<1x64xf32, #tpu.memory_space<vmem>>, vector<1x64xf32>
    %134 = vector.broadcast %133 : vector<1x64xf32> to vector<8x64xf32>
    %135 = arith.addf %132, %134 : vector<8x64xf32>
    %cst_50 = arith.constant 0.000000e+00 : f32
    %136 = vector.broadcast %cst_50 : f32 to vector<8x64xf32>
    %137 = arith.maximumf %135, %136 : vector<8x64xf32>
    %138 = arith.truncf %137 : vector<8x64xf32> to vector<8x64xbf16>
    %c0_51 = arith.constant 0 : index
    %c0_52 = arith.constant 0 : index
    %139 = vector.load %arg17[%c0_51, %c0_52] : memref<64x32xbf16, #tpu.memory_space<vmem>>, vector<64x32xbf16>
    %cst_53 = arith.constant dense<0.000000e+00> : vector<8x32xf32>
    %140 = tpu.matmul %138, %139, %cst_53 {dimension_numbers = #tpu.dot_dimension_numbers<[1], [0], [0], [1], [0, 0, 1, 1], [], []>} : vector<8x64xbf16>, vector<64x32xbf16>, vector<8x32xf32> -> vector<8x32xf32>
    %c0_54 = arith.constant 0 : index
    %c0_55 = arith.constant 0 : index
    %141 = vector.load %arg18[%c0_54, %c0_55] : memref<1x32xf32, #tpu.memory_space<vmem>>, vector<1x32xf32>
    %142 = vector.broadcast %141 : vector<1x32xf32> to vector<8x32xf32>
    %143 = arith.addf %140, %142 : vector<8x32xf32>
    %144 = arith.addf %105, %143 : vector<8x32xf32>
    %c0_56 = arith.constant 0 : index
    %c0_57 = arith.constant 0 : index
    %145 = vector.load %arg19[%c0_56, %c0_57] : memref<1x32xf32, #tpu.memory_space<vmem>>, vector<1x32xf32>
    %c0_58 = arith.constant 0 : index
    %c0_59 = arith.constant 0 : index
    %146 = vector.load %arg20[%c0_58, %c0_59] : memref<1x32xf32, #tpu.memory_space<vmem>>, vector<1x32xf32>
    %cst_60 = arith.constant dense<0.000000e+00> : vector<8xf32>
    %147 = vector.multi_reduction <add>, %144, %cst_60 [1] : vector<8x32xf32> to vector<8xf32>
    %148 = vector.shape_cast %147 : vector<8xf32> to vector<8x1xf32>
    %cst_61 = arith.constant 3.200000e+01 : f32
    %149 = vector.broadcast %cst_61 : f32 to vector<8x1xf32>
    %150 = arith.divf %148, %149 : vector<8x1xf32>
    %151 = vector.broadcast %150 : vector<8x1xf32> to vector<8x32xf32>
    %152 = arith.subf %144, %151 : vector<8x32xf32>
    %153 = arith.mulf %152, %152 : vector<8x32xf32>
    %cst_62 = arith.constant dense<0.000000e+00> : vector<8xf32>
    %154 = vector.multi_reduction <add>, %153, %cst_62 [1] : vector<8x32xf32> to vector<8xf32>
    %155 = vector.shape_cast %154 : vector<8xf32> to vector<8x1xf32>
    %cst_63 = arith.constant 3.200000e+01 : f32
    %156 = vector.broadcast %cst_63 : f32 to vector<8x1xf32>
    %157 = arith.divf %155, %156 : vector<8x1xf32>
    %158 = vector.broadcast %150 : vector<8x1xf32> to vector<8x32xf32>
    %159 = arith.subf %144, %158 : vector<8x32xf32>
    %cst_64 = arith.constant 9.99999974E-6 : f32
    %160 = vector.broadcast %cst_64 : f32 to vector<8x1xf32>
    %161 = arith.addf %157, %160 : vector<8x1xf32>
    %162 = math.rsqrt %161 : vector<8x1xf32>
    %163 = vector.broadcast %162 : vector<8x1xf32> to vector<8x32xf32>
    %164 = arith.mulf %159, %163 : vector<8x32xf32>
    %165 = vector.broadcast %145 : vector<1x32xf32> to vector<8x32xf32>
    %166 = arith.mulf %164, %165 : vector<8x32xf32>
    %167 = vector.broadcast %146 : vector<1x32xf32> to vector<8x32xf32>
    %168 = arith.addf %166, %167 : vector<8x32xf32>
    %169 = arith.truncf %168 : vector<8x32xf32> to vector<8x32xbf16>
    %c0_65 = arith.constant 0 : index
    %c0_66 = arith.constant 0 : index
    %170 = vector.load %arg21[%c0_65, %c0_66] : memref<32x16xbf16, #tpu.memory_space<vmem>>, vector<32x16xbf16>
    %cst_67 = arith.constant dense<0.000000e+00> : vector<8x16xf32>
    %171 = tpu.matmul %169, %170, %cst_67 {dimension_numbers = #tpu.dot_dimension_numbers<[1], [0], [0], [1], [0, 0, 1, 1], [], []>} : vector<8x32xbf16>, vector<32x16xbf16>, vector<8x16xf32> -> vector<8x16xf32>
    %c0_68 = arith.constant 0 : index
    %c0_69 = arith.constant 0 : index
    %172 = vector.load %arg22[%c0_68, %c0_69] : memref<1x16xf32, #tpu.memory_space<vmem>>, vector<1x16xf32>
    %173 = vector.broadcast %172 : vector<1x16xf32> to vector<8x16xf32>
    %174 = arith.addf %171, %173 : vector<8x16xf32>
    %cst_70 = arith.constant 0.000000e+00 : f32
    %175 = vector.broadcast %cst_70 : f32 to vector<8x16xf32>
    %176 = arith.maximumf %174, %175 : vector<8x16xf32>
    %177 = arith.truncf %176 : vector<8x16xf32> to vector<8x16xbf16>
    %c0_71 = arith.constant 0 : index
    %c0_72 = arith.constant 0 : index
    %178 = vector.load %arg23[%c0_71, %c0_72] : memref<16x128xbf16, #tpu.memory_space<vmem>>, vector<16x128xbf16>
    %cst_73 = arith.constant dense<0.000000e+00> : vector<8x128xf32>
    %179 = tpu.matmul %177, %178, %cst_73 {dimension_numbers = #tpu.dot_dimension_numbers<[1], [0], [0], [1], [0, 0, 1, 1], [], []>} : vector<8x16xbf16>, vector<16x128xbf16>, vector<8x128xf32> -> vector<8x128xf32>
    %c0_74 = arith.constant 0 : index
    %c0_75 = arith.constant 0 : index
    %180 = vector.load %arg24[%c0_74, %c0_75] : memref<1x128xf32, #tpu.memory_space<vmem>>, vector<1x128xf32>
    %181 = vector.broadcast %180 : vector<1x128xf32> to vector<8x128xf32>
    %182 = arith.addf %179, %181 : vector<8x128xf32>
    %cst_76 = arith.constant 0.000000e+00 : f32
    %183 = vector.broadcast %cst_76 : f32 to vector<8x128xf32>
    %184 = arith.maximumf %182, %183 : vector<8x128xf32>
    %c0_77 = arith.constant 0 : index
    %c0_78 = arith.constant 0 : index
    %185 = vector.load %arg25[%c0_77, %c0_78] : memref<8x128xf32, #tpu.memory_space<vmem>>, vector<8x128xf32>
    tpu.vector_store %arg25[%c0_77, %c0_78], %184 {strides = array<i32>} : memref<8x128xf32, #tpu.memory_space<vmem>>, vector<8x128xf32>,
    return
  }
  func.func @transform_0(%arg0: i32) -> (i32, i32) {
    %c0_i32 = arith.constant 0 : i32
    %c0_i32_0 = arith.constant 0 : i32
    return %arg0, %c0_i32 : i32, i32
  }
  func.func @transform_1(%arg0: i32) -> (i32, i32) {
    %c0_i32 = arith.constant 0 : i32
    %c0_i32_0 = arith.constant 0 : i32
    %c0_i32_1 = arith.constant 0 : i32
    return %c0_i32, %c0_i32_0 : i32, i32
  }
  func.func @transform_2(%arg0: i32) -> (i32, i32) {
    %c0_i32 = arith.constant 0 : i32
    %c0_i32_0 = arith.constant 0 : i32
    %c0_i32_1 = arith.constant 0 : i32
    return %c0_i32, %c0_i32_0 : i32, i32
  }
  func.func @transform_3(%arg0: i32) -> (i32, i32) {
    %c0_i32 = arith.constant 0 : i32
    %c0_i32_0 = arith.constant 0 : i32
    %c0_i32_1 = arith.constant 0 : i32
    return %c0_i32, %c0_i32_0 : i32, i32
  }
  func.func @transform_4(%arg0: i32) -> (i32, i32) {
    %c0_i32 = arith.constant 0 : i32
    %c0_i32_0 = arith.constant 0 : i32
    %c0_i32_1 = arith.constant 0 : i32
    return %c0_i32, %c0_i32_0 : i32, i32
  }
  func.func @transform_5(%arg0: i32) -> (i32, i32) {
    %c0_i32 = arith.constant 0 : i32
    %c0_i32_0 = arith.constant 0 : i32
    %c0_i32_1 = arith.constant 0 : i32
    return %c0_i32, %c0_i32_0 : i32, i32
  }
  func.func @transform_6(%arg0: i32) -> (i32, i32) {
    %c0_i32 = arith.constant 0 : i32
    %c0_i32_0 = arith.constant 0 : i32
    %c0_i32_1 = arith.constant 0 : i32
    return %c0_i32, %c0_i32_0 : i32, i32
  }
  func.func @transform_7(%arg0: i32) -> (i32, i32) {
    %c0_i32 = arith.constant 0 : i32
    %c0_i32_0 = arith.constant 0 : i32
    %c0_i32_1 = arith.constant 0 : i32
    return %c0_i32, %c0_i32_0 : i32, i32
  }
  func.func @transform_8(%arg0: i32) -> (i32, i32) {
    %c0_i32 = arith.constant 0 : i32
    %c0_i32_0 = arith.constant 0 : i32
    %c0_i32_1 = arith.constant 0 : i32
    return %c0_i32, %c0_i32_0 : i32, i32
  }
  func.func @transform_9(%arg0: i32) -> (i32, i32) {
    %c0_i32 = arith.constant 0 : i32
    %c0_i32_0 = arith.constant 0 : i32
    %c0_i32_1 = arith.constant 0 : i32
    return %c0_i32, %c0_i32_0 : i32, i32
  }
  func.func @transform_10(%arg0: i32) -> (i32, i32) {
    %c0_i32 = arith.constant 0 : i32
    %c0_i32_0 = arith.constant 0 : i32
    %c0_i32_1 = arith.constant 0 : i32
    return %c0_i32, %c0_i32_0 : i32, i32
  }
  func.func @transform_11(%arg0: i32) -> (i32, i32) {
    %c0_i32 = arith.constant 0 : i32
    %c0_i32_0 = arith.constant 0 : i32
    %c0_i32_1 = arith.constant 0 : i32
    return %c0_i32, %c0_i32_0 : i32, i32
  }
  func.func @transform_12(%arg0: i32) -> (i32, i32) {
    %c0_i32 = arith.constant 0 : i32
    %c0_i32_0 = arith.constant 0 : i32
    %c0_i32_1 = arith.constant 0 : i32
    return %c0_i32, %c0_i32_0 : i32, i32
  }
  func.func @transform_13(%arg0: i32) -> (i32, i32) {
    %c0_i32 = arith.constant 0 : i32
    %c0_i32_0 = arith.constant 0 : i32
    %c0_i32_1 = arith.constant 0 : i32
    return %c0_i32, %c0_i32_0 : i32, i32
  }
  func.func @transform_14(%arg0: i32) -> (i32, i32) {
    %c0_i32 = arith.constant 0 : i32
    %c0_i32_0 = arith.constant 0 : i32
    %c0_i32_1 = arith.constant 0 : i32
    return %c0_i32, %c0_i32_0 : i32, i32
  }
  func.func @transform_15(%arg0: i32) -> (i32, i32) {
    %c0_i32 = arith.constant 0 : i32
    %c0_i32_0 = arith.constant 0 : i32
    %c0_i32_1 = arith.constant 0 : i32
    return %c0_i32, %c0_i32_0 : i32, i32
  }
  func.func @transform_16(%arg0: i32) -> (i32, i32) {
    %c0_i32 = arith.constant 0 : i32
    %c0_i32_0 = arith.constant 0 : i32
    %c0_i32_1 = arith.constant 0 : i32
    return %c0_i32, %c0_i32_0 : i32, i32
  }
  func.func @transform_17(%arg0: i32) -> (i32, i32) {
    %c0_i32 = arith.constant 0 : i32
    %c0_i32_0 = arith.constant 0 : i32
    %c0_i32_1 = arith.constant 0 : i32
    return %c0_i32, %c0_i32_0 : i32, i32
  }
  func.func @transform_18(%arg0: i32) -> (i32, i32) {
    %c0_i32 = arith.constant 0 : i32
    %c0_i32_0 = arith.constant 0 : i32
    %c0_i32_1 = arith.constant 0 : i32
    return %c0_i32, %c0_i32_0 : i32, i32
  }
  func.func @transform_19(%arg0: i32) -> (i32, i32) {
    %c0_i32 = arith.constant 0 : i32
    %c0_i32_0 = arith.constant 0 : i32
    %c0_i32_1 = arith.constant 0 : i32
    return %c0_i32, %c0_i32_0 : i32, i32
  }
  func.func @transform_20(%arg0: i32) -> (i32, i32) {
    %c0_i32 = arith.constant 0 : i32
    %c0_i32_0 = arith.constant 0 : i32
    %c0_i32_1 = arith.constant 0 : i32
    return %c0_i32, %c0_i32_0 : i32, i32
  }
  func.func @transform_21(%arg0: i32) -> (i32, i32) {
    %c0_i32 = arith.constant 0 : i32
    %c0_i32_0 = arith.constant 0 : i32
    %c0_i32_1 = arith.constant 0 : i32
    return %c0_i32, %c0_i32_0 : i32, i32
  }
  func.func @transform_22(%arg0: i32) -> (i32, i32) {
    %c0_i32 = arith.constant 0 : i32
    %c0_i32_0 = arith.constant 0 : i32
    %c0_i32_1 = arith.constant 0 : i32
    return %c0_i32, %c0_i32_0 : i32, i32
  }
  func.func @transform_23(%arg0: i32) -> (i32, i32) {
    %c0_i32 = arith.constant 0 : i32
    %c0_i32_0 = arith.constant 0 : i32
    %c0_i32_1 = arith.constant 0 : i32
    return %c0_i32, %c0_i32_0 : i32, i32
  }
  func.func @transform_24(%arg0: i32) -> (i32, i32) {
    %c0_i32 = arith.constant 0 : i32
    %c0_i32_0 = arith.constant 0 : i32
    return %arg0, %c0_i32 : i32, i32
  }
}

</mosaic_0001>

<llo_original>
// kernel: transformer_forward.2
$region0: #{transformer_forward.2}
  #allocation0 [shape = 'u32[]', space=smem, size = 0x4, offset = 0x4, fixed_abs, tag = 'smem constant byte address 0x4 - core index']
  #allocation1 [shape = 'u32[72,128]{1,0:T(1,128)}', space=vmem, size = 0x9000, scoped, tag = 'internal scratch']
  %s0 = inlined_call_operand.vmem [shape: f32[16,32], index: 0, kind: input, shape index: {}, may-alias: {0,18}]
  %s1 = inlined_call_operand.vmem [shape: f32[8,8], index: 1, kind: input, shape index: {}]
  %s2 = inlined_call_operand.vmem [shape: f32[1,32], index: 2, kind: input, shape index: {}]
  %s3 = inlined_call_operand.vmem [shape: f32[1,32], index: 3, kind: input, shape index: {}]
  %s4 = inlined_call_operand.vmem [shape: bf16[32,32], index: 4, kind: input, shape index: {}]
  %s5 = inlined_call_operand.vmem [shape: f32[1,32], index: 5, kind: input, shape index: {}]
  %s6 = inlined_call_operand.vmem [shape: bf16[32,32], index: 6, kind: input, shape index: {}]
  %s7 = inlined_call_operand.vmem [shape: f32[1,32], index: 7, kind: input, shape index: {}]
  %s8 = inlined_call_operand.vmem [shape: bf16[32,32], index: 8, kind: input, shape index: {}]
  %s9 = inlined_call_operand.vmem [shape: f32[1,32], index: 9, kind: input, shape index: {}]
  %s10 = inlined_call_operand.vmem [shape: bf16[32,32], index: 10, kind: input, shape index: {}]
  %s11 = inlined_call_operand.vmem [shape: f32[1,32], index: 11, kind: input, shape index: {}]
  %s12 = inlined_call_operand.vmem [shape: f32[1,32], index: 12, kind: input, shape index: {}]
  %s13 = inlined_call_operand.vmem [shape: f32[1,32], index: 13, kind: input, shape index: {}]
  %s14 = inlined_call_operand.vmem [shape: bf16[32,64], index: 14, kind: input, shape index: {}]
  %s15 = inlined_call_operand.vmem [shape: f32[1,64], index: 15, kind: input, shape index: {}]
  %s16 = inlined_call_operand.vmem [shape: bf16[64,32], index: 16, kind: input, shape index: {}]
  %s17 = inlined_call_operand.vmem [shape: f32[1,32], index: 17, kind: input, shape index: {}]
  %s18 = inlined_call_operand.vmem [shape: f32[16,32], index: 18, kind: output, shape index: {}, may-alias: {0,18}]
  %s19 = sld [smem:[#allocation0]]
  $region105: #{transformer_forward.2} parent=0
    _
  %s21 = ssub.s32 1, %s19
  %s22 = scalar_select 0, %s21, %s19
  loop: start=0, step=1, limit=4
  $region2: #{transformer_forward.2} parent=0 // loop_pre_header
    _
  $region3: #{transformer_forward.2} parent=0 // loop_header
    %s24 = sphi 0, %s28
    %p25 = scmp.ge.s32.totalorder %s24, 4
    %s34 = sphi 0, %s36
    %s37 = sphi 0, %s34
    %s38 = sphi 0, %s37
    %s54 = sphi 0, %s38
    %s58 = sphi 0, %s58
    %s60 = sphi 0, %s58
    %s61 = sphi 0, %s60
    %s75 = sphi 0, %s61
    %s79 = sphi 0, %s79
    %s81 = sphi 0, %s79
    %s82 = sphi 0, %s81
    %s96 = sphi 0, %s82
    %s100 = sphi 0, %s100
    %s102 = sphi 0, %s100
    %s103 = sphi 0, %s102
    %s117 = sphi 0, %s103
    %s121 = sphi 0, %s121
    %s123 = sphi 0, %s121
    %s124 = sphi 0, %s123
    %s138 = sphi 0, %s124
    %s142 = sphi 0, %s142
    %s144 = sphi 0, %s142
    %s145 = sphi 0, %s144
    %s159 = sphi 0, %s145
    %s163 = sphi 0, %s163
    %s165 = sphi 0, %s163
    %s166 = sphi 0, %s165
    %s180 = sphi 0, %s166
    %s184 = sphi 0, %s184
    %s186 = sphi 0, %s184
    %s187 = sphi 0, %s186
    %s201 = sphi 0, %s187
    %s205 = sphi 0, %s205
    %s207 = sphi 0, %s205
    %s208 = sphi 0, %s207
    %s222 = sphi 0, %s208
    %s226 = sphi 0, %s226
    %s228 = sphi 0, %s226
    %s229 = sphi 0, %s228
    %s243 = sphi 0, %s229
    %s247 = sphi 0, %s247
    %s249 = sphi 0, %s247
    %s250 = sphi 0, %s249
    %s264 = sphi 0, %s250
    %s268 = sphi 0, %s268
    %s270 = sphi 0, %s268
    %s271 = sphi 0, %s270
    %s285 = sphi 0, %s271
    %s289 = sphi 0, %s289
    %s291 = sphi 0, %s289
    %s292 = sphi 0, %s291
    %s306 = sphi 0, %s292
    %s310 = sphi 0, %s310
    %s312 = sphi 0, %s310
    %s313 = sphi 0, %s312
    %s327 = sphi 0, %s313
    %s331 = sphi 0, %s331
    %s333 = sphi 0, %s331
    %s334 = sphi 0, %s333
    %s348 = sphi 0, %s334
    %s352 = sphi 0, %s352
    %s354 = sphi 0, %s352
    %s355 = sphi 0, %s354
    %s369 = sphi 0, %s355
    %s373 = sphi 0, %s373
    %s375 = sphi 0, %s373
    %s376 = sphi 0, %s375
    %s390 = sphi 0, %s376
    %s394 = sphi 0, %s394
    %s396 = sphi 0, %s394
    %s397 = sphi 0, %s396
    %s411 = sphi 0, %s397
    %s417 = sphi 0, %s419
    %s420 = sphi 0, %s417
    %s421 = sphi 0, %s420
    %s437 = sphi 0, %s421
  $region4: #{transformer_forward.2} parent=0 // loop_header_branch
    %27 = sbr.rel (%p25) target = $region8
  $region5: #{transformer_forward.2} parent=0 // loop_body
    %s29 = ssub.s32 %s24, 1
    %s30 = ssub.s32 %s24, 2
    %s31 = sadd.s32 %s24, 1
    %s32 = ssub.s32 %s24, %s31
    %p33 = scmp.eq.s32.totalorder %s32, 0
    %s35 = sadd.s32 %s34, 1
    %s36 = scalar_select %p33, %s34, %s35
    %p39 = pneg %p33
    %p40 = scmp.eq.s32.totalorder %s24, 1
    %p41 = por %p39, %p40
    %p42 = scmp.ne.s32.totalorder %s34, %s37
    %p43 = scmp.eq.s32.totalorder %s24, 0
    %p44 = por %p42, %p43
    %p45 = scmp.ne.s32.totalorder %s34, %s37
    %p46 = scmp.eq.s32.totalorder %s29, 1
    %p47 = por %p45, %p46
    %p48 = scmp.ne.s32.totalorder %s37, %s38
    %p49 = scmp.eq.s32.totalorder %s29, 0
    %p50 = por %p48, %p49
    %p51 = scmp.ne.s32.totalorder %s37, %s38
    %p52 = scmp.eq.s32.totalorder %s30, 1
    %p53 = por %p51, %p52
    %p55 = scmp.ne.s32.totalorder %s38, %s54
    %p56 = scmp.eq.s32.totalorder %s30, 0
    %p57 = por %p55, %p56
    %s59 = sadd.s32 %s58, 1
    %p62 = scmp.eq.s32.totalorder %s24, 1
    %p63 = scmp.ne.s32.totalorder %s58, %s60
    %p64 = scmp.eq.s32.totalorder %s24, 0
    %p65 = por %p63, %p64
    %p66 = scmp.ne.s32.totalorder %s58, %s60
    %p67 = scmp.eq.s32.totalorder %s29, 1
    %p68 = por %p66, %p67
    %p69 = scmp.ne.s32.totalorder %s60, %s61
    %p70 = scmp.eq.s32.totalorder %s29, 0
    %p71 = por %p69, %p70
    %p72 = scmp.ne.s32.totalorder %s60, %s61
    %p73 = scmp.eq.s32.totalorder %s30, 1
    %p74 = por %p72, %p73
    %p76 = scmp.ne.s32.totalorder %s61, %s75
    %p77 = scmp.eq.s32.totalorder %s30, 0
    %p78 = por %p76, %p77
    %s80 = sadd.s32 %s79, 1
    %p83 = scmp.eq.s32.totalorder %s24, 1
    %p84 = scmp.ne.s32.totalorder %s79, %s81
    %p85 = scmp.eq.s32.totalorder %s24, 0
    %p86 = por %p84, %p85
    %p87 = scmp.ne.s32.totalorder %s79, %s81
    %p88 = scmp.eq.s32.totalorder %s29, 1
    %p89 = por %p87, %p88
    %p90 = scmp.ne.s32.totalorder %s81, %s82
    %p91 = scmp.eq.s32.totalorder %s29, 0
    %p92 = por %p90, %p91
    %p93 = scmp.ne.s32.totalorder %s81, %s82
    %p94 = scmp.eq.s32.totalorder %s30, 1
    %p95 = por %p93, %p94
    %p97 = scmp.ne.s32.totalorder %s82, %s96
    %p98 = scmp.eq.s32.totalorder %s30, 0
    %p99 = por %p97, %p98
    %s101 = sadd.s32 %s100, 1
    %p104 = scmp.eq.s32.totalorder %s24, 1
    %p105 = scmp.ne.s32.totalorder %s100, %s102
    %p106 = scmp.eq.s32.totalorder %s24, 0
    %p107 = por %p105, %p106
    %p108 = scmp.ne.s32.totalorder %s100, %s102
    %p109 = scmp.eq.s32.totalorder %s29, 1
    %p110 = por %p108, %p109
    %p111 = scmp.ne.s32.totalorder %s102, %s103
    %p112 = scmp.eq.s32.totalorder %s29, 0
    %p113 = por %p111, %p112
    %p114 = scmp.ne.s32.totalorder %s102, %s103
    %p115 = scmp.eq.s32.totalorder %s30, 1
    %p116 = por %p114, %p115
    %p118 = scmp.ne.s32.totalorder %s103, %s117
    %p119 = scmp.eq.s32.totalorder %s30, 0
    %p120 = por %p118, %p119
    %s122 = sadd.s32 %s121, 1
    %p125 = scmp.eq.s32.totalorder %s24, 1
    %p126 = scmp.ne.s32.totalorder %s121, %s123
    %p127 = scmp.eq.s32.totalorder %s24, 0
    %p128 = por %p126, %p127
    %p129 = scmp.ne.s32.totalorder %s121, %s123
    %p130 = scmp.eq.s32.totalorder %s29, 1
    %p131 = por %p129, %p130
    %p132 = scmp.ne.s32.totalorder %s123, %s124
    %p133 = scmp.eq.s32.totalorder %s29, 0
    %p134 = por %p132, %p133
    %p135 = scmp.ne.s32.totalorder %s123, %s124
    %p136 = scmp.eq.s32.totalorder %s30, 1
    %p137 = por %p135, %p136
    %p139 = scmp.ne.s32.totalorder %s124, %s138
    %p140 = scmp.eq.s32.totalorder %s30, 0
    %p141 = por %p139, %p140
    %s143 = sadd.s32 %s142, 1
    %p146 = scmp.eq.s32.totalorder %s24, 1
    %p147 = scmp.ne.s32.totalorder %s142, %s144
    %p148 = scmp.eq.s32.totalorder %s24, 0
    %p149 = por %p147, %p148
    %p150 = scmp.ne.s32.totalorder %s142, %s144
    %p151 = scmp.eq.s32.totalorder %s29, 1
    %p152 = por %p150, %p151
    %p153 = scmp.ne.s32.totalorder %s144, %s145
    %p154 = scmp.eq.s32.totalorder %s29, 0
    %p155 = por %p153, %p154
    %p156 = scmp.ne.s32.totalorder %s144, %s145
    %p157 = scmp.eq.s32.totalorder %s30, 1
    %p158 = por %p156, %p157
    %p160 = scmp.ne.s32.totalorder %s145, %s159
    %p161 = scmp.eq.s32.totalorder %s30, 0
    %p162 = por %p160, %p161
    %s164 = sadd.s32 %s163, 1
    %p167 = scmp.eq.s32.totalorder %s24, 1
    %p168 = scmp.ne.s32.totalorder %s163, %s165
    %p169 = scmp.eq.s32.totalorder %s24, 0
    %p170 = por %p168, %p169
    %p171 = scmp.ne.s32.totalorder %s163, %s165
    %p172 = scmp.eq.s32.totalorder %s29, 1
    %p173 = por %p171, %p172
    %p174 = scmp.ne.s32.totalorder %s165, %s166
    %p175 = scmp.eq.s32.totalorder %s29, 0
    %p176 = por %p174, %p175
    %p177 = scmp.ne.s32.totalorder %s165, %s166
    %p178 = scmp.eq.s32.totalorder %s30, 1
    %p179 = por %p177, %p178
    %p181 = scmp.ne.s32.totalorder %s166, %s180
    %p182 = scmp.eq.s32.totalorder %s30, 0
    %p183 = por %p181, %p182
    %s185 = sadd.s32 %s184, 1
    %p188 = scmp.eq.s32.totalorder %s24, 1
    %p189 = scmp.ne.s32.totalorder %s184, %s186
    %p190 = scmp.eq.s32.totalorder %s24, 0
    %p191 = por %p189, %p190
    %p192 = scmp.ne.s32.totalorder %s184, %s186
    %p193 = scmp.eq.s32.totalorder %s29, 1
    %p194 = por %p192, %p193
    %p195 = scmp.ne.s32.totalorder %s186, %s187
    %p196 = scmp.eq.s32.totalorder %s29, 0
    %p197 = por %p195, %p196
    %p198 = scmp.ne.s32.totalorder %s186, %s187
    %p199 = scmp.eq.s32.totalorder %s30, 1
    %p200 = por %p198, %p199
    %p202 = scmp.ne.s32.totalorder %s187, %s201
    %p203 = scmp.eq.s32.totalorder %s30, 0
    %p204 = por %p202, %p203
    %s206 = sadd.s32 %s205, 1
    %p209 = scmp.eq.s32.totalorder %s24, 1
    %p210 = scmp.ne.s32.totalorder %s205, %s207
    %p211 = scmp.eq.s32.totalorder %s24, 0
    %p212 = por %p210, %p211
    %p213 = scmp.ne.s32.totalorder %s205, %s207
    %p214 = scmp.eq.s32.totalorder %s29, 1
    %p215 = por %p213, %p214
    %p216 = scmp.ne.s32.totalorder %s207, %s208
    %p217 = scmp.eq.s32.totalorder %s29, 0
    %p218 = por %p216, %p217
    %p219 = scmp.ne.s32.totalorder %s207, %s208
    %p220 = scmp.eq.s32.totalorder %s30, 1
    %p221 = por %p219, %p220
    %p223 = scmp.ne.s32.totalorder %s208, %s222
    %p224 = scmp.eq.s32.totalorder %s30, 0
    %p225 = por %p223, %p224
    %s227 = sadd.s32 %s226, 1
    %p230 = scmp.eq.s32.totalorder %s24, 1
    %p231 = scmp.ne.s32.totalorder %s226, %s228
    %p232 = scmp.eq.s32.totalorder %s24, 0
    %p233 = por %p231, %p232
    %p234 = scmp.ne.s32.totalorder %s226, %s228
    %p235 = scmp.eq.s32.totalorder %s29, 1
    %p236 = por %p234, %p235
    %p237 = scmp.ne.s32.totalorder %s228, %s229
    %p238 = scmp.eq.s32.totalorder %s29, 0
    %p239 = por %p237, %p238
    %p240 = scmp.ne.s32.totalorder %s228, %s229
    %p241 = scmp.eq.s32.totalorder %s30, 1
    %p242 = por %p240, %p241
    %p244 = scmp.ne.s32.totalorder %s229, %s243
    %p245 = scmp.eq.s32.totalorder %s30, 0
    %p246 = por %p244, %p245
    %s248 = sadd.s32 %s247, 1
    %p251 = scmp.eq.s32.totalorder %s24, 1
    %p252 = scmp.ne.s32.totalorder %s247, %s249
    %p253 = scmp.eq.s32.totalorder %s24, 0
    %p254 = por %p252, %p253
    %p255 = scmp.ne.s32.totalorder %s247, %s249
    %p256 = scmp.eq.s32.totalorder %s29, 1
    %p257 = por %p255, %p256
    %p258 = scmp.ne.s32.totalorder %s249, %s250
    %p259 = scmp.eq.s32.totalorder %s29, 0
    %p260 = por %p258, %p259
    %p261 = scmp.ne.s32.totalorder %s249, %s250
    %p262 = scmp.eq.s32.totalorder %s30, 1
    %p263 = por %p261, %p262
    %p265 = scmp.ne.s32.totalorder %s250, %s264
    %p266 = scmp.eq.s32.totalorder %s30, 0
    %p267 = por %p265, %p266
    %s269 = sadd.s32 %s268, 1
    %p272 = scmp.eq.s32.totalorder %s24, 1
    %p273 = scmp.ne.s32.totalorder %s268, %s270
    %p274 = scmp.eq.s32.totalorder %s24, 0
    %p275 = por %p273, %p274
    %p276 = scmp.ne.s32.totalorder %s268, %s270
    %p277 = scmp.eq.s32.totalorder %s29, 1
    %p278 = por %p276, %p277
    %p279 = scmp.ne.s32.totalorder %s270, %s271
    %p280 = scmp.eq.s32.totalorder %s29, 0
    %p281 = por %p279, %p280
    %p282 = scmp.ne.s32.totalorder %s270, %s271
    %p283 = scmp.eq.s32.totalorder %s30, 1
    %p284 = por %p282, %p283
    %p286 = scmp.ne.s32.totalorder %s271, %s285
    %p287 = scmp.eq.s32.totalorder %s30, 0
    %p288 = por %p286, %p287
    %s290 = sadd.s32 %s289, 1
    %p293 = scmp.eq.s32.totalorder %s24, 1
    %p294 = scmp.ne.s32.totalorder %s289, %s291
    %p295 = scmp.eq.s32.totalorder %s24, 0
    %p296 = por %p294, %p295
    %p297 = scmp.ne.s32.totalorder %s289, %s291
    %p298 = scmp.eq.s32.totalorder %s29, 1
    %p299 = por %p297, %p298
    %p300 = scmp.ne.s32.totalorder %s291, %s292
    %p301 = scmp.eq.s32.totalorder %s29, 0
    %p302 = por %p300, %p301
    %p303 = scmp.ne.s32.totalorder %s291, %s292
    %p304 = scmp.eq.s32.totalorder %s30, 1
    %p305 = por %p303, %p304
    %p307 = scmp.ne.s32.totalorder %s292, %s306
    %p308 = scmp.eq.s32.totalorder %s30, 0
    %p309 = por %p307, %p308
    %s311 = sadd.s32 %s310, 1
    %p314 = scmp.eq.s32.totalorder %s24, 1
    %p315 = scmp.ne.s32.totalorder %s310, %s312
    %p316 = scmp.eq.s32.totalorder %s24, 0
    %p317 = por %p315, %p316
    %p318 = scmp.ne.s32.totalorder %s310, %s312
    %p319 = scmp.eq.s32.totalorder %s29, 1
    %p320 = por %p318, %p319
    %p321 = scmp.ne.s32.totalorder %s312, %s313
    %p322 = scmp.eq.s32.totalorder %s29, 0
    %p323 = por %p321, %p322
    %p324 = scmp.ne.s32.totalorder %s312, %s313
    %p325 = scmp.eq.s32.totalorder %s30, 1
    %p326 = por %p324, %p325
    %p328 = scmp.ne.s32.totalorder %s313, %s327
    %p329 = scmp.eq.s32.totalorder %s30, 0
    %p330 = por %p328, %p329
    %s332 = sadd.s32 %s331, 1
    %p335 = scmp.eq.s32.totalorder %s24, 1
    %p336 = scmp.ne.s32.totalorder %s331, %s333
    %p337 = scmp.eq.s32.totalorder %s24, 0
    %p338 = por %p336, %p337
    %p339 = scmp.ne.s32.totalorder %s331, %s333
    %p340 = scmp.eq.s32.totalorder %s29, 1
    %p341 = por %p339, %p340
    %p342 = scmp.ne.s32.totalorder %s333, %s334
    %p343 = scmp.eq.s32.totalorder %s29, 0
    %p344 = por %p342, %p343
    %p345 = scmp.ne.s32.totalorder %s333, %s334
    %p346 = scmp.eq.s32.totalorder %s30, 1
    %p347 = por %p345, %p346
    %p349 = scmp.ne.s32.totalorder %s334, %s348
    %p350 = scmp.eq.s32.totalorder %s30, 0
    %p351 = por %p349, %p350
    %s353 = sadd.s32 %s352, 1
    %p356 = scmp.eq.s32.totalorder %s24, 1
    %p357 = scmp.ne.s32.totalorder %s352, %s354
    %p358 = scmp.eq.s32.totalorder %s24, 0
    %p359 = por %p357, %p358
    %p360 = scmp.ne.s32.totalorder %s352, %s354
    %p361 = scmp.eq.s32.totalorder %s29, 1
    %p362 = por %p360, %p361
    %p363 = scmp.ne.s32.totalorder %s354, %s355
    %p364 = scmp.eq.s32.totalorder %s29, 0
    %p365 = por %p363, %p364
    %p366 = scmp.ne.s32.totalorder %s354, %s355
    %p367 = scmp.eq.s32.totalorder %s30, 1
    %p368 = por %p366, %p367
    %p370 = scmp.ne.s32.totalorder %s355, %s369
    %p371 = scmp.eq.s32.totalorder %s30, 0
    %p372 = por %p370, %p371
    %s374 = sadd.s32 %s373, 1
    %p377 = scmp.eq.s32.totalorder %s24, 1
    %p378 = scmp.ne.s32.totalorder %s373, %s375
    %p379 = scmp.eq.s32.totalorder %s24, 0
    %p380 = por %p378, %p379
    %p381 = scmp.ne.s32.totalorder %s373, %s375
    %p382 = scmp.eq.s32.totalorder %s29, 1
    %p383 = por %p381, %p382
    %p384 = scmp.ne.s32.totalorder %s375, %s376
    %p385 = scmp.eq.s32.totalorder %s29, 0
    %p386 = por %p384, %p385
    %p387 = scmp.ne.s32.totalorder %s375, %s376
    %p388 = scmp.eq.s32.totalorder %s30, 1
    %p389 = por %p387, %p388
    %p391 = scmp.ne.s32.totalorder %s376, %s390
    %p392 = scmp.eq.s32.totalorder %s30, 0
    %p393 = por %p391, %p392
    %s395 = sadd.s32 %s394, 1
    %p398 = scmp.eq.s32.totalorder %s24, 1
    %p399 = scmp.ne.s32.totalorder %s394, %s396
    %p400 = scmp.eq.s32.totalorder %s24, 0
    %p401 = por %p399, %p400
    %p402 = scmp.ne.s32.totalorder %s394, %s396
    %p403 = scmp.eq.s32.totalorder %s29, 1
    %p404 = por %p402, %p403
    %p405 = scmp.ne.s32.totalorder %s396, %s397
    %p406 = scmp.eq.s32.totalorder %s29, 0
    %p407 = por %p405, %p406
    %p408 = scmp.ne.s32.totalorder %s396, %s397
    %p409 = scmp.eq.s32.totalorder %s30, 1
    %p410 = por %p408, %p409
    %p412 = scmp.ne.s32.totalorder %s397, %s411
    %p413 = scmp.eq.s32.totalorder %s30, 0
    %p414 = por %p412, %p413
    %s415 = ssub.s32 %s24, %s31
    %p416 = scmp.eq.s32.totalorder %s415, 0
    %s418 = sadd.s32 %s417, 1
    %s419 = scalar_select %p416, %s417, %s418
    %p422 = pneg %p416
    %p423 = scmp.eq.s32.totalorder %s24, 1
    %p424 = por %p422, %p423
    %p425 = scmp.ne.s32.totalorder %s417, %s420
    %p426 = scmp.eq.s32.totalorder %s24, 0
    %p427 = por %p425, %p426
    %p428 = scmp.ne.s32.totalorder %s417, %s420
    %p429 = scmp.eq.s32.totalorder %s29, 1
    %p430 = por %p428, %p429
    %p431 = scmp.ne.s32.totalorder %s420, %s421
    %p432 = scmp.eq.s32.totalorder %s29, 0
    %p433 = por %p431, %p432
    %p434 = scmp.ne.s32.totalorder %s420, %s421
    %p435 = scmp.eq.s32.totalorder %s30, 1
    %p436 = por %p434, %p435
    %p438 = scmp.ne.s32.totalorder %s421, %s437
    %p439 = scmp.eq.s32.totalorder %s30, 0
    %p440 = por %p438, %p439
    %p441 = scmp.le.s32.totalorder 1, %s24
    %p442 = scmp.lt.s32.totalorder %s24, 3
    %p443 = pnand %p441, %p442
    %p444 = pneg %p443
    // Predicated region
    $region9: #{transformer_forward.2} parent=5 // pred_check
      _
    $region10: #{transformer_forward.2} parent=5 // pred_check_branch
      %446 = sbr.rel (%p443) target = $region12
    $region11: #{transformer_forward.2} parent=5 // pred_region
      %s447 = ssub.s32 %s24, 1
      // Predicated region
      $region13: #{transformer_forward.2} parent=11 // pred_check
        %p448 = pneg %p71
      $region14: #{transformer_forward.2} parent=11 // pred_check_branch
        %450 = sbr.rel (%p448) target = $region16
      $region15: #{transformer_forward.2} parent=11 // pred_region
        _
      $region16: #{transformer_forward.2} parent=11 // pred_fallthru
        _
      // Predicated region
      $region17: #{transformer_forward.2} parent=11 // pred_check
        %p451 = pneg %p92
      $region18: #{transformer_forward.2} parent=11 // pred_check_branch
        %453 = sbr.rel (%p451) target = $region20
      $region19: #{transformer_forward.2} parent=11 // pred_region
        _
      $region20: #{transformer_forward.2} parent=11 // pred_fallthru
        _
      // Predicated region
      $region21: #{transformer_forward.2} parent=11 // pred_check
        %p454 = pneg %p113
      $region22: #{transformer_forward.2} parent=11 // pred_check_branch
        %456 = sbr.rel (%p454) target = $region24
      $region23: #{transformer_forward.2} parent=11 // pred_region
        _
      $region24: #{transformer_forward.2} parent=11 // pred_fallthru
        _
      // Predicated region
      $region25: #{transformer_forward.2} parent=11 // pred_check
        %p457 = pneg %p134
      $region26: #{transformer_forward.2} parent=11 // pred_check_branch
        %459 = sbr.rel (%p457) target = $region28
      $region27: #{transformer_forward.2} parent=11 // pred_region
        _
      $region28: #{transformer_forward.2} parent=11 // pred_fallthru
        _
      // Predicated region
      $region29: #{transformer_forward.2} parent=11 // pred_check
        %p460 = pneg %p155
      $region30: #{transformer_forward.2} parent=11 // pred_check_branch
        %462 = sbr.rel (%p460) target = $region32
      $region31: #{transformer_forward.2} parent=11 // pred_region
        _
      $region32: #{transformer_forward.2} parent=11 // pred_fallthru
        _
      // Predicated region
      $region33: #{transformer_forward.2} parent=11 // pred_check
        %p463 = pneg %p176
      $region34: #{transformer_forward.2} parent=11 // pred_check_branch
        %465 = sbr.rel (%p463) target = $region36
      $region35: #{transformer_forward.2} parent=11 // pred_region
        _
      $region36: #{transformer_forward.2} parent=11 // pred_fallthru
        _
      // Predicated region
      $region37: #{transformer_forward.2} parent=11 // pred_check
        %p466 = pneg %p197
      $region38: #{transformer_forward.2} parent=11 // pred_check_branch
        %468 = sbr.rel (%p466) target = $region40
      $region39: #{transformer_forward.2} parent=11 // pred_region
        _
      $region40: #{transformer_forward.2} parent=11 // pred_fallthru
        _
      // Predicated region
      $region41: #{transformer_forward.2} parent=11 // pred_check
        %p469 = pneg %p218
      $region42: #{transformer_forward.2} parent=11 // pred_check_branch
        %471 = sbr.rel (%p469) target = $region44
      $region43: #{transformer_forward.2} parent=11 // pred_region
        _
      $region44: #{transformer_forward.2} parent=11 // pred_fallthru
        _
      // Predicated region
      $region45: #{transformer_forward.2} parent=11 // pred_check
        %p472 = pneg %p239
      $region46: #{transformer_forward.2} parent=11 // pred_check_branch
        %474 = sbr.rel (%p472) target = $region48
      $region47: #{transformer_forward.2} parent=11 // pred_region
        _
      $region48: #{transformer_forward.2} parent=11 // pred_fallthru
        _
      // Predicated region
      $region49: #{transformer_forward.2} parent=11 // pred_check
        %p475 = pneg %p260
      $region50: #{transformer_forward.2} parent=11 // pred_check_branch
        %477 = sbr.rel (%p475) target = $region52
      $region51: #{transformer_forward.2} parent=11 // pred_region
        _
      $region52: #{transformer_forward.2} parent=11 // pred_fallthru
        _
      // Predicated region
      $region53: #{transformer_forward.2} parent=11 // pred_check
        %p478 = pneg %p281
      $region54: #{transformer_forward.2} parent=11 // pred_check_branch
        %480 = sbr.rel (%p478) target = $region56
      $region55: #{transformer_forward.2} parent=11 // pred_region
        _
      $region56: #{transformer_forward.2} parent=11 // pred_fallthru
        _
      // Predicated region
      $region57: #{transformer_forward.2} parent=11 // pred_check
        %p481 = pneg %p302
      $region58: #{transformer_forward.2} parent=11 // pred_check_branch
        %483 = sbr.rel (%p481) target = $region60
      $region59: #{transformer_forward.2} parent=11 // pred_region
        _
      $region60: #{transformer_forward.2} parent=11 // pred_fallthru
        _
      // Predicated region
      $region61: #{transformer_forward.2} parent=11 // pred_check
        %p484 = pneg %p323
      $region62: #{transformer_forward.2} parent=11 // pred_check_branch
        %486 = sbr.rel (%p484) target = $region64
      $region63: #{transformer_forward.2} parent=11 // pred_region
        _
      $region64: #{transformer_forward.2} parent=11 // pred_fallthru
        _
      // Predicated region
      $region65: #{transformer_forward.2} parent=11 // pred_check
        %p487 = pneg %p344
      $region66: #{transformer_forward.2} parent=11 // pred_check_branch
        %489 = sbr.rel (%p487) target = $region68
      $region67: #{transformer_forward.2} parent=11 // pred_region
        _
      $region68: #{transformer_forward.2} parent=11 // pred_fallthru
        _
      // Predicated region
      $region69: #{transformer_forward.2} parent=11 // pred_check
        %p490 = pneg %p365
      $region70: #{transformer_forward.2} parent=11 // pred_check_branch
        %492 = sbr.rel (%p490) target = $region72
      $region71: #{transformer_forward.2} parent=11 // pred_region
        _
      $region72: #{transformer_forward.2} parent=11 // pred_fallthru
        _
      // Predicated region
      $region73: #{transformer_forward.2} parent=11 // pred_check
        %p493 = pneg %p386
      $region74: #{transformer_forward.2} parent=11 // pred_check_branch
        %495 = sbr.rel (%p493) target = $region76
      $region75: #{transformer_forward.2} parent=11 // pred_region
        _
      $region76: #{transformer_forward.2} parent=11 // pred_fallthru
        _
      // Predicated region
      $region77: #{transformer_forward.2} parent=11 // pred_check
        %p496 = pneg %p407
      $region78: #{transformer_forward.2} parent=11 // pred_check_branch
        %498 = sbr.rel (%p496) target = $region80
      $region79: #{transformer_forward.2} parent=11 // pred_region
        _
      $region80: #{transformer_forward.2} parent=11 // pred_fallthru
        _
    $region12: #{transformer_forward.2} parent=5 // pred_fallthru
      _
    %p499 = scmp.lt.s32.totalorder %s24, 2
    // Predicated region
    $region81: #{transformer_forward.2} parent=5 // pred_check
      %p500 = pneg %p499
    $region82: #{transformer_forward.2} parent=5 // pred_check_branch
      %502 = sbr.rel (%p500) target = $region84
    $region83: #{transformer_forward.2} parent=5 // pred_region
      // Predicated region
      $region85: #{transformer_forward.2} parent=83 // pred_check
        %p503 = pneg %p44
      $region86: #{transformer_forward.2} parent=83 // pred_check_branch
        %505 = sbr.rel (%p503) target = $region88
      $region87: #{transformer_forward.2} parent=83 // pred_region
        %p506 = scmp.lt.s32.totalorder %s24, 1
        %s507 = scalar_select %p506, %s24, 1
        %s508 = smul.addr %s507, 8
        %s509 = scalar_lea.vmem %s0, %s508
      $region88: #{transformer_forward.2} parent=83 // pred_fallthru
        _
    $region84: #{transformer_forward.2} parent=5 // pred_fallthru
      _
    %p510 = scmp.le.s32.totalorder 1, %s24
    %p511 = scmp.lt.s32.totalorder %s24, 3
    %p512 = pnand %p510, %p511
    %p513 = pneg %p512
    // Predicated region
    $region89: #{transformer_forward.2} parent=5 // pred_check
      _
    $region90: #{transformer_forward.2} parent=5 // pred_check_branch
      %515 = sbr.rel (%p512) target = $region92
    $region91: #{transformer_forward.2} parent=5 // pred_region
      %s516 = ssub.s32 %s24, 1
      %p517 = scmp.lt.s32.totalorder %s29, 1
      %s518 = scalar_select %p517, %s29, 1
      %s519 = smul.addr %s518, 8
      %s520 = scalar_lea.vmem %s0, %s519
      %p521 = pneg %p50
      %p522 = pneg %p47
      %p523 = pneg %p71
      %p524 = pneg %p68
      %p525 = pneg %p92
      %p526 = pneg %p89
      %p527 = pneg %p113
      %p528 = pneg %p110
      %p529 = pneg %p134
      %p530 = pneg %p131
      %p531 = pneg %p155
      %p532 = pneg %p152
      %p533 = pneg %p176
      %p534 = pneg %p173
      %p535 = pneg %p197
      %p536 = pneg %p194
      %p537 = pneg %p218
      %p538 = pneg %p215
      %p539 = pneg %p239
      %p540 = pneg %p236
      %p541 = pneg %p260
      %p542 = pneg %p257
      %p543 = pneg %p281
      %p544 = pneg %p278
      %p545 = pneg %p302
      %p546 = pneg %p299
      %p547 = pneg %p323
      %p548 = pneg %p320
      %p549 = pneg %p344
      %p550 = pneg %p341
      %p551 = pneg %p365
      %p552 = pneg %p362
      %p553 = pneg %p386
      %p554 = pneg %p383
      %p555 = pneg %p407
      %p556 = pneg %p404
      %p557 = pneg %p433
      %p558 = pneg %p430
      %p559 = scmp.lt.s32.totalorder %s29, 1
      %s560 = scalar_select %p559, %s29, 1
      %s561 = smul.addr %s560, 8
      %s562 = scalar_lea.vmem %s18, %s561
      %p563 = scmp.lt.s32.totalorder %s29, 1
      %s564 = scalar_select %p563, %s29, 1
      %s565 = smul.addr %s564, 8
      %s566 = scalar_lea.vmem %s0, %s565
      %p567 = scmp.lt.s32.totalorder %s29, 1
      %s568 = scalar_select %p567, %s29, 1
      %s569 = smul.addr %s568, 8
      %s570 = scalar_lea.vmem %s18, %s569
      %v572 = vld [vmem:[%s566] sm:$0xff]
      %v573 = vld [vmem:[%s1] sm:$0xff]
      %v574 = vld [vmem:[%s2] sm:$0x1]
      %v575 = vld [vmem:[%s3] sm:$0x1]
      %vm576 = vcmask 261120
      %v577 = vsel %vm576, %v572, 0.0
      %578 = vadd.xlane.f32.xlu0 %v577
      %v579 = vpop.xlane.xlu0 %578
      %v580 = vrcp.pop 32.0
      %v581 = vmul.f32 32.0, %v580
      %v582 = vsub.f32 1.0, %v581
      %v583 = vmul.f32 %v580, %v582
      %v584 = vadd.f32 %v580, %v583
      %vm585 = vweird.f32 %v580
      %v586 = vsel %vm585, %v580, %v584
      %v587 = vmul.f32 %v579, %v586
      %v588 = vsub.f32 %v572, %v587
      %v589 = vmul.f32 %v588, %v588
      %v590 = vsel %vm576, %v589, 0.0
      %591 = vadd.xlane.f32.xlu0 %v590
      %v592 = vpop.xlane.xlu0 %591
      %v593 = vmul.f32 %v592, %v586
      %v594 = vadd.f32 %v593, 1e-05
      %v595 = vrsqrt.pop %v594
      %v596 = vmul.f32 %v595, %v594
      %v597 = vmul.f32 %v596, %v595
      %v598 = vmul.f32 0.5, %v597
      %v599 = vsub.f32 1.5, %v598
      %v600 = vmul.f32 %v595, %v599
      %vm601 = vweird.f32 %v594
      %vm602 = vweird.f32 %v595
      %vm603 = vmor %vm601, %vm602
      %v604 = vsel %vm603, %v595, %v600
      %v605 = vmul.f32 %v588, %v604
      %v607 = vperm.slane %v574, 0
      %v609 = vmul.f32 %v605, %v607
      %v611 = vperm.slane %v575, 0
      %v613 = vadd.f32 %v609, %v611
      %v614 = vpack.c.bf16 %v613, %v613
      %v615 = vld [vmem:[%s4] sm:$0xf]
      %v616 = vld [vmem:[%s4 + $0x4] sm:$0xf]
      %v617 = vld [vmem:[%s4 + $0x8] sm:$0xf]
      %v618 = vld [vmem:[%s4 + $0xc] sm:$0xf]
      %v619 = vld [vmem:[%s5] sm:$0x1]
      %v621 = vperm.slane %v619, 0
      %v627 = vunpack.c.l.b16 %v615
      %v628 = vunpack.c.l.b16 %v616
      %v629 = vunpack.c.l.b16 %v617
      %v630 = vunpack.c.l.b16 %v618
      %v631 = vpack.c.b16 %v628, %v627
      %v632 = vpack.c.b16 %v630, %v629
      %v636 = vsel %vm576, %v614, 0
      %638 = vmatpush.bf16.msra.mxu0 0
      %639 = vmatpush.bf16.msra.mxu0 0
      %640 = vmatpush.bf16.msra.mxu0 0
      %641 = vmatpush.bf16.msra.mxu0 0
      %642 = vmatpush.bf16.msra.mxu0 0
      %643 = vmatpush.bf16.msra.mxu0 0
      %644 = vmatpush.bf16.msra.mxu0 %v632
      %645 = vmatpush.bf16.msra.mxu0 %v631
      %646 = vmatmul.bf16.gmra.mxu0 %v636
      %v647 = vpop.f32.mrf.mxu0
      %v648 = vadd.f32 %v621, %v647
      %v649 = vpop.f32.mrf.mxu0
      %650 = vdwg.mxu0
      %v651 = vld [vmem:[%s6] sm:$0xf]
      %v652 = vld [vmem:[%s6 + $0x4] sm:$0xf]
      %v653 = vld [vmem:[%s6 + $0x8] sm:$0xf]
      %v654 = vld [vmem:[%s6 + $0xc] sm:$0xf]
      %v655 = vld [vmem:[%s7] sm:$0x1]
      %v657 = vperm.slane %v655, 0
      %v663 = vunpack.c.l.b16 %v651
      %v664 = vunpack.c.l.b16 %v652
      %v665 = vunpack.c.l.b16 %v653
      %v666 = vunpack.c.l.b16 %v654
      %v667 = vpack.c.b16 %v664, %v663
      %v668 = vpack.c.b16 %v666, %v665
      %671 = vmatpush.bf16.msra.mxu0 0
      %672 = vmatpush.bf16.msra.mxu0 0
      %673 = vmatpush.bf16.msra.mxu0 0
      %674 = vmatpush.bf16.msra.mxu0 0
      %675 = vmatpush.bf16.msra.mxu0 0
      %676 = vmatpush.bf16.msra.mxu0 0
      %677 = vmatpush.bf16.msra.mxu0 %v668
      %678 = vmatpush.bf16.msra.mxu0 %v667
      %679 = vmatmul.bf16.gmra.mxu0 %v636
      %v680 = vpop.f32.mrf.mxu0
      %v681 = vadd.f32 %v657, %v680
      %v682 = vpop.f32.mrf.mxu0
      %683 = vdwg.mxu0
      %v684 = vld [vmem:[%s8] sm:$0xf]
      %v685 = vld [vmem:[%s8 + $0x4] sm:$0xf]
      %v686 = vld [vmem:[%s8 + $0x8] sm:$0xf]
      %v687 = vld [vmem:[%s8 + $0xc] sm:$0xf]
      %v688 = vld [vmem:[%s9] sm:$0x1]
      %v690 = vperm.slane %v688, 0
      %v696 = vunpack.c.l.b16 %v684
      %v697 = vunpack.c.l.b16 %v685
      %v698 = vunpack.c.l.b16 %v686
      %v699 = vunpack.c.l.b16 %v687
      %v700 = vpack.c.b16 %v697, %v696
      %v701 = vpack.c.b16 %v699, %v698
      %704 = vmatpush.bf16.msra.mxu0 0
      %705 = vmatpush.bf16.msra.mxu0 0
      %706 = vmatpush.bf16.msra.mxu0 0
      %707 = vmatpush.bf16.msra.mxu0 0
      %708 = vmatpush.bf16.msra.mxu0 0
      %709 = vmatpush.bf16.msra.mxu0 0
      %710 = vmatpush.bf16.msra.mxu0 %v701
      %711 = vmatpush.bf16.msra.mxu0 %v700
      %712 = vmatmul.bf16.gmra.mxu0 %v636
      %v713 = vpop.f32.mrf.mxu0
      %v714 = vadd.f32 %v690, %v713
      %v715 = vpop.f32.mrf.mxu0
      %716 = vdwg.mxu0
      %v717 = vmul.f32 %v648, 0.35355338
      %719 = vrot.lane.b32.xlu0 %v717, 120
      %v720 = vpop.permute.xlu0 %719
      %722 = vrot.lane.b32.xlu0 %v717, 112
      %v723 = vpop.permute.xlu0 %722
      %725 = vrot.lane.b32.xlu0 %v717, 104
      %v726 = vpop.permute.xlu0 %725
      %v728 = vpack.c.bf16 %v717, %v717
      %v729 = vpack.c.bf16 %v720, %v720
      %v730 = vpack.c.bf16 %v723, %v723
      %v731 = vpack.c.bf16 %v726, %v726
      %733 = vrot.lane.b32.xlu0 %v681, 120
      %v734 = vpop.permute.xlu0 %733
      %736 = vrot.lane.b32.xlu0 %v681, 112
      %v737 = vpop.permute.xlu0 %736
      %739 = vrot.lane.b32.xlu0 %v681, 104
      %v740 = vpop.permute.xlu0 %739
      %v742 = vpack.c.bf16 %v681, %v681
      %v743 = vpack.c.bf16 %v734, %v734
      %v744 = vpack.c.bf16 %v737, %v737
      %v745 = vpack.c.bf16 %v740, %v740
      %747 = vrot.lane.b32.xlu0 %v714, 120
      %v748 = vpop.permute.xlu0 %747
      %750 = vrot.lane.b32.xlu0 %v714, 112
      %v751 = vpop.permute.xlu0 %750
      %753 = vrot.lane.b32.xlu0 %v714, 104
      %v754 = vpop.permute.xlu0 %753
      %v756 = vpack.c.bf16 %v714, %v714
      %v757 = vpack.c.bf16 %v748, %v748
      %v758 = vpack.c.bf16 %v751, %v751
      %v759 = vpack.c.bf16 %v754, %v754
      %vm760 = vcmask 64512
      %v762 = vsel %vm760, %v728, 0
      %v765 = vsel %vm760, %v742, 0
      %767 = vmatpush.bf16.xpose.msra.mxu0 0
      %768 = vmatpush.bf16.xpose.msra.mxu0 0
      %769 = vmatpush.bf16.xpose.msra.mxu0 0
      %770 = vmatpush.bf16.xpose.msra.mxu0 0
      %771 = vmatpush.bf16.xpose.msra.mxu0 0
      %772 = vmatpush.bf16.xpose.msra.mxu0 0
      %773 = vmatpush.bf16.xpose.msra.mxu0 0
      %774 = vmatpush.bf16.xpose.msra.mxu0 %v765
      %775 = vmatmul.bf16.gmra.mxu0 %v762
      %v776 = vpop.f32.mrf.mxu0
      %v777 = vadd.f32 %v573, %v776
      %v778 = vpop.f32.mrf.mxu0
      %779 = vdwg.mxu0
      %v781 = vsel %vm760, %v729, 0
      %v784 = vsel %vm760, %v743, 0
      %786 = vmatpush.bf16.xpose.msra.mxu0 0
      %787 = vmatpush.bf16.xpose.msra.mxu0 0
      %788 = vmatpush.bf16.xpose.msra.mxu0 0
      %789 = vmatpush.bf16.xpose.msra.mxu0 0
      %790 = vmatpush.bf16.xpose.msra.mxu0 0
      %791 = vmatpush.bf16.xpose.msra.mxu0 0
      %792 = vmatpush.bf16.xpose.msra.mxu0 0
      %793 = vmatpush.bf16.xpose.msra.mxu0 %v784
      %794 = vmatmul.bf16.gmra.mxu0 %v781
      %v795 = vpop.f32.mrf.mxu0
      %v796 = vadd.f32 %v573, %v795
      %v797 = vpop.f32.mrf.mxu0
      %798 = vdwg.mxu0
      %v800 = vsel %vm760, %v730, 0
      %v803 = vsel %vm760, %v744, 0
      %805 = vmatpush.bf16.xpose.msra.mxu0 0
      %806 = vmatpush.bf16.xpose.msra.mxu0 0
      %807 = vmatpush.bf16.xpose.msra.mxu0 0
      %808 = vmatpush.bf16.xpose.msra.mxu0 0
      %809 = vmatpush.bf16.xpose.msra.mxu0 0
      %810 = vmatpush.bf16.xpose.msra.mxu0 0
      %811 = vmatpush.bf16.xpose.msra.mxu0 0
      %812 = vmatpush.bf16.xpose.msra.mxu0 %v803
      %813 = vmatmul.bf16.gmra.mxu0 %v800
      %v814 = vpop.f32.mrf.mxu0
      %v815 = vadd.f32 %v573, %v814
      %v816 = vpop.f32.mrf.mxu0
      %817 = vdwg.mxu0
      %v819 = vsel %vm760, %v731, 0
      %v822 = vsel %vm760, %v745, 0
      %824 = vmatpush.bf16.xpose.msra.mxu0 0
      %825 = vmatpush.bf16.xpose.msra.mxu0 0
      %826 = vmatpush.bf16.xpose.msra.mxu0 0
      %827 = vmatpush.bf16.xpose.msra.mxu0 0
      %828 = vmatpush.bf16.xpose.msra.mxu0 0
      %829 = vmatpush.bf16.xpose.msra.mxu0 0
      %830 = vmatpush.bf16.xpose.msra.mxu0 0
      %831 = vmatpush.bf16.xpose.msra.mxu0 %v822
      %832 = vmatmul.bf16.gmra.mxu0 %v819
      %v833 = vpop.f32.mrf.mxu0
      %v834 = vadd.f32 %v573, %v833
      %v835 = vpop.f32.mrf.mxu0
      %836 = vdwg.mxu0
      %v837 = vsel %vm760, %v777, -inf
      %838 = vmax.xlane.f32.xlu0 %v837
      %v839 = vpop.xlane.xlu0 %838
      %v840 = vsel %vm760, %v796, -inf
      %841 = vmax.xlane.f32.xlu0 %v840
      %v842 = vpop.xlane.xlu0 %841
      %v843 = vsel %vm760, %v815, -inf
      %844 = vmax.xlane.f32.xlu0 %v843
      %v845 = vpop.xlane.xlu0 %844
      %v846 = vsel %vm760, %v834, -inf
      %847 = vmax.xlane.f32.xlu0 %v846
      %v848 = vpop.xlane.xlu0 %847
      %v849 = vsub.f32 %v777, %v839
      %v850 = vsub.f32 %v796, %v842
      %v851 = vsub.f32 %v815, %v845
      %v852 = vsub.f32 %v834, %v848
      %v853 = vmul.f32 %v849, 1.442695
      %v854 = vpow.pop %v853
      %v855 = vmul.f32 %v850, 1.442695
      %v856 = vpow.pop %v855
      %v857 = vmul.f32 %v851, 1.442695
      %v858 = vpow.pop %v857
      %v859 = vmul.f32 %v852, 1.442695
      %v860 = vpow.pop %v859
      %v861 = vsel %vm760, %v854, 0.0
      %862 = vadd.xlane.f32.xlu0 %v861
      %v863 = vpop.xlane.xlu0 %862
      %v864 = vsel %vm760, %v856, 0.0
      %865 = vadd.xlane.f32.xlu0 %v864
      %v866 = vpop.xlane.xlu0 %865
      %v867 = vsel %vm760, %v858, 0.0
      %868 = vadd.xlane.f32.xlu0 %v867
      %v869 = vpop.xlane.xlu0 %868
      %v870 = vsel %vm760, %v860, 0.0
      %871 = vadd.xlane.f32.xlu0 %v870
      %v872 = vpop.xlane.xlu0 %871
      %v873 = vrcp.pop %v863
      %v874 = vrcp.pop %v866
      %v875 = vrcp.pop %v869
      %v876 = vrcp.pop %v872
      %v877 = vmul.f32 %v854, %v873
      %v878 = vmul.f32 %v856, %v874
      %v879 = vmul.f32 %v858, %v875
      %v880 = vmul.f32 %v860, %v876
      %v881 = vpack.c.bf16 %v877, %v877
      %v882 = vpack.c.bf16 %v878, %v878
      %v883 = vpack.c.bf16 %v879, %v879
      %v884 = vpack.c.bf16 %v880, %v880
      %v886 = vsel %vm760, %v881, 0
      %vm888 = vcmask 1043456
      %v890 = vsel %vm888, %v756, 0
      %892 = vmatpush.bf16.msra.mxu0 0
      %893 = vmatpush.bf16.msra.mxu0 0
      %894 = vmatpush.bf16.msra.mxu0 0
      %895 = vmatpush.bf16.msra.mxu0 0
      %896 = vmatpush.bf16.msra.mxu0 0
      %897 = vmatpush.bf16.msra.mxu0 0
      %898 = vmatpush.bf16.msra.mxu0 0
      %899 = vmatpush.bf16.msra.mxu0 %v890
      %900 = vmatmul.bf16.gmra.mxu0 %v886
      %v901 = vpop.f32.mrf.mxu0
      %v902 = vadd.f32 0.0, %v901
      %v903 = vpop.f32.mrf.mxu0
      %904 = vdwg.mxu0
      %v906 = vsel %vm760, %v882, 0
      %v909 = vsel %vm888, %v757, 0
      %911 = vmatpush.bf16.msra.mxu0 0
      %912 = vmatpush.bf16.msra.mxu0 0
      %913 = vmatpush.bf16.msra.mxu0 0
      %914 = vmatpush.bf16.msra.mxu0 0
      %915 = vmatpush.bf16.msra.mxu0 0
      %916 = vmatpush.bf16.msra.mxu0 0
      %917 = vmatpush.bf16.msra.mxu0 0
      %918 = vmatpush.bf16.msra.mxu0 %v909
      %919 = vmatmul.bf16.gmra.mxu0 %v906
      %v920 = vpop.f32.mrf.mxu0
      %v921 = vadd.f32 0.0, %v920
      %v922 = vpop.f32.mrf.mxu0
      %923 = vdwg.mxu0
      %v925 = vsel %vm760, %v883, 0
      %v928 = vsel %vm888, %v758, 0
      %930 = vmatpush.bf16.msra.mxu0 0
      %931 = vmatpush.bf16.msra.mxu0 0
      %932 = vmatpush.bf16.msra.mxu0 0
      %933 = vmatpush.bf16.msra.mxu0 0
      %934 = vmatpush.bf16.msra.mxu0 0
      %935 = vmatpush.bf16.msra.mxu0 0
      %936 = vmatpush.bf16.msra.mxu0 0
      %937 = vmatpush.bf16.msra.mxu0 %v928
      %938 = vmatmul.bf16.gmra.mxu0 %v925
      %v939 = vpop.f32.mrf.mxu0
      %v940 = vadd.f32 0.0, %v939
      %v941 = vpop.f32.mrf.mxu0
      %942 = vdwg.mxu0
      %v944 = vsel %vm760, %v884, 0
      %v947 = vsel %vm888, %v759, 0
      %949 = vmatpush.bf16.msra.mxu0 0
      %950 = vmatpush.bf16.msra.mxu0 0
      %951 = vmatpush.bf16.msra.mxu0 0
      %952 = vmatpush.bf16.msra.mxu0 0
      %953 = vmatpush.bf16.msra.mxu0 0
      %954 = vmatpush.bf16.msra.mxu0 0
      %955 = vmatpush.bf16.msra.mxu0 0
      %956 = vmatpush.bf16.msra.mxu0 %v947
      %957 = vmatmul.bf16.gmra.mxu0 %v944
      %v958 = vpop.f32.mrf.mxu0
      %v959 = vadd.f32 0.0, %v958
      %v960 = vpop.f32.mrf.mxu0
      %961 = vdwg.mxu0
      %963 = vrot.lane.b32.xlu0 %v921, 8
      %v964 = vpop.permute.xlu0 %963
      %967 = vrot.lane.b32.xlu0 %v940, 16
      %v968 = vpop.permute.xlu0 %967
      %971 = vrot.lane.b32.xlu0 %v959, 24
      %v972 = vpop.permute.xlu0 %971
      %v974 = vsel %vm760, %v902, %v964
      %vm975 = vcmask 130048
      %v976 = vsel %vm975, %v974, %v968
      %vm977 = vcmask 195584
      %v978 = vsel %vm977, %v976, %v972
      %v979 = vpack.c.bf16 %v978, %v978
      %v980 = vld [vmem:[%s10] sm:$0xf]
      %v981 = vld [vmem:[%s10 + $0x4] sm:$0xf]
      %v982 = vld [vmem:[%s10 + $0x8] sm:$0xf]
      %v983 = vld [vmem:[%s10 + $0xc] sm:$0xf]
      %v988 = vunpack.c.l.b16 %v980
      %v989 = vunpack.c.l.b16 %v981
      %v990 = vunpack.c.l.b16 %v982
      %v991 = vunpack.c.l.b16 %v983
      %v992 = vpack.c.b16 %v989, %v988
      %v993 = vpack.c.b16 %v991, %v990
      %v997 = vsel %vm576, %v979, 0
      %999 = vmatpush.bf16.msra.mxu0 0
      %1000 = vmatpush.bf16.msra.mxu0 0
      %1001 = vmatpush.bf16.msra.mxu0 0
      %1002 = vmatpush.bf16.msra.mxu0 0
      %1003 = vmatpush.bf16.msra.mxu0 0
      %1004 = vmatpush.bf16.msra.mxu0 0
      %1005 = vmatpush.bf16.msra.mxu0 %v993
      %1006 = vmatpush.bf16.msra.mxu0 %v992
      %1007 = vmatmul.bf16.gmra.mxu0 %v997
      %v1008 = vpop.f32.mrf.mxu0
      %v1009 = vadd.f32 0.0, %v1008
      %v1010 = vpop.f32.mrf.mxu0
      %1011 = vdwg.mxu0
      %v1012 = vadd.f32 %v572, %v1009
      %v1013 = vld [vmem:[%s11] sm:$0x1]
      %v1015 = vperm.slane %v1013, 0
      %v1017 = vadd.f32 %v1012, %v1015
      %v1018 = vld [vmem:[%s12] sm:$0x1]
      %v1019 = vld [vmem:[%s13] sm:$0x1]
      %v1020 = vsel %vm576, %v1017, 0.0
      %1021 = vadd.xlane.f32.xlu0 %v1020
      %v1022 = vpop.xlane.xlu0 %1021
      %v1023 = vmul.f32 %v1022, %v586
      %v1024 = vsub.f32 %v1017, %v1023
      %v1025 = vmul.f32 %v1024, %v1024
      %v1026 = vsel %vm576, %v1025, 0.0
      %1027 = vadd.xlane.f32.xlu0 %v1026
      %v1028 = vpop.xlane.xlu0 %1027
      %v1029 = vmul.f32 %v1028, %v586
      %v1030 = vadd.f32 %v1029, 1e-05
      %v1031 = vrsqrt.pop %v1030
      %v1032 = vmul.f32 %v1031, %v1030
      %v1033 = vmul.f32 %v1032, %v1031
      %v1034 = vmul.f32 0.5, %v1033
      %v1035 = vsub.f32 1.5, %v1034
      %v1036 = vmul.f32 %v1031, %v1035
      %vm1037 = vweird.f32 %v1030
      %vm1038 = vweird.f32 %v1031
      %vm1039 = vmor %vm1037, %vm1038
      %v1040 = vsel %vm1039, %v1031, %v1036
      %v1041 = vmul.f32 %v1024, %v1040
      %v1043 = vperm.slane %v1018, 0
      %v1045 = vmul.f32 %v1041, %v1043
      %v1047 = vperm.slane %v1019, 0
      %v1049 = vadd.f32 %v1045, %v1047
      %v1050 = vpack.c.bf16 %v1049, %v1049
      %v1051 = vld [vmem:[%s14] sm:$0xf]
      %v1052 = vld [vmem:[%s14 + $0x4] sm:$0xf]
      %v1053 = vld [vmem:[%s14 + $0x8] sm:$0xf]
      %v1054 = vld [vmem:[%s14 + $0xc] sm:$0xf]
      %v1055 = vld [vmem:[%s15] sm:$0x1]
      %v1057 = vperm.slane %v1055, 0
      %v1063 = vunpack.c.l.b16 %v1051
      %v1064 = vunpack.c.l.b16 %v1052
      %v1065 = vunpack.c.l.b16 %v1053
      %v1066 = vunpack.c.l.b16 %v1054
      %v1067 = vpack.c.b16 %v1064, %v1063
      %v1068 = vpack.c.b16 %v1066, %v1065
      %v1072 = vsel %vm576, %v1050, 0
      %1074 = vmatpush.bf16.msra.mxu0 0
      %1075 = vmatpush.bf16.msra.mxu0 0
      %1076 = vmatpush.bf16.msra.mxu0 0
      %1077 = vmatpush.bf16.msra.mxu0 0
      %1078 = vmatpush.bf16.msra.mxu0 0
      %1079 = vmatpush.bf16.msra.mxu0 0
      %1080 = vmatpush.bf16.msra.mxu0 %v1068
      %1081 = vmatpush.bf16.msra.mxu0 %v1067
      %1082 = vmatmul.bf16.gmra.mxu0 %v1072
      %v1083 = vpop.f32.mrf.mxu0
      %v1084 = vadd.f32 %v1057, %v1083
      %v1085 = vpop.f32.mrf.mxu0
      %1086 = vdwg.mxu0
      %v1087 = vmax.f32 %v1084, 0.0
      %v1088 = vpack.c.bf16 %v1087, %v1087
      %v1089 = vld [vmem:[%s16] sm:$0xf]
      %v1090 = vld [vmem:[%s16 + $0x4] sm:$0xf]
      %v1091 = vld [vmem:[%s16 + $0x8] sm:$0xf]
      %v1092 = vld [vmem:[%s16 + $0xc] sm:$0xf]
      %v1093 = vld [vmem:[%s16 + $0x10] sm:$0xf]
      %v1094 = vld [vmem:[%s16 + $0x14] sm:$0xf]
      %v1095 = vld [vmem:[%s16 + $0x18] sm:$0xf]
      %v1096 = vld [vmem:[%s16 + $0x1c] sm:$0xf]
      %v1097 = vld [vmem:[%s17] sm:$0x1]
      %v1099 = vperm.slane %v1097, 0
      %v1109 = vunpack.c.l.b16 %v1089
      %v1110 = vunpack.c.l.b16 %v1090
      %v1111 = vunpack.c.l.b16 %v1091
      %v1112 = vunpack.c.l.b16 %v1092
      %v1113 = vunpack.c.l.b16 %v1093
      %v1114 = vunpack.c.l.b16 %v1094
      %v1115 = vunpack.c.l.b16 %v1095
      %v1116 = vunpack.c.l.b16 %v1096
      %v1117 = vpack.c.b16 %v1110, %v1109
      %v1118 = vpack.c.b16 %v1112, %v1111
      %v1119 = vpack.c.b16 %v1114, %v1113
      %v1120 = vpack.c.b16 %v1116, %v1115
      %vm1125 = vcmask 523264
      %v1127 = vsel %vm1125, %v1088, 0
      %1129 = vmatpush.bf16.msra.mxu0 0
      %1130 = vmatpush.bf16.msra.mxu0 0
      %1131 = vmatpush.bf16.msra.mxu0 0
      %1132 = vmatpush.bf16.msra.mxu0 0
      %1133 = vmatpush.bf16.msra.mxu0 %v1120
      %1134 = vmatpush.bf16.msra.mxu0 %v1119
      %1135 = vmatpush.bf16.msra.mxu0 %v1118
      %1136 = vmatpush.bf16.msra.mxu0 %v1117
      %1137 = vmatmul.bf16.gmra.mxu0 %v1127
      %v1138 = vpop.f32.mrf.mxu0
      %v1139 = vadd.f32 %v1099, %v1138
      %v1140 = vpop.f32.mrf.mxu0
      %1141 = vdwg.mxu0
      %v1142 = vadd.f32 %v1017, %v1139
      %1143 = vst.msk [vmem:[%s570] sm:$0xff] %vm576, %v1142
      %p1144 = scmp.lt.s32.totalorder %s29, 1
      %s1145 = scalar_select %p1144, %s29, 1
      %s1146 = smul.addr %s1145, 8
      %s1147 = scalar_lea.vmem %s18, %s1146
      // Predicated region
      $region93: #{transformer_forward.2} parent=91 // pred_check
        %p1148 = pneg %p430
      $region94: #{transformer_forward.2} parent=91 // pred_check_branch
        %1150 = sbr.rel (%p1148) target = $region96
      $region95: #{transformer_forward.2} parent=91 // pred_region
        _
      $region96: #{transformer_forward.2} parent=91 // pred_fallthru
        _
    $region92: #{transformer_forward.2} parent=5 // pred_fallthru
      _
    %p1151 = scmp.le.s32.totalorder 2, %s24
    // Predicated region
    $region97: #{transformer_forward.2} parent=5 // pred_check
      %p1152 = pneg %p1151
    $region98: #{transformer_forward.2} parent=5 // pred_check_branch
      %1154 = sbr.rel (%p1152) target = $region100
    $region99: #{transformer_forward.2} parent=5 // pred_region
      %s1155 = ssub.s32 %s24, 2
      // Predicated region
      $region101: #{transformer_forward.2} parent=99 // pred_check
        %p1156 = pneg %p436
      $region102: #{transformer_forward.2} parent=99 // pred_check_branch
        %1158 = sbr.rel (%p1156) target = $region104
      $region103: #{transformer_forward.2} parent=99 // pred_region
        %p1159 = scmp.lt.s32.totalorder %s30, 1
        %s1160 = scalar_select %p1159, %s30, 1
        %s1161 = smul.addr %s1160, 8
        %s1162 = scalar_lea.vmem %s18, %s1161
      $region104: #{transformer_forward.2} parent=99 // pred_fallthru
        _
    $region100: #{transformer_forward.2} parent=5 // pred_fallthru
      _
  $region6: #{transformer_forward.2} parent=0 // loop_footer
    %s28 = sadd.s32 1, %s24
  $region7: #{transformer_forward.2} parent=0 // loop_footer_branch
    %23 = sbr.rel target = $region3
  $region8: #{transformer_forward.2} parent=0 // loop_exit
    _

// kernel: transformer_forward.3
$region0: #{transformer_forward.3}
  #allocation0 [shape = 'u32[]', space=smem, size = 0x4, offset = 0x4, fixed_abs, tag = 'smem constant byte address 0x4 - core index']
  #allocation1 [shape = 'u32[72,128]{1,0:T(1,128)}', space=vmem, size = 0x9000, scoped, tag = 'internal scratch']
  %s0 = inlined_call_operand.vmem [shape: f32[16,32], index: 0, kind: input, shape index: {}]
  %s1 = inlined_call_operand.vmem [shape: f32[8,8], index: 1, kind: input, shape index: {}]
  %s2 = inlined_call_operand.vmem [shape: f32[1,32], index: 2, kind: input, shape index: {}]
  %s3 = inlined_call_operand.vmem [shape: f32[1,32], index: 3, kind: input, shape index: {}]
  %s4 = inlined_call_operand.vmem [shape: bf16[32,32], index: 4, kind: input, shape index: {}]
  %s5 = inlined_call_operand.vmem [shape: f32[1,32], index: 5, kind: input, shape index: {}]
  %s6 = inlined_call_operand.vmem [shape: bf16[32,32], index: 6, kind: input, shape index: {}]
  %s7 = inlined_call_operand.vmem [shape: f32[1,32], index: 7, kind: input, shape index: {}]
  %s8 = inlined_call_operand.vmem [shape: bf16[32,32], index: 8, kind: input, shape index: {}]
  %s9 = inlined_call_operand.vmem [shape: f32[1,32], index: 9, kind: input, shape index: {}]
  %s10 = inlined_call_operand.vmem [shape: bf16[32,32], index: 10, kind: input, shape index: {}]
  %s11 = inlined_call_operand.vmem [shape: f32[1,32], index: 11, kind: input, shape index: {}]
  %s12 = inlined_call_operand.vmem [shape: f32[1,32], index: 12, kind: input, shape index: {}]
  %s13 = inlined_call_operand.vmem [shape: f32[1,32], index: 13, kind: input, shape index: {}]
  %s14 = inlined_call_operand.vmem [shape: bf16[32,64], index: 14, kind: input, shape index: {}]
  %s15 = inlined_call_operand.vmem [shape: f32[1,64], index: 15, kind: input, shape index: {}]
  %s16 = inlined_call_operand.vmem [shape: bf16[64,32], index: 16, kind: input, shape index: {}]
  %s17 = inlined_call_operand.vmem [shape: f32[1,32], index: 17, kind: input, shape index: {}]
  %s18 = inlined_call_operand.vmem [shape: f32[1,32], index: 18, kind: input, shape index: {}]
  %s19 = inlined_call_operand.vmem [shape: f32[1,32], index: 19, kind: input, shape index: {}]
  %s20 = inlined_call_operand.vmem [shape: bf16[32,16], index: 20, kind: input, shape index: {}]
  %s21 = inlined_call_operand.vmem [shape: f32[1,16], index: 21, kind: input, shape index: {}]
  %s22 = inlined_call_operand.vmem [shape: bf16[16,128], index: 22, kind: input, shape index: {}]
  %s23 = inlined_call_operand.vmem [shape: f32[1,128], index: 23, kind: input, shape index: {}]
  %s24 = inlined_call_operand.vmem [shape: f32[16,128], index: 24, kind: output, shape index: {}]
  %s25 = sld [smem:[#allocation0]]
  $region129: #{transformer_forward.3} parent=0
    _
  %s27 = ssub.s32 1, %s25
  %s28 = scalar_select 0, %s27, %s25
  loop: start=0, step=1, limit=4
  $region2: #{transformer_forward.3} parent=0 // loop_pre_header
    _
  $region3: #{transformer_forward.3} parent=0 // loop_header
    %s30 = sphi 0, %s34
    %p31 = scmp.ge.s32.totalorder %s30, 4
    %s40 = sphi 0, %s42
    %s43 = sphi 0, %s40
    %s44 = sphi 0, %s43
    %s60 = sphi 0, %s44
    %s64 = sphi 0, %s64
    %s66 = sphi 0, %s64
    %s67 = sphi 0, %s66
    %s81 = sphi 0, %s67
    %s85 = sphi 0, %s85
    %s87 = sphi 0, %s85
    %s88 = sphi 0, %s87
    %s102 = sphi 0, %s88
    %s106 = sphi 0, %s106
    %s108 = sphi 0, %s106
    %s109 = sphi 0, %s108
    %s123 = sphi 0, %s109
    %s127 = sphi 0, %s127
    %s129 = sphi 0, %s127
    %s130 = sphi 0, %s129
    %s144 = sphi 0, %s130
    %s148 = sphi 0, %s148
    %s150 = sphi 0, %s148
    %s151 = sphi 0, %s150
    %s165 = sphi 0, %s151
    %s169 = sphi 0, %s169
    %s171 = sphi 0, %s169
    %s172 = sphi 0, %s171
    %s186 = sphi 0, %s172
    %s190 = sphi 0, %s190
    %s192 = sphi 0, %s190
    %s193 = sphi 0, %s192
    %s207 = sphi 0, %s193
    %s211 = sphi 0, %s211
    %s213 = sphi 0, %s211
    %s214 = sphi 0, %s213
    %s228 = sphi 0, %s214
    %s232 = sphi 0, %s232
    %s234 = sphi 0, %s232
    %s235 = sphi 0, %s234
    %s249 = sphi 0, %s235
    %s253 = sphi 0, %s253
    %s255 = sphi 0, %s253
    %s256 = sphi 0, %s255
    %s270 = sphi 0, %s256
    %s274 = sphi 0, %s274
    %s276 = sphi 0, %s274
    %s277 = sphi 0, %s276
    %s291 = sphi 0, %s277
    %s295 = sphi 0, %s295
    %s297 = sphi 0, %s295
    %s298 = sphi 0, %s297
    %s312 = sphi 0, %s298
    %s316 = sphi 0, %s316
    %s318 = sphi 0, %s316
    %s319 = sphi 0, %s318
    %s333 = sphi 0, %s319
    %s337 = sphi 0, %s337
    %s339 = sphi 0, %s337
    %s340 = sphi 0, %s339
    %s354 = sphi 0, %s340
    %s358 = sphi 0, %s358
    %s360 = sphi 0, %s358
    %s361 = sphi 0, %s360
    %s375 = sphi 0, %s361
    %s379 = sphi 0, %s379
    %s381 = sphi 0, %s379
    %s382 = sphi 0, %s381
    %s396 = sphi 0, %s382
    %s400 = sphi 0, %s400
    %s402 = sphi 0, %s400
    %s403 = sphi 0, %s402
    %s417 = sphi 0, %s403
    %s421 = sphi 0, %s421
    %s423 = sphi 0, %s421
    %s424 = sphi 0, %s423
    %s438 = sphi 0, %s424
    %s442 = sphi 0, %s442
    %s444 = sphi 0, %s442
    %s445 = sphi 0, %s444
    %s459 = sphi 0, %s445
    %s463 = sphi 0, %s463
    %s465 = sphi 0, %s463
    %s466 = sphi 0, %s465
    %s480 = sphi 0, %s466
    %s484 = sphi 0, %s484
    %s486 = sphi 0, %s484
    %s487 = sphi 0, %s486
    %s501 = sphi 0, %s487
    %s505 = sphi 0, %s505
    %s507 = sphi 0, %s505
    %s508 = sphi 0, %s507
    %s522 = sphi 0, %s508
    %s526 = sphi 0, %s526
    %s528 = sphi 0, %s526
    %s529 = sphi 0, %s528
    %s543 = sphi 0, %s529
    %s549 = sphi 0, %s551
    %s552 = sphi 0, %s549
    %s553 = sphi 0, %s552
    %s569 = sphi 0, %s553
  $region4: #{transformer_forward.3} parent=0 // loop_header_branch
    %33 = sbr.rel (%p31) target = $region8
  $region5: #{transformer_forward.3} parent=0 // loop_body
    %s35 = ssub.s32 %s30, 1
    %s36 = ssub.s32 %s30, 2
    %s37 = sadd.s32 %s30, 1
    %s38 = ssub.s32 %s30, %s37
    %p39 = scmp.eq.s32.totalorder %s38, 0
    %s41 = sadd.s32 %s40, 1
    %s42 = scalar_select %p39, %s40, %s41
    %p45 = pneg %p39
    %p46 = scmp.eq.s32.totalorder %s30, 1
    %p47 = por %p45, %p46
    %p48 = scmp.ne.s32.totalorder %s40, %s43
    %p49 = scmp.eq.s32.totalorder %s30, 0
    %p50 = por %p48, %p49
    %p51 = scmp.ne.s32.totalorder %s40, %s43
    %p52 = scmp.eq.s32.totalorder %s35, 1
    %p53 = por %p51, %p52
    %p54 = scmp.ne.s32.totalorder %s43, %s44
    %p55 = scmp.eq.s32.totalorder %s35, 0
    %p56 = por %p54, %p55
    %p57 = scmp.ne.s32.totalorder %s43, %s44
    %p58 = scmp.eq.s32.totalorder %s36, 1
    %p59 = por %p57, %p58
    %p61 = scmp.ne.s32.totalorder %s44, %s60
    %p62 = scmp.eq.s32.totalorder %s36, 0
    %p63 = por %p61, %p62
    %s65 = sadd.s32 %s64, 1
    %p68 = scmp.eq.s32.totalorder %s30, 1
    %p69 = scmp.ne.s32.totalorder %s64, %s66
    %p70 = scmp.eq.s32.totalorder %s30, 0
    %p71 = por %p69, %p70
    %p72 = scmp.ne.s32.totalorder %s64, %s66
    %p73 = scmp.eq.s32.totalorder %s35, 1
    %p74 = por %p72, %p73
    %p75 = scmp.ne.s32.totalorder %s66, %s67
    %p76 = scmp.eq.s32.totalorder %s35, 0
    %p77 = por %p75, %p76
    %p78 = scmp.ne.s32.totalorder %s66, %s67
    %p79 = scmp.eq.s32.totalorder %s36, 1
    %p80 = por %p78, %p79
    %p82 = scmp.ne.s32.totalorder %s67, %s81
    %p83 = scmp.eq.s32.totalorder %s36, 0
    %p84 = por %p82, %p83
    %s86 = sadd.s32 %s85, 1
    %p89 = scmp.eq.s32.totalorder %s30, 1
    %p90 = scmp.ne.s32.totalorder %s85, %s87
    %p91 = scmp.eq.s32.totalorder %s30, 0
    %p92 = por %p90, %p91
    %p93 = scmp.ne.s32.totalorder %s85, %s87
    %p94 = scmp.eq.s32.totalorder %s35, 1
    %p95 = por %p93, %p94
    %p96 = scmp.ne.s32.totalorder %s87, %s88
    %p97 = scmp.eq.s32.totalorder %s35, 0
    %p98 = por %p96, %p97
    %p99 = scmp.ne.s32.totalorder %s87, %s88
    %p100 = scmp.eq.s32.totalorder %s36, 1
    %p101 = por %p99, %p100
    %p103 = scmp.ne.s32.totalorder %s88, %s102
    %p104 = scmp.eq.s32.totalorder %s36, 0
    %p105 = por %p103, %p104
    %s107 = sadd.s32 %s106, 1
    %p110 = scmp.eq.s32.totalorder %s30, 1
    %p111 = scmp.ne.s32.totalorder %s106, %s108
    %p112 = scmp.eq.s32.totalorder %s30, 0
    %p113 = por %p111, %p112
    %p114 = scmp.ne.s32.totalorder %s106, %s108
    %p115 = scmp.eq.s32.totalorder %s35, 1
    %p116 = por %p114, %p115
    %p117 = scmp.ne.s32.totalorder %s108, %s109
    %p118 = scmp.eq.s32.totalorder %s35, 0
    %p119 = por %p117, %p118
    %p120 = scmp.ne.s32.totalorder %s108, %s109
    %p121 = scmp.eq.s32.totalorder %s36, 1
    %p122 = por %p120, %p121
    %p124 = scmp.ne.s32.totalorder %s109, %s123
    %p125 = scmp.eq.s32.totalorder %s36, 0
    %p126 = por %p124, %p125
    %s128 = sadd.s32 %s127, 1
    %p131 = scmp.eq.s32.totalorder %s30, 1
    %p132 = scmp.ne.s32.totalorder %s127, %s129
    %p133 = scmp.eq.s32.totalorder %s30, 0
    %p134 = por %p132, %p133
    %p135 = scmp.ne.s32.totalorder %s127, %s129
    %p136 = scmp.eq.s32.totalorder %s35, 1
    %p137 = por %p135, %p136
    %p138 = scmp.ne.s32.totalorder %s129, %s130
    %p139 = scmp.eq.s32.totalorder %s35, 0
    %p140 = por %p138, %p139
    %p141 = scmp.ne.s32.totalorder %s129, %s130
    %p142 = scmp.eq.s32.totalorder %s36, 1
    %p143 = por %p141, %p142
    %p145 = scmp.ne.s32.totalorder %s130, %s144
    %p146 = scmp.eq.s32.totalorder %s36, 0
    %p147 = por %p145, %p146
    %s149 = sadd.s32 %s148, 1
    %p152 = scmp.eq.s32.totalorder %s30, 1
    %p153 = scmp.ne.s32.totalorder %s148, %s150
    %p154 = scmp.eq.s32.totalorder %s30, 0
    %p155 = por %p153, %p154
    %p156 = scmp.ne.s32.totalorder %s148, %s150
    %p157 = scmp.eq.s32.totalorder %s35, 1
    %p158 = por %p156, %p157
    %p159 = scmp.ne.s32.totalorder %s150, %s151
    %p160 = scmp.eq.s32.totalorder %s35, 0
    %p161 = por %p159, %p160
    %p162 = scmp.ne.s32.totalorder %s150, %s151
    %p163 = scmp.eq.s32.totalorder %s36, 1
    %p164 = por %p162, %p163
    %p166 = scmp.ne.s32.totalorder %s151, %s165
    %p167 = scmp.eq.s32.totalorder %s36, 0
    %p168 = por %p166, %p167
    %s170 = sadd.s32 %s169, 1
    %p173 = scmp.eq.s32.totalorder %s30, 1
    %p174 = scmp.ne.s32.totalorder %s169, %s171
    %p175 = scmp.eq.s32.totalorder %s30, 0
    %p176 = por %p174, %p175
    %p177 = scmp.ne.s32.totalorder %s169, %s171
    %p178 = scmp.eq.s32.totalorder %s35, 1
    %p179 = por %p177, %p178
    %p180 = scmp.ne.s32.totalorder %s171, %s172
    %p181 = scmp.eq.s32.totalorder %s35, 0
    %p182 = por %p180, %p181
    %p183 = scmp.ne.s32.totalorder %s171, %s172
    %p184 = scmp.eq.s32.totalorder %s36, 1
    %p185 = por %p183, %p184
    %p187 = scmp.ne.s32.totalorder %s172, %s186
    %p188 = scmp.eq.s32.totalorder %s36, 0
    %p189 = por %p187, %p188
    %s191 = sadd.s32 %s190, 1
    %p194 = scmp.eq.s32.totalorder %s30, 1
    %p195 = scmp.ne.s32.totalorder %s190, %s192
    %p196 = scmp.eq.s32.totalorder %s30, 0
    %p197 = por %p195, %p196
    %p198 = scmp.ne.s32.totalorder %s190, %s192
    %p199 = scmp.eq.s32.totalorder %s35, 1
    %p200 = por %p198, %p199
    %p201 = scmp.ne.s32.totalorder %s192, %s193
    %p202 = scmp.eq.s32.totalorder %s35, 0
    %p203 = por %p201, %p202
    %p204 = scmp.ne.s32.totalorder %s192, %s193
    %p205 = scmp.eq.s32.totalorder %s36, 1
    %p206 = por %p204, %p205
    %p208 = scmp.ne.s32.totalorder %s193, %s207
    %p209 = scmp.eq.s32.totalorder %s36, 0
    %p210 = por %p208, %p209
    %s212 = sadd.s32 %s211, 1
    %p215 = scmp.eq.s32.totalorder %s30, 1
    %p216 = scmp.ne.s32.totalorder %s211, %s213
    %p217 = scmp.eq.s32.totalorder %s30, 0
    %p218 = por %p216, %p217
    %p219 = scmp.ne.s32.totalorder %s211, %s213
    %p220 = scmp.eq.s32.totalorder %s35, 1
    %p221 = por %p219, %p220
    %p222 = scmp.ne.s32.totalorder %s213, %s214
    %p223 = scmp.eq.s32.totalorder %s35, 0
    %p224 = por %p222, %p223
    %p225 = scmp.ne.s32.totalorder %s213, %s214
    %p226 = scmp.eq.s32.totalorder %s36, 1
    %p227 = por %p225, %p226
    %p229 = scmp.ne.s32.totalorder %s214, %s228
    %p230 = scmp.eq.s32.totalorder %s36, 0
    %p231 = por %p229, %p230
    %s233 = sadd.s32 %s232, 1
    %p236 = scmp.eq.s32.totalorder %s30, 1
    %p237 = scmp.ne.s32.totalorder %s232, %s234
    %p238 = scmp.eq.s32.totalorder %s30, 0
    %p239 = por %p237, %p238
    %p240 = scmp.ne.s32.totalorder %s232, %s234
    %p241 = scmp.eq.s32.totalorder %s35, 1
    %p242 = por %p240, %p241
    %p243 = scmp.ne.s32.totalorder %s234, %s235
    %p244 = scmp.eq.s32.totalorder %s35, 0
    %p245 = por %p243, %p244
    %p246 = scmp.ne.s32.totalorder %s234, %s235
    %p247 = scmp.eq.s32.totalorder %s36, 1
    %p248 = por %p246, %p247
    %p250 = scmp.ne.s32.totalorder %s235, %s249
    %p251 = scmp.eq.s32.totalorder %s36, 0
    %p252 = por %p250, %p251
    %s254 = sadd.s32 %s253, 1
    %p257 = scmp.eq.s32.totalorder %s30, 1
    %p258 = scmp.ne.s32.totalorder %s253, %s255
    %p259 = scmp.eq.s32.totalorder %s30, 0
    %p260 = por %p258, %p259
    %p261 = scmp.ne.s32.totalorder %s253, %s255
    %p262 = scmp.eq.s32.totalorder %s35, 1
    %p263 = por %p261, %p262
    %p264 = scmp.ne.s32.totalorder %s255, %s256
    %p265 = scmp.eq.s32.totalorder %s35, 0
    %p266 = por %p264, %p265
    %p267 = scmp.ne.s32.totalorder %s255, %s256
    %p268 = scmp.eq.s32.totalorder %s36, 1
    %p269 = por %p267, %p268
    %p271 = scmp.ne.s32.totalorder %s256, %s270
    %p272 = scmp.eq.s32.totalorder %s36, 0
    %p273 = por %p271, %p272
    %s275 = sadd.s32 %s274, 1
    %p278 = scmp.eq.s32.totalorder %s30, 1
    %p279 = scmp.ne.s32.totalorder %s274, %s276
    %p280 = scmp.eq.s32.totalorder %s30, 0
    %p281 = por %p279, %p280
    %p282 = scmp.ne.s32.totalorder %s274, %s276
    %p283 = scmp.eq.s32.totalorder %s35, 1
    %p284 = por %p282, %p283
    %p285 = scmp.ne.s32.totalorder %s276, %s277
    %p286 = scmp.eq.s32.totalorder %s35, 0
    %p287 = por %p285, %p286
    %p288 = scmp.ne.s32.totalorder %s276, %s277
    %p289 = scmp.eq.s32.totalorder %s36, 1
    %p290 = por %p288, %p289
    %p292 = scmp.ne.s32.totalorder %s277, %s291
    %p293 = scmp.eq.s32.totalorder %s36, 0
    %p294 = por %p292, %p293
    %s296 = sadd.s32 %s295, 1
    %p299 = scmp.eq.s32.totalorder %s30, 1
    %p300 = scmp.ne.s32.totalorder %s295, %s297
    %p301 = scmp.eq.s32.totalorder %s30, 0
    %p302 = por %p300, %p301
    %p303 = scmp.ne.s32.totalorder %s295, %s297
    %p304 = scmp.eq.s32.totalorder %s35, 1
    %p305 = por %p303, %p304
    %p306 = scmp.ne.s32.totalorder %s297, %s298
    %p307 = scmp.eq.s32.totalorder %s35, 0
    %p308 = por %p306, %p307
    %p309 = scmp.ne.s32.totalorder %s297, %s298
    %p310 = scmp.eq.s32.totalorder %s36, 1
    %p311 = por %p309, %p310
    %p313 = scmp.ne.s32.totalorder %s298, %s312
    %p314 = scmp.eq.s32.totalorder %s36, 0
    %p315 = por %p313, %p314
    %s317 = sadd.s32 %s316, 1
    %p320 = scmp.eq.s32.totalorder %s30, 1
    %p321 = scmp.ne.s32.totalorder %s316, %s318
    %p322 = scmp.eq.s32.totalorder %s30, 0
    %p323 = por %p321, %p322
    %p324 = scmp.ne.s32.totalorder %s316, %s318
    %p325 = scmp.eq.s32.totalorder %s35, 1
    %p326 = por %p324, %p325
    %p327 = scmp.ne.s32.totalorder %s318, %s319
    %p328 = scmp.eq.s32.totalorder %s35, 0
    %p329 = por %p327, %p328
    %p330 = scmp.ne.s32.totalorder %s318, %s319
    %p331 = scmp.eq.s32.totalorder %s36, 1
    %p332 = por %p330, %p331
    %p334 = scmp.ne.s32.totalorder %s319, %s333
    %p335 = scmp.eq.s32.totalorder %s36, 0
    %p336 = por %p334, %p335
    %s338 = sadd.s32 %s337, 1
    %p341 = scmp.eq.s32.totalorder %s30, 1
    %p342 = scmp.ne.s32.totalorder %s337, %s339
    %p343 = scmp.eq.s32.totalorder %s30, 0
    %p344 = por %p342, %p343
    %p345 = scmp.ne.s32.totalorder %s337, %s339
    %p346 = scmp.eq.s32.totalorder %s35, 1
    %p347 = por %p345, %p346
    %p348 = scmp.ne.s32.totalorder %s339, %s340
    %p349 = scmp.eq.s32.totalorder %s35, 0
    %p350 = por %p348, %p349
    %p351 = scmp.ne.s32.totalorder %s339, %s340
    %p352 = scmp.eq.s32.totalorder %s36, 1
    %p353 = por %p351, %p352
    %p355 = scmp.ne.s32.totalorder %s340, %s354
    %p356 = scmp.eq.s32.totalorder %s36, 0
    %p357 = por %p355, %p356
    %s359 = sadd.s32 %s358, 1
    %p362 = scmp.eq.s32.totalorder %s30, 1
    %p363 = scmp.ne.s32.totalorder %s358, %s360
    %p364 = scmp.eq.s32.totalorder %s30, 0
    %p365 = por %p363, %p364
    %p366 = scmp.ne.s32.totalorder %s358, %s360
    %p367 = scmp.eq.s32.totalorder %s35, 1
    %p368 = por %p366, %p367
    %p369 = scmp.ne.s32.totalorder %s360, %s361
    %p370 = scmp.eq.s32.totalorder %s35, 0
    %p371 = por %p369, %p370
    %p372 = scmp.ne.s32.totalorder %s360, %s361
    %p373 = scmp.eq.s32.totalorder %s36, 1
    %p374 = por %p372, %p373
    %p376 = scmp.ne.s32.totalorder %s361, %s375
    %p377 = scmp.eq.s32.totalorder %s36, 0
    %p378 = por %p376, %p377
    %s380 = sadd.s32 %s379, 1
    %p383 = scmp.eq.s32.totalorder %s30, 1
    %p384 = scmp.ne.s32.totalorder %s379, %s381
    %p385 = scmp.eq.s32.totalorder %s30, 0
    %p386 = por %p384, %p385
    %p387 = scmp.ne.s32.totalorder %s379, %s381
    %p388 = scmp.eq.s32.totalorder %s35, 1
    %p389 = por %p387, %p388
    %p390 = scmp.ne.s32.totalorder %s381, %s382
    %p391 = scmp.eq.s32.totalorder %s35, 0
    %p392 = por %p390, %p391
    %p393 = scmp.ne.s32.totalorder %s381, %s382
    %p394 = scmp.eq.s32.totalorder %s36, 1
    %p395 = por %p393, %p394
    %p397 = scmp.ne.s32.totalorder %s382, %s396
    %p398 = scmp.eq.s32.totalorder %s36, 0
    %p399 = por %p397, %p398
    %s401 = sadd.s32 %s400, 1
    %p404 = scmp.eq.s32.totalorder %s30, 1
    %p405 = scmp.ne.s32.totalorder %s400, %s402
    %p406 = scmp.eq.s32.totalorder %s30, 0
    %p407 = por %p405, %p406
    %p408 = scmp.ne.s32.totalorder %s400, %s402
    %p409 = scmp.eq.s32.totalorder %s35, 1
    %p410 = por %p408, %p409
    %p411 = scmp.ne.s32.totalorder %s402, %s403
    %p412 = scmp.eq.s32.totalorder %s35, 0
    %p413 = por %p411, %p412
    %p414 = scmp.ne.s32.totalorder %s402, %s403
    %p415 = scmp.eq.s32.totalorder %s36, 1
    %p416 = por %p414, %p415
    %p418 = scmp.ne.s32.totalorder %s403, %s417
    %p419 = scmp.eq.s32.totalorder %s36, 0
    %p420 = por %p418, %p419
    %s422 = sadd.s32 %s421, 1
    %p425 = scmp.eq.s32.totalorder %s30, 1
    %p426 = scmp.ne.s32.totalorder %s421, %s423
    %p427 = scmp.eq.s32.totalorder %s30, 0
    %p428 = por %p426, %p427
    %p429 = scmp.ne.s32.totalorder %s421, %s423
    %p430 = scmp.eq.s32.totalorder %s35, 1
    %p431 = por %p429, %p430
    %p432 = scmp.ne.s32.totalorder %s423, %s424
    %p433 = scmp.eq.s32.totalorder %s35, 0
    %p434 = por %p432, %p433
    %p435 = scmp.ne.s32.totalorder %s423, %s424
    %p436 = scmp.eq.s32.totalorder %s36, 1
    %p437 = por %p435, %p436
    %p439 = scmp.ne.s32.totalorder %s424, %s438
    %p440 = scmp.eq.s32.totalorder %s36, 0
    %p441 = por %p439, %p440
    %s443 = sadd.s32 %s442, 1
    %p446 = scmp.eq.s32.totalorder %s30, 1
    %p447 = scmp.ne.s32.totalorder %s442, %s444
    %p448 = scmp.eq.s32.totalorder %s30, 0
    %p449 = por %p447, %p448
    %p450 = scmp.ne.s32.totalorder %s442, %s444
    %p451 = scmp.eq.s32.totalorder %s35, 1
    %p452 = por %p450, %p451
    %p453 = scmp.ne.s32.totalorder %s444, %s445
    %p454 = scmp.eq.s32.totalorder %s35, 0
    %p455 = por %p453, %p454
    %p456 = scmp.ne.s32.totalorder %s444, %s445
    %p457 = scmp.eq.s32.totalorder %s36, 1
    %p458 = por %p456, %p457
    %p460 = scmp.ne.s32.totalorder %s445, %s459
    %p461 = scmp.eq.s32.totalorder %s36, 0
    %p462 = por %p460, %p461
    %s464 = sadd.s32 %s463, 1
    %p467 = scmp.eq.s32.totalorder %s30, 1
    %p468 = scmp.ne.s32.totalorder %s463, %s465
    %p469 = scmp.eq.s32.totalorder %s30, 0
    %p470 = por %p468, %p469
    %p471 = scmp.ne.s32.totalorder %s463, %s465
    %p472 = scmp.eq.s32.totalorder %s35, 1
    %p473 = por %p471, %p472
    %p474 = scmp.ne.s32.totalorder %s465, %s466
    %p475 = scmp.eq.s32.totalorder %s35, 0
    %p476 = por %p474, %p475
    %p477 = scmp.ne.s32.totalorder %s465, %s466
    %p478 = scmp.eq.s32.totalorder %s36, 1
    %p479 = por %p477, %p478
    %p481 = scmp.ne.s32.totalorder %s466, %s480
    %p482 = scmp.eq.s32.totalorder %s36, 0
    %p483 = por %p481, %p482
    %s485 = sadd.s32 %s484, 1
    %p488 = scmp.eq.s32.totalorder %s30, 1
    %p489 = scmp.ne.s32.totalorder %s484, %s486
    %p490 = scmp.eq.s32.totalorder %s30, 0
    %p491 = por %p489, %p490
    %p492 = scmp.ne.s32.totalorder %s484, %s486
    %p493 = scmp.eq.s32.totalorder %s35, 1
    %p494 = por %p492, %p493
    %p495 = scmp.ne.s32.totalorder %s486, %s487
    %p496 = scmp.eq.s32.totalorder %s35, 0
    %p497 = por %p495, %p496
    %p498 = scmp.ne.s32.totalorder %s486, %s487
    %p499 = scmp.eq.s32.totalorder %s36, 1
    %p500 = por %p498, %p499
    %p502 = scmp.ne.s32.totalorder %s487, %s501
    %p503 = scmp.eq.s32.totalorder %s36, 0
    %p504 = por %p502, %p503
    %s506 = sadd.s32 %s505, 1
    %p509 = scmp.eq.s32.totalorder %s30, 1
    %p510 = scmp.ne.s32.totalorder %s505, %s507
    %p511 = scmp.eq.s32.totalorder %s30, 0
    %p512 = por %p510, %p511
    %p513 = scmp.ne.s32.totalorder %s505, %s507
    %p514 = scmp.eq.s32.totalorder %s35, 1
    %p515 = por %p513, %p514
    %p516 = scmp.ne.s32.totalorder %s507, %s508
    %p517 = scmp.eq.s32.totalorder %s35, 0
    %p518 = por %p516, %p517
    %p519 = scmp.ne.s32.totalorder %s507, %s508
    %p520 = scmp.eq.s32.totalorder %s36, 1
    %p521 = por %p519, %p520
    %p523 = scmp.ne.s32.totalorder %s508, %s522
    %p524 = scmp.eq.s32.totalorder %s36, 0
    %p525 = por %p523, %p524
    %s527 = sadd.s32 %s526, 1
    %p530 = scmp.eq.s32.totalorder %s30, 1
    %p531 = scmp.ne.s32.totalorder %s526, %s528
    %p532 = scmp.eq.s32.totalorder %s30, 0
    %p533 = por %p531, %p532
    %p534 = scmp.ne.s32.totalorder %s526, %s528
    %p535 = scmp.eq.s32.totalorder %s35, 1
    %p536 = por %p534, %p535
    %p537 = scmp.ne.s32.totalorder %s528, %s529
    %p538 = scmp.eq.s32.totalorder %s35, 0
    %p539 = por %p537, %p538
    %p540 = scmp.ne.s32.totalorder %s528, %s529
    %p541 = scmp.eq.s32.totalorder %s36, 1
    %p542 = por %p540, %p541
    %p544 = scmp.ne.s32.totalorder %s529, %s543
    %p545 = scmp.eq.s32.totalorder %s36, 0
    %p546 = por %p544, %p545
    %s547 = ssub.s32 %s30, %s37
    %p548 = scmp.eq.s32.totalorder %s547, 0
    %s550 = sadd.s32 %s549, 1
    %s551 = scalar_select %p548, %s549, %s550
    %p554 = pneg %p548
    %p555 = scmp.eq.s32.totalorder %s30, 1
    %p556 = por %p554, %p555
    %p557 = scmp.ne.s32.totalorder %s549, %s552
    %p558 = scmp.eq.s32.totalorder %s30, 0
    %p559 = por %p557, %p558
    %p560 = scmp.ne.s32.totalorder %s549, %s552
    %p561 = scmp.eq.s32.totalorder %s35, 1
    %p562 = por %p560, %p561
    %p563 = scmp.ne.s32.totalorder %s552, %s553
    %p564 = scmp.eq.s32.totalorder %s35, 0
    %p565 = por %p563, %p564
    %p566 = scmp.ne.s32.totalorder %s552, %s553
    %p567 = scmp.eq.s32.totalorder %s36, 1
    %p568 = por %p566, %p567
    %p570 = scmp.ne.s32.totalorder %s553, %s569
    %p571 = scmp.eq.s32.totalorder %s36, 0
    %p572 = por %p570, %p571
    %p573 = scmp.le.s32.totalorder 1, %s30
    %p574 = scmp.lt.s32.totalorder %s30, 3
    %p575 = pnand %p573, %p574
    %p576 = pneg %p575
    // Predicated region
    $region9: #{transformer_forward.3} parent=5 // pred_check
      _
    $region10: #{transformer_forward.3} parent=5 // pred_check_branch
      %578 = sbr.rel (%p575) target = $region12
    $region11: #{transformer_forward.3} parent=5 // pred_region
      %s579 = ssub.s32 %s30, 1
      // Predicated region
      $region13: #{transformer_forward.3} parent=11 // pred_check
        %p580 = pneg %p77
      $region14: #{transformer_forward.3} parent=11 // pred_check_branch
        %582 = sbr.rel (%p580) target = $region16
      $region15: #{transformer_forward.3} parent=11 // pred_region
        _
      $region16: #{transformer_forward.3} parent=11 // pred_fallthru
        _
      // Predicated region
      $region17: #{transformer_forward.3} parent=11 // pred_check
        %p583 = pneg %p98
      $region18: #{transformer_forward.3} parent=11 // pred_check_branch
        %585 = sbr.rel (%p583) target = $region20
      $region19: #{transformer_forward.3} parent=11 // pred_region
        _
      $region20: #{transformer_forward.3} parent=11 // pred_fallthru
        _
      // Predicated region
      $region21: #{transformer_forward.3} parent=11 // pred_check
        %p586 = pneg %p119
      $region22: #{transformer_forward.3} parent=11 // pred_check_branch
        %588 = sbr.rel (%p586) target = $region24
      $region23: #{transformer_forward.3} parent=11 // pred_region
        _
      $region24: #{transformer_forward.3} parent=11 // pred_fallthru
        _
      // Predicated region
      $region25: #{transformer_forward.3} parent=11 // pred_check
        %p589 = pneg %p140
      $region26: #{transformer_forward.3} parent=11 // pred_check_branch
        %591 = sbr.rel (%p589) target = $region28
      $region27: #{transformer_forward.3} parent=11 // pred_region
        _
      $region28: #{transformer_forward.3} parent=11 // pred_fallthru
        _
      // Predicated region
      $region29: #{transformer_forward.3} parent=11 // pred_check
        %p592 = pneg %p161
      $region30: #{transformer_forward.3} parent=11 // pred_check_branch
        %594 = sbr.rel (%p592) target = $region32
      $region31: #{transformer_forward.3} parent=11 // pred_region
        _
      $region32: #{transformer_forward.3} parent=11 // pred_fallthru
        _
      // Predicated region
      $region33: #{transformer_forward.3} parent=11 // pred_check
        %p595 = pneg %p182
      $region34: #{transformer_forward.3} parent=11 // pred_check_branch
        %597 = sbr.rel (%p595) target = $region36
      $region35: #{transformer_forward.3} parent=11 // pred_region
        _
      $region36: #{transformer_forward.3} parent=11 // pred_fallthru
        _
      // Predicated region
      $region37: #{transformer_forward.3} parent=11 // pred_check
        %p598 = pneg %p203
      $region38: #{transformer_forward.3} parent=11 // pred_check_branch
        %600 = sbr.rel (%p598) target = $region40
      $region39: #{transformer_forward.3} parent=11 // pred_region
        _
      $region40: #{transformer_forward.3} parent=11 // pred_fallthru
        _
      // Predicated region
      $region41: #{transformer_forward.3} parent=11 // pred_check
        %p601 = pneg %p224
      $region42: #{transformer_forward.3} parent=11 // pred_check_branch
        %603 = sbr.rel (%p601) target = $region44
      $region43: #{transformer_forward.3} parent=11 // pred_region
        _
      $region44: #{transformer_forward.3} parent=11 // pred_fallthru
        _
      // Predicated region
      $region45: #{transformer_forward.3} parent=11 // pred_check
        %p604 = pneg %p245
      $region46: #{transformer_forward.3} parent=11 // pred_check_branch
        %606 = sbr.rel (%p604) target = $region48
      $region47: #{transformer_forward.3} parent=11 // pred_region
        _
      $region48: #{transformer_forward.3} parent=11 // pred_fallthru
        _
      // Predicated region
      $region49: #{transformer_forward.3} parent=11 // pred_check
        %p607 = pneg %p266
      $region50: #{transformer_forward.3} parent=11 // pred_check_branch
        %609 = sbr.rel (%p607) target = $region52
      $region51: #{transformer_forward.3} parent=11 // pred_region
        _
      $region52: #{transformer_forward.3} parent=11 // pred_fallthru
        _
      // Predicated region
      $region53: #{transformer_forward.3} parent=11 // pred_check
        %p610 = pneg %p287
      $region54: #{transformer_forward.3} parent=11 // pred_check_branch
        %612 = sbr.rel (%p610) target = $region56
      $region55: #{transformer_forward.3} parent=11 // pred_region
        _
      $region56: #{transformer_forward.3} parent=11 // pred_fallthru
        _
      // Predicated region
      $region57: #{transformer_forward.3} parent=11 // pred_check
        %p613 = pneg %p308
      $region58: #{transformer_forward.3} parent=11 // pred_check_branch
        %615 = sbr.rel (%p613) target = $region60
      $region59: #{transformer_forward.3} parent=11 // pred_region
        _
      $region60: #{transformer_forward.3} parent=11 // pred_fallthru
        _
      // Predicated region
      $region61: #{transformer_forward.3} parent=11 // pred_check
        %p616 = pneg %p329
      $region62: #{transformer_forward.3} parent=11 // pred_check_branch
        %618 = sbr.rel (%p616) target = $region64
      $region63: #{transformer_forward.3} parent=11 // pred_region
        _
      $region64: #{transformer_forward.3} parent=11 // pred_fallthru
        _
      // Predicated region
      $region65: #{transformer_forward.3} parent=11 // pred_check
        %p619 = pneg %p350
      $region66: #{transformer_forward.3} parent=11 // pred_check_branch
        %621 = sbr.rel (%p619) target = $region68
      $region67: #{transformer_forward.3} parent=11 // pred_region
        _
      $region68: #{transformer_forward.3} parent=11 // pred_fallthru
        _
      // Predicated region
      $region69: #{transformer_forward.3} parent=11 // pred_check
        %p622 = pneg %p371
      $region70: #{transformer_forward.3} parent=11 // pred_check_branch
        %624 = sbr.rel (%p622) target = $region72
      $region71: #{transformer_forward.3} parent=11 // pred_region
        _
      $region72: #{transformer_forward.3} parent=11 // pred_fallthru
        _
      // Predicated region
      $region73: #{transformer_forward.3} parent=11 // pred_check
        %p625 = pneg %p392
      $region74: #{transformer_forward.3} parent=11 // pred_check_branch
        %627 = sbr.rel (%p625) target = $region76
      $region75: #{transformer_forward.3} parent=11 // pred_region
        _
      $region76: #{transformer_forward.3} parent=11 // pred_fallthru
        _
      // Predicated region
      $region77: #{transformer_forward.3} parent=11 // pred_check
        %p628 = pneg %p413
      $region78: #{transformer_forward.3} parent=11 // pred_check_branch
        %630 = sbr.rel (%p628) target = $region80
      $region79: #{transformer_forward.3} parent=11 // pred_region
        _
      $region80: #{transformer_forward.3} parent=11 // pred_fallthru
        _
      // Predicated region
      $region81: #{transformer_forward.3} parent=11 // pred_check
        %p631 = pneg %p434
      $region82: #{transformer_forward.3} parent=11 // pred_check_branch
        %633 = sbr.rel (%p631) target = $region84
      $region83: #{transformer_forward.3} parent=11 // pred_region
        _
      $region84: #{transformer_forward.3} parent=11 // pred_fallthru
        _
      // Predicated region
      $region85: #{transformer_forward.3} parent=11 // pred_check
        %p634 = pneg %p455
      $region86: #{transformer_forward.3} parent=11 // pred_check_branch
        %636 = sbr.rel (%p634) target = $region88
      $region87: #{transformer_forward.3} parent=11 // pred_region
        _
      $region88: #{transformer_forward.3} parent=11 // pred_fallthru
        _
      // Predicated region
      $region89: #{transformer_forward.3} parent=11 // pred_check
        %p637 = pneg %p476
      $region90: #{transformer_forward.3} parent=11 // pred_check_branch
        %639 = sbr.rel (%p637) target = $region92
      $region91: #{transformer_forward.3} parent=11 // pred_region
        _
      $region92: #{transformer_forward.3} parent=11 // pred_fallthru
        _
      // Predicated region
      $region93: #{transformer_forward.3} parent=11 // pred_check
        %p640 = pneg %p497
      $region94: #{transformer_forward.3} parent=11 // pred_check_branch
        %642 = sbr.rel (%p640) target = $region96
      $region95: #{transformer_forward.3} parent=11 // pred_region
        _
      $region96: #{transformer_forward.3} parent=11 // pred_fallthru
        _
      // Predicated region
      $region97: #{transformer_forward.3} parent=11 // pred_check
        %p643 = pneg %p518
      $region98: #{transformer_forward.3} parent=11 // pred_check_branch
        %645 = sbr.rel (%p643) target = $region100
      $region99: #{transformer_forward.3} parent=11 // pred_region
        _
      $region100: #{transformer_forward.3} parent=11 // pred_fallthru
        _
      // Predicated region
      $region101: #{transformer_forward.3} parent=11 // pred_check
        %p646 = pneg %p539
      $region102: #{transformer_forward.3} parent=11 // pred_check_branch
        %648 = sbr.rel (%p646) target = $region104
      $region103: #{transformer_forward.3} parent=11 // pred_region
        _
      $region104: #{transformer_forward.3} parent=11 // pred_fallthru
        _
    $region12: #{transformer_forward.3} parent=5 // pred_fallthru
      _
    %p649 = scmp.lt.s32.totalorder %s30, 2
    // Predicated region
    $region105: #{transformer_forward.3} parent=5 // pred_check
      %p650 = pneg %p649
    $region106: #{transformer_forward.3} parent=5 // pred_check_branch
      %652 = sbr.rel (%p650) target = $region108
    $region107: #{transformer_forward.3} parent=5 // pred_region
      // Predicated region
      $region109: #{transformer_forward.3} parent=107 // pred_check
        %p653 = pneg %p50
      $region110: #{transformer_forward.3} parent=107 // pred_check_branch
        %655 = sbr.rel (%p653) target = $region112
      $region111: #{transformer_forward.3} parent=107 // pred_region
        %p656 = scmp.lt.s32.totalorder %s30, 1
        %s657 = scalar_select %p656, %s30, 1
        %s658 = smul.addr %s657, 8
        %s659 = scalar_lea.vmem %s0, %s658
      $region112: #{transformer_forward.3} parent=107 // pred_fallthru
        _
    $region108: #{transformer_forward.3} parent=5 // pred_fallthru
      _
    %p660 = scmp.le.s32.totalorder 1, %s30
    %p661 = scmp.lt.s32.totalorder %s30, 3
    %p662 = pnand %p660, %p661
    %p663 = pneg %p662
    // Predicated region
    $region113: #{transformer_forward.3} parent=5 // pred_check
      _
    $region114: #{transformer_forward.3} parent=5 // pred_check_branch
      %665 = sbr.rel (%p662) target = $region116
    $region115: #{transformer_forward.3} parent=5 // pred_region
      %s666 = ssub.s32 %s30, 1
      %p667 = scmp.lt.s32.totalorder %s35, 1
      %s668 = scalar_select %p667, %s35, 1
      %s669 = smul.addr %s668, 8
      %s670 = scalar_lea.vmem %s0, %s669
      %p671 = pneg %p56
      %p672 = pneg %p53
      %p673 = pneg %p77
      %p674 = pneg %p74
      %p675 = pneg %p98
      %p676 = pneg %p95
      %p677 = pneg %p119
      %p678 = pneg %p116
      %p679 = pneg %p140
      %p680 = pneg %p137
      %p681 = pneg %p161
      %p682 = pneg %p158
      %p683 = pneg %p182
      %p684 = pneg %p179
      %p685 = pneg %p203
      %p686 = pneg %p200
      %p687 = pneg %p224
      %p688 = pneg %p221
      %p689 = pneg %p245
      %p690 = pneg %p242
      %p691 = pneg %p266
      %p692 = pneg %p263
      %p693 = pneg %p287
      %p694 = pneg %p284
      %p695 = pneg %p308
      %p696 = pneg %p305
      %p697 = pneg %p329
      %p698 = pneg %p326
      %p699 = pneg %p350
      %p700 = pneg %p347
      %p701 = pneg %p371
      %p702 = pneg %p368
      %p703 = pneg %p392
      %p704 = pneg %p389
      %p705 = pneg %p413
      %p706 = pneg %p410
      %p707 = pneg %p434
      %p708 = pneg %p431
      %p709 = pneg %p455
      %p710 = pneg %p452
      %p711 = pneg %p476
      %p712 = pneg %p473
      %p713 = pneg %p497
      %p714 = pneg %p494
      %p715 = pneg %p518
      %p716 = pneg %p515
      %p717 = pneg %p539
      %p718 = pneg %p536
      %p719 = pneg %p565
      %p720 = pneg %p562
      %p721 = scmp.lt.s32.totalorder %s35, 1
      %s722 = scalar_select %p721, %s35, 1
      %s723 = smul.addr %s722, 8
      %s724 = scalar_lea.vmem %s24, %s723
      %p725 = scmp.lt.s32.totalorder %s35, 1
      %s726 = scalar_select %p725, %s35, 1
      %s727 = smul.addr %s726, 8
      %s728 = scalar_lea.vmem %s0, %s727
      %p729 = scmp.lt.s32.totalorder %s35, 1
      %s730 = scalar_select %p729, %s35, 1
      %s731 = smul.addr %s730, 8
      %s732 = scalar_lea.vmem %s24, %s731
      %v734 = vld [vmem:[%s728] sm:$0xff]
      %v735 = vld [vmem:[%s1] sm:$0xff]
      %v736 = vld [vmem:[%s2] sm:$0x1]
      %v737 = vld [vmem:[%s3] sm:$0x1]
      %vm738 = vcmask 261120
      %v739 = vsel %vm738, %v734, 0.0
      %740 = vadd.xlane.f32.xlu0 %v739
      %v741 = vpop.xlane.xlu0 %740
      %v742 = vrcp.pop 32.0
      %v743 = vmul.f32 32.0, %v742
      %v744 = vsub.f32 1.0, %v743
      %v745 = vmul.f32 %v742, %v744
      %v746 = vadd.f32 %v742, %v745
      %vm747 = vweird.f32 %v742
      %v748 = vsel %vm747, %v742, %v746
      %v749 = vmul.f32 %v741, %v748
      %v750 = vsub.f32 %v734, %v749
      %v751 = vmul.f32 %v750, %v750
      %v752 = vsel %vm738, %v751, 0.0
      %753 = vadd.xlane.f32.xlu0 %v752
      %v754 = vpop.xlane.xlu0 %753
      %v755 = vmul.f32 %v754, %v748
      %v756 = vadd.f32 %v755, 1e-05
      %v757 = vrsqrt.pop %v756
      %v758 = vmul.f32 %v757, %v756
      %v759 = vmul.f32 %v758, %v757
      %v760 = vmul.f32 0.5, %v759
      %v761 = vsub.f32 1.5, %v760
      %v762 = vmul.f32 %v757, %v761
      %vm763 = vweird.f32 %v756
      %vm764 = vweird.f32 %v757
      %vm765 = vmor %vm763, %vm764
      %v766 = vsel %vm765, %v757, %v762
      %v767 = vmul.f32 %v750, %v766
      %v769 = vperm.slane %v736, 0
      %v771 = vmul.f32 %v767, %v769
      %v773 = vperm.slane %v737, 0
      %v775 = vadd.f32 %v771, %v773
      %v776 = vpack.c.bf16 %v775, %v775
      %v777 = vld [vmem:[%s4] sm:$0xf]
      %v778 = vld [vmem:[%s4 + $0x4] sm:$0xf]
      %v779 = vld [vmem:[%s4 + $0x8] sm:$0xf]
      %v780 = vld [vmem:[%s4 + $0xc] sm:$0xf]
      %v781 = vld [vmem:[%s5] sm:$0x1]
      %v783 = vperm.slane %v781, 0
      %v789 = vunpack.c.l.b16 %v777
      %v790 = vunpack.c.l.b16 %v778
      %v791 = vunpack.c.l.b16 %v779
      %v792 = vunpack.c.l.b16 %v780
      %v793 = vpack.c.b16 %v790, %v789
      %v794 = vpack.c.b16 %v792, %v791
      %v798 = vsel %vm738, %v776, 0
      %800 = vmatpush.bf16.msra.mxu0 0
      %801 = vmatpush.bf16.msra.mxu0 0
      %802 = vmatpush.bf16.msra.mxu0 0
      %803 = vmatpush.bf16.msra.mxu0 0
      %804 = vmatpush.bf16.msra.mxu0 0
      %805 = vmatpush.bf16.msra.mxu0 0
      %806 = vmatpush.bf16.msra.mxu0 %v794
      %807 = vmatpush.bf16.msra.mxu0 %v793
      %808 = vmatmul.bf16.gmra.mxu0 %v798
      %v809 = vpop.f32.mrf.mxu0
      %v810 = vadd.f32 %v783, %v809
      %v811 = vpop.f32.mrf.mxu0
      %812 = vdwg.mxu0
      %v813 = vld [vmem:[%s6] sm:$0xf]
      %v814 = vld [vmem:[%s6 + $0x4] sm:$0xf]
      %v815 = vld [vmem:[%s6 + $0x8] sm:$0xf]
      %v816 = vld [vmem:[%s6 + $0xc] sm:$0xf]
      %v817 = vld [vmem:[%s7] sm:$0x1]
      %v819 = vperm.slane %v817, 0
      %v825 = vunpack.c.l.b16 %v813
      %v826 = vunpack.c.l.b16 %v814
      %v827 = vunpack.c.l.b16 %v815
      %v828 = vunpack.c.l.b16 %v816
      %v829 = vpack.c.b16 %v826, %v825
      %v830 = vpack.c.b16 %v828, %v827
      %833 = vmatpush.bf16.msra.mxu0 0
      %834 = vmatpush.bf16.msra.mxu0 0
      %835 = vmatpush.bf16.msra.mxu0 0
      %836 = vmatpush.bf16.msra.mxu0 0
      %837 = vmatpush.bf16.msra.mxu0 0
      %838 = vmatpush.bf16.msra.mxu0 0
      %839 = vmatpush.bf16.msra.mxu0 %v830
      %840 = vmatpush.bf16.msra.mxu0 %v829
      %841 = vmatmul.bf16.gmra.mxu0 %v798
      %v842 = vpop.f32.mrf.mxu0
      %v843 = vadd.f32 %v819, %v842
      %v844 = vpop.f32.mrf.mxu0
      %845 = vdwg.mxu0
      %v846 = vld [vmem:[%s8] sm:$0xf]
      %v847 = vld [vmem:[%s8 + $0x4] sm:$0xf]
      %v848 = vld [vmem:[%s8 + $0x8] sm:$0xf]
      %v849 = vld [vmem:[%s8 + $0xc] sm:$0xf]
      %v850 = vld [vmem:[%s9] sm:$0x1]
      %v852 = vperm.slane %v850, 0
      %v858 = vunpack.c.l.b16 %v846
      %v859 = vunpack.c.l.b16 %v847
      %v860 = vunpack.c.l.b16 %v848
      %v861 = vunpack.c.l.b16 %v849
      %v862 = vpack.c.b16 %v859, %v858
      %v863 = vpack.c.b16 %v861, %v860
      %866 = vmatpush.bf16.msra.mxu0 0
      %867 = vmatpush.bf16.msra.mxu0 0
      %868 = vmatpush.bf16.msra.mxu0 0
      %869 = vmatpush.bf16.msra.mxu0 0
      %870 = vmatpush.bf16.msra.mxu0 0
      %871 = vmatpush.bf16.msra.mxu0 0
      %872 = vmatpush.bf16.msra.mxu0 %v863
      %873 = vmatpush.bf16.msra.mxu0 %v862
      %874 = vmatmul.bf16.gmra.mxu0 %v798
      %v875 = vpop.f32.mrf.mxu0
      %v876 = vadd.f32 %v852, %v875
      %v877 = vpop.f32.mrf.mxu0
      %878 = vdwg.mxu0
      %v879 = vmul.f32 %v810, 0.35355338
      %881 = vrot.lane.b32.xlu0 %v879, 120
      %v882 = vpop.permute.xlu0 %881
      %884 = vrot.lane.b32.xlu0 %v879, 112
      %v885 = vpop.permute.xlu0 %884
      %887 = vrot.lane.b32.xlu0 %v879, 104
      %v888 = vpop.permute.xlu0 %887
      %v890 = vpack.c.bf16 %v879, %v879
      %v891 = vpack.c.bf16 %v882, %v882
      %v892 = vpack.c.bf16 %v885, %v885
      %v893 = vpack.c.bf16 %v888, %v888
      %895 = vrot.lane.b32.xlu0 %v843, 120
      %v896 = vpop.permute.xlu0 %895
      %898 = vrot.lane.b32.xlu0 %v843, 112
      %v899 = vpop.permute.xlu0 %898
      %901 = vrot.lane.b32.xlu0 %v843, 104
      %v902 = vpop.permute.xlu0 %901
      %v904 = vpack.c.bf16 %v843, %v843
      %v905 = vpack.c.bf16 %v896, %v896
      %v906 = vpack.c.bf16 %v899, %v899
      %v907 = vpack.c.bf16 %v902, %v902
      %909 = vrot.lane.b32.xlu0 %v876, 120
      %v910 = vpop.permute.xlu0 %909
      %912 = vrot.lane.b32.xlu0 %v876, 112
      %v913 = vpop.permute.xlu0 %912
      %915 = vrot.lane.b32.xlu0 %v876, 104
      %v916 = vpop.permute.xlu0 %915
      %v918 = vpack.c.bf16 %v876, %v876
      %v919 = vpack.c.bf16 %v910, %v910
      %v920 = vpack.c.bf16 %v913, %v913
      %v921 = vpack.c.bf16 %v916, %v916
      %vm922 = vcmask 64512
      %v924 = vsel %vm922, %v890, 0
      %v927 = vsel %vm922, %v904, 0
      %929 = vmatpush.bf16.xpose.msra.mxu0 0
      %930 = vmatpush.bf16.xpose.msra.mxu0 0
      %931 = vmatpush.bf16.xpose.msra.mxu0 0
      %932 = vmatpush.bf16.xpose.msra.mxu0 0
      %933 = vmatpush.bf16.xpose.msra.mxu0 0
      %934 = vmatpush.bf16.xpose.msra.mxu0 0
      %935 = vmatpush.bf16.xpose.msra.mxu0 0
      %936 = vmatpush.bf16.xpose.msra.mxu0 %v927
      %937 = vmatmul.bf16.gmra.mxu0 %v924
      %v938 = vpop.f32.mrf.mxu0
      %v939 = vadd.f32 %v735, %v938
      %v940 = vpop.f32.mrf.mxu0
      %941 = vdwg.mxu0
      %v943 = vsel %vm922, %v891, 0
      %v946 = vsel %vm922, %v905, 0
      %948 = vmatpush.bf16.xpose.msra.mxu0 0
      %949 = vmatpush.bf16.xpose.msra.mxu0 0
      %950 = vmatpush.bf16.xpose.msra.mxu0 0
      %951 = vmatpush.bf16.xpose.msra.mxu0 0
      %952 = vmatpush.bf16.xpose.msra.mxu0 0
      %953 = vmatpush.bf16.xpose.msra.mxu0 0
      %954 = vmatpush.bf16.xpose.msra.mxu0 0
      %955 = vmatpush.bf16.xpose.msra.mxu0 %v946
      %956 = vmatmul.bf16.gmra.mxu0 %v943
      %v957 = vpop.f32.mrf.mxu0
      %v958 = vadd.f32 %v735, %v957
      %v959 = vpop.f32.mrf.mxu0
      %960 = vdwg.mxu0
      %v962 = vsel %vm922, %v892, 0
      %v965 = vsel %vm922, %v906, 0
      %967 = vmatpush.bf16.xpose.msra.mxu0 0
      %968 = vmatpush.bf16.xpose.msra.mxu0 0
      %969 = vmatpush.bf16.xpose.msra.mxu0 0
      %970 = vmatpush.bf16.xpose.msra.mxu0 0
      %971 = vmatpush.bf16.xpose.msra.mxu0 0
      %972 = vmatpush.bf16.xpose.msra.mxu0 0
      %973 = vmatpush.bf16.xpose.msra.mxu0 0
      %974 = vmatpush.bf16.xpose.msra.mxu0 %v965
      %975 = vmatmul.bf16.gmra.mxu0 %v962
      %v976 = vpop.f32.mrf.mxu0
      %v977 = vadd.f32 %v735, %v976
      %v978 = vpop.f32.mrf.mxu0
      %979 = vdwg.mxu0
      %v981 = vsel %vm922, %v893, 0
      %v984 = vsel %vm922, %v907, 0
      %986 = vmatpush.bf16.xpose.msra.mxu0 0
      %987 = vmatpush.bf16.xpose.msra.mxu0 0
      %988 = vmatpush.bf16.xpose.msra.mxu0 0
      %989 = vmatpush.bf16.xpose.msra.mxu0 0
      %990 = vmatpush.bf16.xpose.msra.mxu0 0
      %991 = vmatpush.bf16.xpose.msra.mxu0 0
      %992 = vmatpush.bf16.xpose.msra.mxu0 0
      %993 = vmatpush.bf16.xpose.msra.mxu0 %v984
      %994 = vmatmul.bf16.gmra.mxu0 %v981
      %v995 = vpop.f32.mrf.mxu0
      %v996 = vadd.f32 %v735, %v995
      %v997 = vpop.f32.mrf.mxu0
      %998 = vdwg.mxu0
      %v999 = vsel %vm922, %v939, -inf
      %1000 = vmax.xlane.f32.xlu0 %v999
      %v1001 = vpop.xlane.xlu0 %1000
      %v1002 = vsel %vm922, %v958, -inf
      %1003 = vmax.xlane.f32.xlu0 %v1002
      %v1004 = vpop.xlane.xlu0 %1003
      %v1005 = vsel %vm922, %v977, -inf
      %1006 = vmax.xlane.f32.xlu0 %v1005
      %v1007 = vpop.xlane.xlu0 %1006
      %v1008 = vsel %vm922, %v996, -inf
      %1009 = vmax.xlane.f32.xlu0 %v1008
      %v1010 = vpop.xlane.xlu0 %1009
      %v1011 = vsub.f32 %v939, %v1001
      %v1012 = vsub.f32 %v958, %v1004
      %v1013 = vsub.f32 %v977, %v1007
      %v1014 = vsub.f32 %v996, %v1010
      %v1015 = vmul.f32 %v1011, 1.442695
      %v1016 = vpow.pop %v1015
      %v1017 = vmul.f32 %v1012, 1.442695
      %v1018 = vpow.pop %v1017
      %v1019 = vmul.f32 %v1013, 1.442695
      %v1020 = vpow.pop %v1019
      %v1021 = vmul.f32 %v1014, 1.442695
      %v1022 = vpow.pop %v1021
      %v1023 = vsel %vm922, %v1016, 0.0
      %1024 = vadd.xlane.f32.xlu0 %v1023
      %v1025 = vpop.xlane.xlu0 %1024
      %v1026 = vsel %vm922, %v1018, 0.0
      %1027 = vadd.xlane.f32.xlu0 %v1026
      %v1028 = vpop.xlane.xlu0 %1027
      %v1029 = vsel %vm922, %v1020, 0.0
      %1030 = vadd.xlane.f32.xlu0 %v1029
      %v1031 = vpop.xlane.xlu0 %1030
      %v1032 = vsel %vm922, %v1022, 0.0
      %1033 = vadd.xlane.f32.xlu0 %v1032
      %v1034 = vpop.xlane.xlu0 %1033
      %v1035 = vrcp.pop %v1025
      %v1036 = vrcp.pop %v1028
      %v1037 = vrcp.pop %v1031
      %v1038 = vrcp.pop %v1034
      %v1039 = vmul.f32 %v1016, %v1035
      %v1040 = vmul.f32 %v1018, %v1036
      %v1041 = vmul.f32 %v1020, %v1037
      %v1042 = vmul.f32 %v1022, %v1038
      %v1043 = vpack.c.bf16 %v1039, %v1039
      %v1044 = vpack.c.bf16 %v1040, %v1040
      %v1045 = vpack.c.bf16 %v1041, %v1041
      %v1046 = vpack.c.bf16 %v1042, %v1042
      %v1048 = vsel %vm922, %v1043, 0
      %vm1050 = vcmask 1043456
      %v1052 = vsel %vm1050, %v918, 0
      %1054 = vmatpush.bf16.msra.mxu0 0
      %1055 = vmatpush.bf16.msra.mxu0 0
      %1056 = vmatpush.bf16.msra.mxu0 0
      %1057 = vmatpush.bf16.msra.mxu0 0
      %1058 = vmatpush.bf16.msra.mxu0 0
      %1059 = vmatpush.bf16.msra.mxu0 0
      %1060 = vmatpush.bf16.msra.mxu0 0
      %1061 = vmatpush.bf16.msra.mxu0 %v1052
      %1062 = vmatmul.bf16.gmra.mxu0 %v1048
      %v1063 = vpop.f32.mrf.mxu0
      %v1064 = vadd.f32 0.0, %v1063
      %v1065 = vpop.f32.mrf.mxu0
      %1066 = vdwg.mxu0
      %v1068 = vsel %vm922, %v1044, 0
      %v1071 = vsel %vm1050, %v919, 0
      %1073 = vmatpush.bf16.msra.mxu0 0
      %1074 = vmatpush.bf16.msra.mxu0 0
      %1075 = vmatpush.bf16.msra.mxu0 0
      %1076 = vmatpush.bf16.msra.mxu0 0
      %1077 = vmatpush.bf16.msra.mxu0 0
      %1078 = vmatpush.bf16.msra.mxu0 0
      %1079 = vmatpush.bf16.msra.mxu0 0
      %1080 = vmatpush.bf16.msra.mxu0 %v1071
      %1081 = vmatmul.bf16.gmra.mxu0 %v1068
      %v1082 = vpop.f32.mrf.mxu0
      %v1083 = vadd.f32 0.0, %v1082
      %v1084 = vpop.f32.mrf.mxu0
      %1085 = vdwg.mxu0
      %v1087 = vsel %vm922, %v1045, 0
      %v1090 = vsel %vm1050, %v920, 0
      %1092 = vmatpush.bf16.msra.mxu0 0
      %1093 = vmatpush.bf16.msra.mxu0 0
      %1094 = vmatpush.bf16.msra.mxu0 0
      %1095 = vmatpush.bf16.msra.mxu0 0
      %1096 = vmatpush.bf16.msra.mxu0 0
      %1097 = vmatpush.bf16.msra.mxu0 0
      %1098 = vmatpush.bf16.msra.mxu0 0
      %1099 = vmatpush.bf16.msra.mxu0 %v1090
      %1100 = vmatmul.bf16.gmra.mxu0 %v1087
      %v1101 = vpop.f32.mrf.mxu0
      %v1102 = vadd.f32 0.0, %v1101
      %v1103 = vpop.f32.mrf.mxu0
      %1104 = vdwg.mxu0
      %v1106 = vsel %vm922, %v1046, 0
      %v1109 = vsel %vm1050, %v921, 0
      %1111 = vmatpush.bf16.msra.mxu0 0
      %1112 = vmatpush.bf16.msra.mxu0 0
      %1113 = vmatpush.bf16.msra.mxu0 0
      %1114 = vmatpush.bf16.msra.mxu0 0
      %1115 = vmatpush.bf16.msra.mxu0 0
      %1116 = vmatpush.bf16.msra.mxu0 0
      %1117 = vmatpush.bf16.msra.mxu0 0
      %1118 = vmatpush.bf16.msra.mxu0 %v1109
      %1119 = vmatmul.bf16.gmra.mxu0 %v1106
      %v1120 = vpop.f32.mrf.mxu0
      %v1121 = vadd.f32 0.0, %v1120
      %v1122 = vpop.f32.mrf.mxu0
      %1123 = vdwg.mxu0
      %1125 = vrot.lane.b32.xlu0 %v1083, 8
      %v1126 = vpop.permute.xlu0 %1125
      %1129 = vrot.lane.b32.xlu0 %v1102, 16
      %v1130 = vpop.permute.xlu0 %1129
      %1133 = vrot.lane.b32.xlu0 %v1121, 24
      %v1134 = vpop.permute.xlu0 %1133
      %v1136 = vsel %vm922, %v1064, %v1126
      %vm1137 = vcmask 130048
      %v1138 = vsel %vm1137, %v1136, %v1130
      %vm1139 = vcmask 195584
      %v1140 = vsel %vm1139, %v1138, %v1134
      %v1141 = vpack.c.bf16 %v1140, %v1140
      %v1142 = vld [vmem:[%s10] sm:$0xf]
      %v1143 = vld [vmem:[%s10 + $0x4] sm:$0xf]
      %v1144 = vld [vmem:[%s10 + $0x8] sm:$0xf]
      %v1145 = vld [vmem:[%s10 + $0xc] sm:$0xf]
      %v1150 = vunpack.c.l.b16 %v1142
      %v1151 = vunpack.c.l.b16 %v1143
      %v1152 = vunpack.c.l.b16 %v1144
      %v1153 = vunpack.c.l.b16 %v1145
      %v1154 = vpack.c.b16 %v1151, %v1150
      %v1155 = vpack.c.b16 %v1153, %v1152
      %v1159 = vsel %vm738, %v1141, 0
      %1161 = vmatpush.bf16.msra.mxu0 0
      %1162 = vmatpush.bf16.msra.mxu0 0
      %1163 = vmatpush.bf16.msra.mxu0 0
      %1164 = vmatpush.bf16.msra.mxu0 0
      %1165 = vmatpush.bf16.msra.mxu0 0
      %1166 = vmatpush.bf16.msra.mxu0 0
      %1167 = vmatpush.bf16.msra.mxu0 %v1155
      %1168 = vmatpush.bf16.msra.mxu0 %v1154
      %1169 = vmatmul.bf16.gmra.mxu0 %v1159
      %v1170 = vpop.f32.mrf.mxu0
      %v1171 = vadd.f32 0.0, %v1170
      %v1172 = vpop.f32.mrf.mxu0
      %1173 = vdwg.mxu0
      %v1174 = vadd.f32 %v734, %v1171
      %v1175 = vld [vmem:[%s11] sm:$0x1]
      %v1177 = vperm.slane %v1175, 0
      %v1179 = vadd.f32 %v1174, %v1177
      %v1180 = vld [vmem:[%s12] sm:$0x1]
      %v1181 = vld [vmem:[%s13] sm:$0x1]
      %v1182 = vsel %vm738, %v1179, 0.0
      %1183 = vadd.xlane.f32.xlu0 %v1182
      %v1184 = vpop.xlane.xlu0 %1183
      %v1185 = vmul.f32 %v1184, %v748
      %v1186 = vsub.f32 %v1179, %v1185
      %v1187 = vmul.f32 %v1186, %v1186
      %v1188 = vsel %vm738, %v1187, 0.0
      %1189 = vadd.xlane.f32.xlu0 %v1188
      %v1190 = vpop.xlane.xlu0 %1189
      %v1191 = vmul.f32 %v1190, %v748
      %v1192 = vadd.f32 %v1191, 1e-05
      %v1193 = vrsqrt.pop %v1192
      %v1194 = vmul.f32 %v1193, %v1192
      %v1195 = vmul.f32 %v1194, %v1193
      %v1196 = vmul.f32 0.5, %v1195
      %v1197 = vsub.f32 1.5, %v1196
      %v1198 = vmul.f32 %v1193, %v1197
      %vm1199 = vweird.f32 %v1192
      %vm1200 = vweird.f32 %v1193
      %vm1201 = vmor %vm1199, %vm1200
      %v1202 = vsel %vm1201, %v1193, %v1198
      %v1203 = vmul.f32 %v1186, %v1202
      %v1205 = vperm.slane %v1180, 0
      %v1207 = vmul.f32 %v1203, %v1205
      %v1209 = vperm.slane %v1181, 0
      %v1211 = vadd.f32 %v1207, %v1209
      %v1212 = vpack.c.bf16 %v1211, %v1211
      %v1213 = vld [vmem:[%s14] sm:$0xf]
      %v1214 = vld [vmem:[%s14 + $0x4] sm:$0xf]
      %v1215 = vld [vmem:[%s14 + $0x8] sm:$0xf]
      %v1216 = vld [vmem:[%s14 + $0xc] sm:$0xf]
      %v1217 = vld [vmem:[%s15] sm:$0x1]
      %v1219 = vperm.slane %v1217, 0
      %v1225 = vunpack.c.l.b16 %v1213
      %v1226 = vunpack.c.l.b16 %v1214
      %v1227 = vunpack.c.l.b16 %v1215
      %v1228 = vunpack.c.l.b16 %v1216
      %v1229 = vpack.c.b16 %v1226, %v1225
      %v1230 = vpack.c.b16 %v1228, %v1227
      %v1234 = vsel %vm738, %v1212, 0
      %1236 = vmatpush.bf16.msra.mxu0 0
      %1237 = vmatpush.bf16.msra.mxu0 0
      %1238 = vmatpush.bf16.msra.mxu0 0
      %1239 = vmatpush.bf16.msra.mxu0 0
      %1240 = vmatpush.bf16.msra.mxu0 0
      %1241 = vmatpush.bf16.msra.mxu0 0
      %1242 = vmatpush.bf16.msra.mxu0 %v1230
      %1243 = vmatpush.bf16.msra.mxu0 %v1229
      %1244 = vmatmul.bf16.gmra.mxu0 %v1234
      %v1245 = vpop.f32.mrf.mxu0
      %v1246 = vadd.f32 %v1219, %v1245
      %v1247 = vpop.f32.mrf.mxu0
      %1248 = vdwg.mxu0
      %v1249 = vmax.f32 %v1246, 0.0
      %v1250 = vpack.c.bf16 %v1249, %v1249
      %v1251 = vld [vmem:[%s16] sm:$0xf]
      %v1252 = vld [vmem:[%s16 + $0x4] sm:$0xf]
      %v1253 = vld [vmem:[%s16 + $0x8] sm:$0xf]
      %v1254 = vld [vmem:[%s16 + $0xc] sm:$0xf]
      %v1255 = vld [vmem:[%s16 + $0x10] sm:$0xf]
      %v1256 = vld [vmem:[%s16 + $0x14] sm:$0xf]
      %v1257 = vld [vmem:[%s16 + $0x18] sm:$0xf]
      %v1258 = vld [vmem:[%s16 + $0x1c] sm:$0xf]
      %v1259 = vld [vmem:[%s17] sm:$0x1]
      %v1261 = vperm.slane %v1259, 0
      %v1271 = vunpack.c.l.b16 %v1251
      %v1272 = vunpack.c.l.b16 %v1252
      %v1273 = vunpack.c.l.b16 %v1253
      %v1274 = vunpack.c.l.b16 %v1254
      %v1275 = vunpack.c.l.b16 %v1255
      %v1276 = vunpack.c.l.b16 %v1256
      %v1277 = vunpack.c.l.b16 %v1257
      %v1278 = vunpack.c.l.b16 %v1258
      %v1279 = vpack.c.b16 %v1272, %v1271
      %v1280 = vpack.c.b16 %v1274, %v1273
      %v1281 = vpack.c.b16 %v1276, %v1275
      %v1282 = vpack.c.b16 %v1278, %v1277
      %vm1287 = vcmask 523264
      %v1289 = vsel %vm1287, %v1250, 0
      %1291 = vmatpush.bf16.msra.mxu0 0
      %1292 = vmatpush.bf16.msra.mxu0 0
      %1293 = vmatpush.bf16.msra.mxu0 0
      %1294 = vmatpush.bf16.msra.mxu0 0
      %1295 = vmatpush.bf16.msra.mxu0 %v1282
      %1296 = vmatpush.bf16.msra.mxu0 %v1281
      %1297 = vmatpush.bf16.msra.mxu0 %v1280
      %1298 = vmatpush.bf16.msra.mxu0 %v1279
      %1299 = vmatmul.bf16.gmra.mxu0 %v1289
      %v1300 = vpop.f32.mrf.mxu0
      %v1301 = vadd.f32 %v1261, %v1300
      %v1302 = vpop.f32.mrf.mxu0
      %1303 = vdwg.mxu0
      %v1304 = vadd.f32 %v1179, %v1301
      %v1305 = vld [vmem:[%s18] sm:$0x1]
      %v1306 = vld [vmem:[%s19] sm:$0x1]
      %v1307 = vsel %vm738, %v1304, 0.0
      %1308 = vadd.xlane.f32.xlu0 %v1307
      %v1309 = vpop.xlane.xlu0 %1308
      %v1310 = vmul.f32 %v1309, %v748
      %v1311 = vsub.f32 %v1304, %v1310
      %v1312 = vmul.f32 %v1311, %v1311
      %v1313 = vsel %vm738, %v1312, 0.0
      %1314 = vadd.xlane.f32.xlu0 %v1313
      %v1315 = vpop.xlane.xlu0 %1314
      %v1316 = vmul.f32 %v1315, %v748
      %v1317 = vadd.f32 %v1316, 1e-05
      %v1318 = vrsqrt.pop %v1317
      %v1319 = vmul.f32 %v1318, %v1317
      %v1320 = vmul.f32 %v1319, %v1318
      %v1321 = vmul.f32 0.5, %v1320
      %v1322 = vsub.f32 1.5, %v1321
      %v1323 = vmul.f32 %v1318, %v1322
      %vm1324 = vweird.f32 %v1317
      %vm1325 = vweird.f32 %v1318
      %vm1326 = vmor %vm1324, %vm1325
      %v1327 = vsel %vm1326, %v1318, %v1323
      %v1328 = vmul.f32 %v1311, %v1327
      %v1330 = vperm.slane %v1305, 0
      %v1332 = vmul.f32 %v1328, %v1330
      %v1334 = vperm.slane %v1306, 0
      %v1336 = vadd.f32 %v1332, %v1334
      %v1337 = vpack.c.bf16 %v1336, %v1336
      %v1338 = vld [vmem:[%s20] sm:$0xf]
      %v1339 = vld [vmem:[%s20 + $0x4] sm:$0xf]
      %v1340 = vld [vmem:[%s20 + $0x8] sm:$0xf]
      %v1341 = vld [vmem:[%s20 + $0xc] sm:$0xf]
      %v1342 = vld [vmem:[%s21] sm:$0x1]
      %v1344 = vperm.slane %v1342, 0
      %v1350 = vunpack.c.l.b16 %v1338
      %v1351 = vunpack.c.l.b16 %v1339
      %v1352 = vunpack.c.l.b16 %v1340
      %v1353 = vunpack.c.l.b16 %v1341
      %v1354 = vpack.c.b16 %v1351, %v1350
      %v1355 = vpack.c.b16 %v1353, %v1352
      %v1359 = vsel %vm738, %v1337, 0
      %1361 = vmatpush.bf16.msra.mxu0 0
      %1362 = vmatpush.bf16.msra.mxu0 0
      %1363 = vmatpush.bf16.msra.mxu0 0
      %1364 = vmatpush.bf16.msra.mxu0 0
      %1365 = vmatpush.bf16.msra.mxu0 0
      %1366 = vmatpush.bf16.msra.mxu0 0
      %1367 = vmatpush.bf16.msra.mxu0 %v1355
      %1368 = vmatpush.bf16.msra.mxu0 %v1354
      %1369 = vmatmul.bf16.gmra.mxu0 %v1359
      %v1370 = vpop.f32.mrf.mxu0
      %v1371 = vadd.f32 %v1344, %v1370
      %v1372 = vpop.f32.mrf.mxu0
      %1373 = vdwg.mxu0
      %v1374 = vmax.f32 %v1371, 0.0
      %v1375 = vpack.c.bf16 %v1374, %v1374
      %v1376 = vld [vmem:[%s22] sm:$0xf]
      %v1377 = vld [vmem:[%s22 + $0x4] sm:$0xf]
      %v1378 = vld [vmem:[%s23] sm:$0x1]
      %v1380 = vperm.slane %v1378, 0
      %v1384 = vunpack.c.l.b16 %v1376
      %v1385 = vunpack.c.l.b16 %v1377
      %v1386 = vpack.c.b16 %v1385, %v1384
      %v1389 = vsel %vm1137, %v1375, 0
      %1391 = vmatpush.bf16.msra.mxu0 0
      %1392 = vmatpush.bf16.msra.mxu0 0
      %1393 = vmatpush.bf16.msra.mxu0 0
      %1394 = vmatpush.bf16.msra.mxu0 0
      %1395 = vmatpush.bf16.msra.mxu0 0
      %1396 = vmatpush.bf16.msra.mxu0 0
      %1397 = vmatpush.bf16.msra.mxu0 0
      %1398 = vmatpush.bf16.msra.mxu0 %v1386
      %1399 = vmatmul.bf16.gmra.mxu0 %v1389
      %v1400 = vpop.f32.mrf.mxu0
      %v1401 = vadd.f32 %v1380, %v1400
      %v1402 = vpop.f32.mrf.mxu0
      %1403 = vdwg.mxu0
      %v1404 = vmax.f32 %v1401, 0.0
      %1405 = vst [vmem:[%s732] sm:$0xff] %v1404
      %p1406 = scmp.lt.s32.totalorder %s35, 1
      %s1407 = scalar_select %p1406, %s35, 1
      %s1408 = smul.addr %s1407, 8
      %s1409 = scalar_lea.vmem %s24, %s1408
      // Predicated region
      $region117: #{transformer_forward.3} parent=115 // pred_check
        %p1410 = pneg %p562
      $region118: #{transformer_forward.3} parent=115 // pred_check_branch
        %1412 = sbr.rel (%p1410) target = $region120
      $region119: #{transformer_forward.3} parent=115 // pred_region
        _
      $region120: #{transformer_forward.3} parent=115 // pred_fallthru
        _
    $region116: #{transformer_forward.3} parent=5 // pred_fallthru
      _
    %p1413 = scmp.le.s32.totalorder 2, %s30
    // Predicated region
    $region121: #{transformer_forward.3} parent=5 // pred_check
      %p1414 = pneg %p1413
    $region122: #{transformer_forward.3} parent=5 // pred_check_branch
      %1416 = sbr.rel (%p1414) target = $region124
    $region123: #{transformer_forward.3} parent=5 // pred_region
      %s1417 = ssub.s32 %s30, 2
      // Predicated region
      $region125: #{transformer_forward.3} parent=123 // pred_check
        %p1418 = pneg %p568
      $region126: #{transformer_forward.3} parent=123 // pred_check_branch
        %1420 = sbr.rel (%p1418) target = $region128
      $region127: #{transformer_forward.3} parent=123 // pred_region
        %p1421 = scmp.lt.s32.totalorder %s36, 1
        %s1422 = scalar_select %p1421, %s36, 1
        %s1423 = smul.addr %s1422, 8
        %s1424 = scalar_lea.vmem %s24, %s1423
      $region128: #{transformer_forward.3} parent=123 // pred_fallthru
        _
    $region124: #{transformer_forward.3} parent=5 // pred_fallthru
      _
  $region6: #{transformer_forward.3} parent=0 // loop_footer
    %s34 = sadd.s32 1, %s30
  $region7: #{transformer_forward.3} parent=0 // loop_footer_branch
    %29 = sbr.rel target = $region3
  $region8: #{transformer_forward.3} parent=0 // loop_exit
    _

</llo_original>
